<compile_context>
chip_gen: v5e
topology: v5e:2x2
jax: 0.10.0
libtpu: 0.0.40
codegen_flags: <defaults>
</compile_context>

<pallas_src>
import functools

import numpy as np
import jax
import jax.numpy as jnp
from jax.experimental import pallas as pl
from jax.experimental.pallas import tpu as pltpu

# Aligned (sublane, lane) offset at which the interior image is stored inside
# the padded VMEM scratch.  Must be >= kernel_size // 2 in each axis.
_RS = 8      # sublane-aligned row offset
_CS = 128    # lane-aligned col offset


def _spatial_attention_kernel(x_ref, w_ref, o_ref, pad_ref, *, ksize: int):
    """Fused mean/max over C -> KxK conv (pad=K//2, no bias) -> sigmoid -> x*att.

    x_ref:   (1, C, H, W)              VMEM
    w_ref:   (2*ksize*ksize,)          SMEM  (conv1 weight: [avg taps, max taps])
    o_ref:   (1, C, H, W)              VMEM
    pad_ref: (2, H + 2*_RS, W + 2*_CS) VMEM scratch (zero-padded conv input)
    """
    _, C, H, W = x_ref.shape
    p = ksize // 2

    x = x_ref[0].astype(jnp.float32)              # (C, H, W)
    avg = jnp.mean(x, axis=0)                     # (H, W)
    mx = jnp.max(x, axis=0)                       # (H, W)

    # Zero-padded 2-channel conv input, built in VMEM (no host-side jnp.pad).
    # Interior is stored at a tile-aligned offset -> simple masked store.
    pad_ref[...] = jnp.zeros_like(pad_ref)
    pad_ref[0, pl.ds(_RS, H), pl.ds(_CS, W)] = avg
    pad_ref[1, pl.ds(_RS, H), pl.ds(_CS, W)] = mx

    # 2 * ksize * ksize scalar-broadcast multiply-adds on (H, W) slabs (VPU);
    # the conv weights are scalars read from SMEM.
    acc = jnp.zeros((H, W), jnp.float32)
    for c in range(2):
        plane = pad_ref[c]                        # (H + 2*_RS, W + 2*_CS)
        for i in range(ksize):
            r0 = _RS - p + i
            rows = plane[r0:r0 + H, _CS - p:_CS - p + W + 2 * p]   # (H, W+2p)
            for j in range(ksize):
                wv = w_ref[(c * ksize + i) * ksize + j]            # SMEM scalar
                acc = acc + wv * rows[:, j:j + W]

    att = 1.0 / (1.0 + jnp.exp(-acc))             # sigmoid (EUP exp + divide)
    o_ref[0] = (x * att[None, :, :]).astype(o_ref.dtype)


def spatial_attention(x_nchw, conv_w, *, kernel_size=7):
    """SpatialAttention.forward.  x: (N, C, H, W); conv_w: (1, 2, k, k), no bias."""
    N, C, H, W = x_nchw.shape
    assert conv_w.shape == (1, 2, kernel_size, kernel_size), conv_w.shape
    assert kernel_size // 2 <= _RS and kernel_size // 2 <= _CS
    w_flat = conv_w.astype(jnp.float32).reshape(-1)      # (2*k*k,) SMEM scalars
    kernel = functools.partial(_spatial_attention_kernel, ksize=kernel_size)
    return pl.pallas_call(
        kernel,
        out_shape=jax.ShapeDtypeStruct((N, C, H, W), x_nchw.dtype),
        grid=(N,),
        in_specs=[
            pl.BlockSpec((1, C, H, W), lambda n: (n, 0, 0, 0)),
            pl.BlockSpec(memory_space=pltpu.MemorySpace.SMEM),
        ],
        out_specs=pl.BlockSpec((1, C, H, W), lambda n: (n, 0, 0, 0)),
        scratch_shapes=[
            pltpu.VMEM((2, H + 2 * _RS, W + 2 * _CS), jnp.float32),
        ],
        compiler_params=pltpu.CompilerParams(
            dimension_semantics=("parallel",)),
    )(x_nchw, w_flat)


# ----------------------------------------------------------------------------
# Pure-JAX reference (matches the PyTorch forward) for a runtime check
# ----------------------------------------------------------------------------
def spatial_attention_ref(x, conv_w):
    avg = jnp.mean(x, axis=1, keepdims=True)
    mx = jnp.max(x, axis=1, keepdims=True)
    s = jnp.concatenate([avg, mx], axis=1)                       # (N, 2, H, W)
    k = conv_w.shape[-1]
    p = k // 2
    att = jax.lax.conv_general_dilated(
        s, conv_w, window_strides=(1, 1), padding=((p, p), (p, p)),
        dimension_numbers=("NCHW", "OIHW", "NCHW"))              # (N, 1, H, W)
    return x * jax.nn.sigmoid(att)


if __name__ == "__main__":
    key = jax.random.PRNGKey(0)
    kx, kw = jax.random.split(key)

    N, C, H, W = 2, 4, 16, 16
    kernel_size = 7
    x = jax.random.normal(kx, (N, C, H, W), jnp.float32)
    # PyTorch Conv2d default init: U(-1/sqrt(fan_in), 1/sqrt(fan_in)).
    bound = 1.0 / np.sqrt(2 * kernel_size * kernel_size)
    conv_w = jax.random.uniform(kw, (1, 2, kernel_size, kernel_size),
                                jnp.float32, -bound, bound)

    out = jax.block_until_ready(
        spatial_attention(x, conv_w, kernel_size=kernel_size))
    ref = jax.block_until_ready(spatial_attention_ref(x, conv_w))

    assert out.shape == (N, C, H, W), out.shape
    np.testing.assert_allclose(np.asarray(out), np.asarray(ref),
                               rtol=1e-5, atol=1e-5)
    print("KERNEL_OK")
</pallas_src>

<mosaic_0001>
module attributes {stable_mosaic.version = 11 : i64} {
  func.func @_spatial_attention_kernel(%arg0: i32, %arg1: memref<1x4x16x16xf32, #tpu.memory_space<vmem>>, %arg2: memref<98xf32, #tpu.memory_space<smem>>, %arg3: memref<1x4x16x16xf32, #tpu.memory_space<vmem>>, %arg4: memref<2x32x272xf32, #tpu.memory_space<vmem>>) attributes {dimension_semantics = [#tpu.dimension_semantics<parallel>], iteration_bounds = array<i64: 2>, scalar_prefetch = 0 : i64, scratch_operands = 1 : i64, tpu.core_type = #tpu.core_type<tc>, window_params = [{transform_indices = @transform_0, window_bounds = array<i64: 1, 4, 16, 16>}, {transform_indices = @transform_1, window_bounds = array<i64: 98>}, {transform_indices = @transform_2, window_bounds = array<i64: 1, 4, 16, 16>}]} {
    %c0 = arith.constant 0 : index
    %c0_0 = arith.constant 0 : index
    %c0_1 = arith.constant 0 : index
    %c0_2 = arith.constant 0 : index
    %0 = vector.load %arg1[%c0, %c0_0, %c0_1, %c0_2] : memref<1x4x16x16xf32, #tpu.memory_space<vmem>>, vector<1x4x16x16xf32>
    %1 = vector.shape_cast %0 : vector<1x4x16x16xf32> to vector<4x16x16xf32>
    %cst = arith.constant dense<0.000000e+00> : vector<16x16xf32>
    %2 = vector.multi_reduction <add>, %1, %cst [0] : vector<4x16x16xf32> to vector<16x16xf32>
    %cst_3 = arith.constant 4.000000e+00 : f32
    %3 = vector.broadcast %cst_3 : f32 to vector<16x16xf32>
    %4 = arith.divf %2, %3 : vector<16x16xf32>
    %cst_4 = arith.constant dense<0xFF800000> : vector<16x16xf32>
    %5 = vector.multi_reduction <maximumf>, %1, %cst_4 [0] : vector<4x16x16xf32> to vector<16x16xf32>
    %cst_5 = arith.constant 0.000000e+00 : f32
    %6 = vector.broadcast %cst_5 : f32 to vector<2x32x272xf32>
    %c0_6 = arith.constant 0 : index
    %c0_7 = arith.constant 0 : index
    %c0_8 = arith.constant 0 : index
    %7 = vector.load %arg4[%c0_6, %c0_7, %c0_8] : memref<2x32x272xf32, #tpu.memory_space<vmem>>, vector<2x32x272xf32>
    tpu.vector_store %arg4[%c0_6, %c0_7, %c0_8], %6 {strides = array<i32>} : memref<2x32x272xf32, #tpu.memory_space<vmem>>, vector<2x32x272xf32>,
    %c0_9 = arith.constant 0 : index
    %c8 = arith.constant 8 : index
    %c128 = arith.constant 128 : index
    %8 = vector.load %arg4[%c0_9, %c8, %c128] : memref<2x32x272xf32, #tpu.memory_space<vmem>>, vector<1x16x16xf32>
    %9 = vector.shape_cast %8 : vector<1x16x16xf32> to vector<16x16xf32>
    %10 = vector.shape_cast %4 : vector<16x16xf32> to vector<1x16x16xf32>
    tpu.vector_store %arg4[%c0_9, %c8, %c128], %10 {strides = array<i32>} : memref<2x32x272xf32, #tpu.memory_space<vmem>>, vector<1x16x16xf32>,
    %c1 = arith.constant 1 : index
    %c8_10 = arith.constant 8 : index
    %c128_11 = arith.constant 128 : index
    %11 = vector.load %arg4[%c1, %c8_10, %c128_11] : memref<2x32x272xf32, #tpu.memory_space<vmem>>, vector<1x16x16xf32>
    %12 = vector.shape_cast %11 : vector<1x16x16xf32> to vector<16x16xf32>
    %13 = vector.shape_cast %5 : vector<16x16xf32> to vector<1x16x16xf32>
    tpu.vector_store %arg4[%c1, %c8_10, %c128_11], %13 {strides = array<i32>} : memref<2x32x272xf32, #tpu.memory_space<vmem>>, vector<1x16x16xf32>,
    %cst_12 = arith.constant 0.000000e+00 : f32
    %14 = vector.broadcast %cst_12 : f32 to vector<16x16xf32>
    %c0_13 = arith.constant 0 : index
    %c0_14 = arith.constant 0 : index
    %c0_15 = arith.constant 0 : index
    %15 = vector.load %arg4[%c0_13, %c0_14, %c0_15] : memref<2x32x272xf32, #tpu.memory_space<vmem>>, vector<1x32x272xf32>
    %16 = vector.shape_cast %15 : vector<1x32x272xf32> to vector<32x272xf32>
    %17 = vector.extract_strided_slice %16 {offsets = [5, 125], sizes = [16, 22], strides = [1, 1]} : vector<32x272xf32> to vector<16x22xf32>
    %c0_16 = arith.constant 0 : index
    %18 = memref.load %arg2[%c0_16] : memref<98xf32, #tpu.memory_space<smem>>
    %19 = vector.extract_strided_slice %17 {offsets = [0, 0], sizes = [16, 16], strides = [1, 1]} : vector<16x22xf32> to vector<16x16xf32>
    %20 = vector.broadcast %18 : f32 to vector<16x16xf32>
    %21 = arith.mulf %20, %19 : vector<16x16xf32>
    %22 = arith.addf %14, %21 : vector<16x16xf32>
    %c1_17 = arith.constant 1 : index
    %23 = memref.load %arg2[%c1_17] : memref<98xf32, #tpu.memory_space<smem>>
    %24 = vector.extract_strided_slice %17 {offsets = [0, 1], sizes = [16, 16], strides = [1, 1]} : vector<16x22xf32> to vector<16x16xf32>
    %25 = vector.broadcast %23 : f32 to vector<16x16xf32>
    %26 = arith.mulf %25, %24 : vector<16x16xf32>
    %27 = arith.addf %22, %26 : vector<16x16xf32>
    %c2 = arith.constant 2 : index
    %28 = memref.load %arg2[%c2] : memref<98xf32, #tpu.memory_space<smem>>
    %29 = vector.extract_strided_slice %17 {offsets = [0, 2], sizes = [16, 16], strides = [1, 1]} : vector<16x22xf32> to vector<16x16xf32>
    %30 = vector.broadcast %28 : f32 to vector<16x16xf32>
    %31 = arith.mulf %30, %29 : vector<16x16xf32>
    %32 = arith.addf %27, %31 : vector<16x16xf32>
    %c3 = arith.constant 3 : index
    %33 = memref.load %arg2[%c3] : memref<98xf32, #tpu.memory_space<smem>>
    %34 = vector.extract_strided_slice %17 {offsets = [0, 3], sizes = [16, 16], strides = [1, 1]} : vector<16x22xf32> to vector<16x16xf32>
    %35 = vector.broadcast %33 : f32 to vector<16x16xf32>
    %36 = arith.mulf %35, %34 : vector<16x16xf32>
    %37 = arith.addf %32, %36 : vector<16x16xf32>
    %c4 = arith.constant 4 : index
    %38 = memref.load %arg2[%c4] : memref<98xf32, #tpu.memory_space<smem>>
    %39 = vector.extract_strided_slice %17 {offsets = [0, 4], sizes = [16, 16], strides = [1, 1]} : vector<16x22xf32> to vector<16x16xf32>
    %40 = vector.broadcast %38 : f32 to vector<16x16xf32>
    %41 = arith.mulf %40, %39 : vector<16x16xf32>
    %42 = arith.addf %37, %41 : vector<16x16xf32>
    %c5 = arith.constant 5 : index
    %43 = memref.load %arg2[%c5] : memref<98xf32, #tpu.memory_space<smem>>
    %44 = vector.extract_strided_slice %17 {offsets = [0, 5], sizes = [16, 16], strides = [1, 1]} : vector<16x22xf32> to vector<16x16xf32>
    %45 = vector.broadcast %43 : f32 to vector<16x16xf32>
    %46 = arith.mulf %45, %44 : vector<16x16xf32>
    %47 = arith.addf %42, %46 : vector<16x16xf32>
    %c6 = arith.constant 6 : index
    %48 = memref.load %arg2[%c6] : memref<98xf32, #tpu.memory_space<smem>>
    %49 = vector.extract_strided_slice %17 {offsets = [0, 6], sizes = [16, 16], strides = [1, 1]} : vector<16x22xf32> to vector<16x16xf32>
    %50 = vector.broadcast %48 : f32 to vector<16x16xf32>
    %51 = arith.mulf %50, %49 : vector<16x16xf32>
    %52 = arith.addf %47, %51 : vector<16x16xf32>
    %53 = vector.extract_strided_slice %16 {offsets = [6, 125], sizes = [16, 22], strides = [1, 1]} : vector<32x272xf32> to vector<16x22xf32>
    %c7 = arith.constant 7 : index
    %54 = memref.load %arg2[%c7] : memref<98xf32, #tpu.memory_space<smem>>
    %55 = vector.extract_strided_slice %53 {offsets = [0, 0], sizes = [16, 16], strides = [1, 1]} : vector<16x22xf32> to vector<16x16xf32>
    %56 = vector.broadcast %54 : f32 to vector<16x16xf32>
    %57 = arith.mulf %56, %55 : vector<16x16xf32>
    %58 = arith.addf %52, %57 : vector<16x16xf32>
    %c8_18 = arith.constant 8 : index
    %59 = memref.load %arg2[%c8_18] : memref<98xf32, #tpu.memory_space<smem>>
    %60 = vector.extract_strided_slice %53 {offsets = [0, 1], sizes = [16, 16], strides = [1, 1]} : vector<16x22xf32> to vector<16x16xf32>
    %61 = vector.broadcast %59 : f32 to vector<16x16xf32>
    %62 = arith.mulf %61, %60 : vector<16x16xf32>
    %63 = arith.addf %58, %62 : vector<16x16xf32>
    %c9 = arith.constant 9 : index
    %64 = memref.load %arg2[%c9] : memref<98xf32, #tpu.memory_space<smem>>
    %65 = vector.extract_strided_slice %53 {offsets = [0, 2], sizes = [16, 16], strides = [1, 1]} : vector<16x22xf32> to vector<16x16xf32>
    %66 = vector.broadcast %64 : f32 to vector<16x16xf32>
    %67 = arith.mulf %66, %65 : vector<16x16xf32>
    %68 = arith.addf %63, %67 : vector<16x16xf32>
    %c10 = arith.constant 10 : index
    %69 = memref.load %arg2[%c10] : memref<98xf32, #tpu.memory_space<smem>>
    %70 = vector.extract_strided_slice %53 {offsets = [0, 3], sizes = [16, 16], strides = [1, 1]} : vector<16x22xf32> to vector<16x16xf32>
    %71 = vector.broadcast %69 : f32 to vector<16x16xf32>
    %72 = arith.mulf %71, %70 : vector<16x16xf32>
    %73 = arith.addf %68, %72 : vector<16x16xf32>
    %c11 = arith.constant 11 : index
    %74 = memref.load %arg2[%c11] : memref<98xf32, #tpu.memory_space<smem>>
    %75 = vector.extract_strided_slice %53 {offsets = [0, 4], sizes = [16, 16], strides = [1, 1]} : vector<16x22xf32> to vector<16x16xf32>
    %76 = vector.broadcast %74 : f32 to vector<16x16xf32>
    %77 = arith.mulf %76, %75 : vector<16x16xf32>
    %78 = arith.addf %73, %77 : vector<16x16xf32>
    %c12 = arith.constant 12 : index
    %79 = memref.load %arg2[%c12] : memref<98xf32, #tpu.memory_space<smem>>
    %80 = vector.extract_strided_slice %53 {offsets = [0, 5], sizes = [16, 16], strides = [1, 1]} : vector<16x22xf32> to vector<16x16xf32>
    %81 = vector.broadcast %79 : f32 to vector<16x16xf32>
    %82 = arith.mulf %81, %80 : vector<16x16xf32>
    %83 = arith.addf %78, %82 : vector<16x16xf32>
    %c13 = arith.constant 13 : index
    %84 = memref.load %arg2[%c13] : memref<98xf32, #tpu.memory_space<smem>>
    %85 = vector.extract_strided_slice %53 {offsets = [0, 6], sizes = [16, 16], strides = [1, 1]} : vector<16x22xf32> to vector<16x16xf32>
    %86 = vector.broadcast %84 : f32 to vector<16x16xf32>
    %87 = arith.mulf %86, %85 : vector<16x16xf32>
    %88 = arith.addf %83, %87 : vector<16x16xf32>
    %89 = vector.extract_strided_slice %16 {offsets = [7, 125], sizes = [16, 22], strides = [1, 1]} : vector<32x272xf32> to vector<16x22xf32>
    %c14 = arith.constant 14 : index
    %90 = memref.load %arg2[%c14] : memref<98xf32, #tpu.memory_space<smem>>
    %91 = vector.extract_strided_slice %89 {offsets = [0, 0], sizes = [16, 16], strides = [1, 1]} : vector<16x22xf32> to vector<16x16xf32>
    %92 = vector.broadcast %90 : f32 to vector<16x16xf32>
    %93 = arith.mulf %92, %91 : vector<16x16xf32>
    %94 = arith.addf %88, %93 : vector<16x16xf32>
    %c15 = arith.constant 15 : index
    %95 = memref.load %arg2[%c15] : memref<98xf32, #tpu.memory_space<smem>>
    %96 = vector.extract_strided_slice %89 {offsets = [0, 1], sizes = [16, 16], strides = [1, 1]} : vector<16x22xf32> to vector<16x16xf32>
    %97 = vector.broadcast %95 : f32 to vector<16x16xf32>
    %98 = arith.mulf %97, %96 : vector<16x16xf32>
    %99 = arith.addf %94, %98 : vector<16x16xf32>
    %c16 = arith.constant 16 : index
    %100 = memref.load %arg2[%c16] : memref<98xf32, #tpu.memory_space<smem>>
    %101 = vector.extract_strided_slice %89 {offsets = [0, 2], sizes = [16, 16], strides = [1, 1]} : vector<16x22xf32> to vector<16x16xf32>
    %102 = vector.broadcast %100 : f32 to vector<16x16xf32>
    %103 = arith.mulf %102, %101 : vector<16x16xf32>
    %104 = arith.addf %99, %103 : vector<16x16xf32>
    %c17 = arith.constant 17 : index
    %105 = memref.load %arg2[%c17] : memref<98xf32, #tpu.memory_space<smem>>
    %106 = vector.extract_strided_slice %89 {offsets = [0, 3], sizes = [16, 16], strides = [1, 1]} : vector<16x22xf32> to vector<16x16xf32>
    %107 = vector.broadcast %105 : f32 to vector<16x16xf32>
    %108 = arith.mulf %107, %106 : vector<16x16xf32>
    %109 = arith.addf %104, %108 : vector<16x16xf32>
    %c18 = arith.constant 18 : index
    %110 = memref.load %arg2[%c18] : memref<98xf32, #tpu.memory_space<smem>>
    %111 = vector.extract_strided_slice %89 {offsets = [0, 4], sizes = [16, 16], strides = [1, 1]} : vector<16x22xf32> to vector<16x16xf32>
    %112 = vector.broadcast %110 : f32 to vector<16x16xf32>
    %113 = arith.mulf %112, %111 : vector<16x16xf32>
    %114 = arith.addf %109, %113 : vector<16x16xf32>
    %c19 = arith.constant 19 : index
    %115 = memref.load %arg2[%c19] : memref<98xf32, #tpu.memory_space<smem>>
    %116 = vector.extract_strided_slice %89 {offsets = [0, 5], sizes = [16, 16], strides = [1, 1]} : vector<16x22xf32> to vector<16x16xf32>
    %117 = vector.broadcast %115 : f32 to vector<16x16xf32>
    %118 = arith.mulf %117, %116 : vector<16x16xf32>
    %119 = arith.addf %114, %118 : vector<16x16xf32>
    %c20 = arith.constant 20 : index
    %120 = memref.load %arg2[%c20] : memref<98xf32, #tpu.memory_space<smem>>
    %121 = vector.extract_strided_slice %89 {offsets = [0, 6], sizes = [16, 16], strides = [1, 1]} : vector<16x22xf32> to vector<16x16xf32>
    %122 = vector.broadcast %120 : f32 to vector<16x16xf32>
    %123 = arith.mulf %122, %121 : vector<16x16xf32>
    %124 = arith.addf %119, %123 : vector<16x16xf32>
    %125 = vector.extract_strided_slice %16 {offsets = [8, 125], sizes = [16, 22], strides = [1, 1]} : vector<32x272xf32> to vector<16x22xf32>
    %c21 = arith.constant 21 : index
    %126 = memref.load %arg2[%c21] : memref<98xf32, #tpu.memory_space<smem>>
    %127 = vector.extract_strided_slice %125 {offsets = [0, 0], sizes = [16, 16], strides = [1, 1]} : vector<16x22xf32> to vector<16x16xf32>
    %128 = vector.broadcast %126 : f32 to vector<16x16xf32>
    %129 = arith.mulf %128, %127 : vector<16x16xf32>
    %130 = arith.addf %124, %129 : vector<16x16xf32>
    %c22 = arith.constant 22 : index
    %131 = memref.load %arg2[%c22] : memref<98xf32, #tpu.memory_space<smem>>
    %132 = vector.extract_strided_slice %125 {offsets = [0, 1], sizes = [16, 16], strides = [1, 1]} : vector<16x22xf32> to vector<16x16xf32>
    %133 = vector.broadcast %131 : f32 to vector<16x16xf32>
    %134 = arith.mulf %133, %132 : vector<16x16xf32>
    %135 = arith.addf %130, %134 : vector<16x16xf32>
    %c23 = arith.constant 23 : index
    %136 = memref.load %arg2[%c23] : memref<98xf32, #tpu.memory_space<smem>>
    %137 = vector.extract_strided_slice %125 {offsets = [0, 2], sizes = [16, 16], strides = [1, 1]} : vector<16x22xf32> to vector<16x16xf32>
    %138 = vector.broadcast %136 : f32 to vector<16x16xf32>
    %139 = arith.mulf %138, %137 : vector<16x16xf32>
    %140 = arith.addf %135, %139 : vector<16x16xf32>
    %c24 = arith.constant 24 : index
    %141 = memref.load %arg2[%c24] : memref<98xf32, #tpu.memory_space<smem>>
    %142 = vector.extract_strided_slice %125 {offsets = [0, 3], sizes = [16, 16], strides = [1, 1]} : vector<16x22xf32> to vector<16x16xf32>
    %143 = vector.broadcast %141 : f32 to vector<16x16xf32>
    %144 = arith.mulf %143, %142 : vector<16x16xf32>
    %145 = arith.addf %140, %144 : vector<16x16xf32>
    %c25 = arith.constant 25 : index
    %146 = memref.load %arg2[%c25] : memref<98xf32, #tpu.memory_space<smem>>
    %147 = vector.extract_strided_slice %125 {offsets = [0, 4], sizes = [16, 16], strides = [1, 1]} : vector<16x22xf32> to vector<16x16xf32>
    %148 = vector.broadcast %146 : f32 to vector<16x16xf32>
    %149 = arith.mulf %148, %147 : vector<16x16xf32>
    %150 = arith.addf %145, %149 : vector<16x16xf32>
    %c26 = arith.constant 26 : index
    %151 = memref.load %arg2[%c26] : memref<98xf32, #tpu.memory_space<smem>>
    %152 = vector.extract_strided_slice %125 {offsets = [0, 5], sizes = [16, 16], strides = [1, 1]} : vector<16x22xf32> to vector<16x16xf32>
    %153 = vector.broadcast %151 : f32 to vector<16x16xf32>
    %154 = arith.mulf %153, %152 : vector<16x16xf32>
    %155 = arith.addf %150, %154 : vector<16x16xf32>
    %c27 = arith.constant 27 : index
    %156 = memref.load %arg2[%c27] : memref<98xf32, #tpu.memory_space<smem>>
    %157 = vector.extract_strided_slice %125 {offsets = [0, 6], sizes = [16, 16], strides = [1, 1]} : vector<16x22xf32> to vector<16x16xf32>
    %158 = vector.broadcast %156 : f32 to vector<16x16xf32>
    %159 = arith.mulf %158, %157 : vector<16x16xf32>
    %160 = arith.addf %155, %159 : vector<16x16xf32>
    %161 = vector.extract_strided_slice %16 {offsets = [9, 125], sizes = [16, 22], strides = [1, 1]} : vector<32x272xf32> to vector<16x22xf32>
    %c28 = arith.constant 28 : index
    %162 = memref.load %arg2[%c28] : memref<98xf32, #tpu.memory_space<smem>>
    %163 = vector.extract_strided_slice %161 {offsets = [0, 0], sizes = [16, 16], strides = [1, 1]} : vector<16x22xf32> to vector<16x16xf32>
    %164 = vector.broadcast %162 : f32 to vector<16x16xf32>
    %165 = arith.mulf %164, %163 : vector<16x16xf32>
    %166 = arith.addf %160, %165 : vector<16x16xf32>
    %c29 = arith.constant 29 : index
    %167 = memref.load %arg2[%c29] : memref<98xf32, #tpu.memory_space<smem>>
    %168 = vector.extract_strided_slice %161 {offsets = [0, 1], sizes = [16, 16], strides = [1, 1]} : vector<16x22xf32> to vector<16x16xf32>
    %169 = vector.broadcast %167 : f32 to vector<16x16xf32>
    %170 = arith.mulf %169, %168 : vector<16x16xf32>
    %171 = arith.addf %166, %170 : vector<16x16xf32>
    %c30 = arith.constant 30 : index
    %172 = memref.load %arg2[%c30] : memref<98xf32, #tpu.memory_space<smem>>
    %173 = vector.extract_strided_slice %161 {offsets = [0, 2], sizes = [16, 16], strides = [1, 1]} : vector<16x22xf32> to vector<16x16xf32>
    %174 = vector.broadcast %172 : f32 to vector<16x16xf32>
    %175 = arith.mulf %174, %173 : vector<16x16xf32>
    %176 = arith.addf %171, %175 : vector<16x16xf32>
    %c31 = arith.constant 31 : index
    %177 = memref.load %arg2[%c31] : memref<98xf32, #tpu.memory_space<smem>>
    %178 = vector.extract_strided_slice %161 {offsets = [0, 3], sizes = [16, 16], strides = [1, 1]} : vector<16x22xf32> to vector<16x16xf32>
    %179 = vector.broadcast %177 : f32 to vector<16x16xf32>
    %180 = arith.mulf %179, %178 : vector<16x16xf32>
    %181 = arith.addf %176, %180 : vector<16x16xf32>
    %c32 = arith.constant 32 : index
    %182 = memref.load %arg2[%c32] : memref<98xf32, #tpu.memory_space<smem>>
    %183 = vector.extract_strided_slice %161 {offsets = [0, 4], sizes = [16, 16], strides = [1, 1]} : vector<16x22xf32> to vector<16x16xf32>
    %184 = vector.broadcast %182 : f32 to vector<16x16xf32>
    %185 = arith.mulf %184, %183 : vector<16x16xf32>
    %186 = arith.addf %181, %185 : vector<16x16xf32>
    %c33 = arith.constant 33 : index
    %187 = memref.load %arg2[%c33] : memref<98xf32, #tpu.memory_space<smem>>
    %188 = vector.extract_strided_slice %161 {offsets = [0, 5], sizes = [16, 16], strides = [1, 1]} : vector<16x22xf32> to vector<16x16xf32>
    %189 = vector.broadcast %187 : f32 to vector<16x16xf32>
    %190 = arith.mulf %189, %188 : vector<16x16xf32>
    %191 = arith.addf %186, %190 : vector<16x16xf32>
    %c34 = arith.constant 34 : index
    %192 = memref.load %arg2[%c34] : memref<98xf32, #tpu.memory_space<smem>>
    %193 = vector.extract_strided_slice %161 {offsets = [0, 6], sizes = [16, 16], strides = [1, 1]} : vector<16x22xf32> to vector<16x16xf32>
    %194 = vector.broadcast %192 : f32 to vector<16x16xf32>
    %195 = arith.mulf %194, %193 : vector<16x16xf32>
    %196 = arith.addf %191, %195 : vector<16x16xf32>
    %197 = vector.extract_strided_slice %16 {offsets = [10, 125], sizes = [16, 22], strides = [1, 1]} : vector<32x272xf32> to vector<16x22xf32>
    %c35 = arith.constant 35 : index
    %198 = memref.load %arg2[%c35] : memref<98xf32, #tpu.memory_space<smem>>
    %199 = vector.extract_strided_slice %197 {offsets = [0, 0], sizes = [16, 16], strides = [1, 1]} : vector<16x22xf32> to vector<16x16xf32>
    %200 = vector.broadcast %198 : f32 to vector<16x16xf32>
    %201 = arith.mulf %200, %199 : vector<16x16xf32>
    %202 = arith.addf %196, %201 : vector<16x16xf32>
    %c36 = arith.constant 36 : index
    %203 = memref.load %arg2[%c36] : memref<98xf32, #tpu.memory_space<smem>>
    %204 = vector.extract_strided_slice %197 {offsets = [0, 1], sizes = [16, 16], strides = [1, 1]} : vector<16x22xf32> to vector<16x16xf32>
    %205 = vector.broadcast %203 : f32 to vector<16x16xf32>
    %206 = arith.mulf %205, %204 : vector<16x16xf32>
    %207 = arith.addf %202, %206 : vector<16x16xf32>
    %c37 = arith.constant 37 : index
    %208 = memref.load %arg2[%c37] : memref<98xf32, #tpu.memory_space<smem>>
    %209 = vector.extract_strided_slice %197 {offsets = [0, 2], sizes = [16, 16], strides = [1, 1]} : vector<16x22xf32> to vector<16x16xf32>
    %210 = vector.broadcast %208 : f32 to vector<16x16xf32>
    %211 = arith.mulf %210, %209 : vector<16x16xf32>
    %212 = arith.addf %207, %211 : vector<16x16xf32>
    %c38 = arith.constant 38 : index
    %213 = memref.load %arg2[%c38] : memref<98xf32, #tpu.memory_space<smem>>
    %214 = vector.extract_strided_slice %197 {offsets = [0, 3], sizes = [16, 16], strides = [1, 1]} : vector<16x22xf32> to vector<16x16xf32>
    %215 = vector.broadcast %213 : f32 to vector<16x16xf32>
    %216 = arith.mulf %215, %214 : vector<16x16xf32>
    %217 = arith.addf %212, %216 : vector<16x16xf32>
    %c39 = arith.constant 39 : index
    %218 = memref.load %arg2[%c39] : memref<98xf32, #tpu.memory_space<smem>>
    %219 = vector.extract_strided_slice %197 {offsets = [0, 4], sizes = [16, 16], strides = [1, 1]} : vector<16x22xf32> to vector<16x16xf32>
    %220 = vector.broadcast %218 : f32 to vector<16x16xf32>
    %221 = arith.mulf %220, %219 : vector<16x16xf32>
    %222 = arith.addf %217, %221 : vector<16x16xf32>
    %c40 = arith.constant 40 : index
    %223 = memref.load %arg2[%c40] : memref<98xf32, #tpu.memory_space<smem>>
    %224 = vector.extract_strided_slice %197 {offsets = [0, 5], sizes = [16, 16], strides = [1, 1]} : vector<16x22xf32> to vector<16x16xf32>
    %225 = vector.broadcast %223 : f32 to vector<16x16xf32>
    %226 = arith.mulf %225, %224 : vector<16x16xf32>
    %227 = arith.addf %222, %226 : vector<16x16xf32>
    %c41 = arith.constant 41 : index
    %228 = memref.load %arg2[%c41] : memref<98xf32, #tpu.memory_space<smem>>
    %229 = vector.extract_strided_slice %197 {offsets = [0, 6], sizes = [16, 16], strides = [1, 1]} : vector<16x22xf32> to vector<16x16xf32>
    %230 = vector.broadcast %228 : f32 to vector<16x16xf32>
    %231 = arith.mulf %230, %229 : vector<16x16xf32>
    %232 = arith.addf %227, %231 : vector<16x16xf32>
    %233 = vector.extract_strided_slice %16 {offsets = [11, 125], sizes = [16, 22], strides = [1, 1]} : vector<32x272xf32> to vector<16x22xf32>
    %c42 = arith.constant 42 : index
    %234 = memref.load %arg2[%c42] : memref<98xf32, #tpu.memory_space<smem>>
    %235 = vector.extract_strided_slice %233 {offsets = [0, 0], sizes = [16, 16], strides = [1, 1]} : vector<16x22xf32> to vector<16x16xf32>
    %236 = vector.broadcast %234 : f32 to vector<16x16xf32>
    %237 = arith.mulf %236, %235 : vector<16x16xf32>
    %238 = arith.addf %232, %237 : vector<16x16xf32>
    %c43 = arith.constant 43 : index
    %239 = memref.load %arg2[%c43] : memref<98xf32, #tpu.memory_space<smem>>
    %240 = vector.extract_strided_slice %233 {offsets = [0, 1], sizes = [16, 16], strides = [1, 1]} : vector<16x22xf32> to vector<16x16xf32>
    %241 = vector.broadcast %239 : f32 to vector<16x16xf32>
    %242 = arith.mulf %241, %240 : vector<16x16xf32>
    %243 = arith.addf %238, %242 : vector<16x16xf32>
    %c44 = arith.constant 44 : index
    %244 = memref.load %arg2[%c44] : memref<98xf32, #tpu.memory_space<smem>>
    %245 = vector.extract_strided_slice %233 {offsets = [0, 2], sizes = [16, 16], strides = [1, 1]} : vector<16x22xf32> to vector<16x16xf32>
    %246 = vector.broadcast %244 : f32 to vector<16x16xf32>
    %247 = arith.mulf %246, %245 : vector<16x16xf32>
    %248 = arith.addf %243, %247 : vector<16x16xf32>
    %c45 = arith.constant 45 : index
    %249 = memref.load %arg2[%c45] : memref<98xf32, #tpu.memory_space<smem>>
    %250 = vector.extract_strided_slice %233 {offsets = [0, 3], sizes = [16, 16], strides = [1, 1]} : vector<16x22xf32> to vector<16x16xf32>
    %251 = vector.broadcast %249 : f32 to vector<16x16xf32>
    %252 = arith.mulf %251, %250 : vector<16x16xf32>
    %253 = arith.addf %248, %252 : vector<16x16xf32>
    %c46 = arith.constant 46 : index
    %254 = memref.load %arg2[%c46] : memref<98xf32, #tpu.memory_space<smem>>
    %255 = vector.extract_strided_slice %233 {offsets = [0, 4], sizes = [16, 16], strides = [1, 1]} : vector<16x22xf32> to vector<16x16xf32>
    %256 = vector.broadcast %254 : f32 to vector<16x16xf32>
    %257 = arith.mulf %256, %255 : vector<16x16xf32>
    %258 = arith.addf %253, %257 : vector<16x16xf32>
    %c47 = arith.constant 47 : index
    %259 = memref.load %arg2[%c47] : memref<98xf32, #tpu.memory_space<smem>>
    %260 = vector.extract_strided_slice %233 {offsets = [0, 5], sizes = [16, 16], strides = [1, 1]} : vector<16x22xf32> to vector<16x16xf32>
    %261 = vector.broadcast %259 : f32 to vector<16x16xf32>
    %262 = arith.mulf %261, %260 : vector<16x16xf32>
    %263 = arith.addf %258, %262 : vector<16x16xf32>
    %c48 = arith.constant 48 : index
    %264 = memref.load %arg2[%c48] : memref<98xf32, #tpu.memory_space<smem>>
    %265 = vector.extract_strided_slice %233 {offsets = [0, 6], sizes = [16, 16], strides = [1, 1]} : vector<16x22xf32> to vector<16x16xf32>
    %266 = vector.broadcast %264 : f32 to vector<16x16xf32>
    %267 = arith.mulf %266, %265 : vector<16x16xf32>
    %268 = arith.addf %263, %267 : vector<16x16xf32>
    %c1_19 = arith.constant 1 : index
    %c0_20 = arith.constant 0 : index
    %c0_21 = arith.constant 0 : index
    %269 = vector.load %arg4[%c1_19, %c0_20, %c0_21] : memref<2x32x272xf32, #tpu.memory_space<vmem>>, vector<1x32x272xf32>
    %270 = vector.shape_cast %269 : vector<1x32x272xf32> to vector<32x272xf32>
    %271 = vector.extract_strided_slice %270 {offsets = [5, 125], sizes = [16, 22], strides = [1, 1]} : vector<32x272xf32> to vector<16x22xf32>
    %c49 = arith.constant 49 : index
    %272 = memref.load %arg2[%c49] : memref<98xf32, #tpu.memory_space<smem>>
    %273 = vector.extract_strided_slice %271 {offsets = [0, 0], sizes = [16, 16], strides = [1, 1]} : vector<16x22xf32> to vector<16x16xf32>
    %274 = vector.broadcast %272 : f32 to vector<16x16xf32>
    %275 = arith.mulf %274, %273 : vector<16x16xf32>
    %276 = arith.addf %268, %275 : vector<16x16xf32>
    %c50 = arith.constant 50 : index
    %277 = memref.load %arg2[%c50] : memref<98xf32, #tpu.memory_space<smem>>
    %278 = vector.extract_strided_slice %271 {offsets = [0, 1], sizes = [16, 16], strides = [1, 1]} : vector<16x22xf32> to vector<16x16xf32>
    %279 = vector.broadcast %277 : f32 to vector<16x16xf32>
    %280 = arith.mulf %279, %278 : vector<16x16xf32>
    %281 = arith.addf %276, %280 : vector<16x16xf32>
    %c51 = arith.constant 51 : index
    %282 = memref.load %arg2[%c51] : memref<98xf32, #tpu.memory_space<smem>>
    %283 = vector.extract_strided_slice %271 {offsets = [0, 2], sizes = [16, 16], strides = [1, 1]} : vector<16x22xf32> to vector<16x16xf32>
    %284 = vector.broadcast %282 : f32 to vector<16x16xf32>
    %285 = arith.mulf %284, %283 : vector<16x16xf32>
    %286 = arith.addf %281, %285 : vector<16x16xf32>
    %c52 = arith.constant 52 : index
    %287 = memref.load %arg2[%c52] : memref<98xf32, #tpu.memory_space<smem>>
    %288 = vector.extract_strided_slice %271 {offsets = [0, 3], sizes = [16, 16], strides = [1, 1]} : vector<16x22xf32> to vector<16x16xf32>
    %289 = vector.broadcast %287 : f32 to vector<16x16xf32>
    %290 = arith.mulf %289, %288 : vector<16x16xf32>
    %291 = arith.addf %286, %290 : vector<16x16xf32>
    %c53 = arith.constant 53 : index
    %292 = memref.load %arg2[%c53] : memref<98xf32, #tpu.memory_space<smem>>
    %293 = vector.extract_strided_slice %271 {offsets = [0, 4], sizes = [16, 16], strides = [1, 1]} : vector<16x22xf32> to vector<16x16xf32>
    %294 = vector.broadcast %292 : f32 to vector<16x16xf32>
    %295 = arith.mulf %294, %293 : vector<16x16xf32>
    %296 = arith.addf %291, %295 : vector<16x16xf32>
    %c54 = arith.constant 54 : index
    %297 = memref.load %arg2[%c54] : memref<98xf32, #tpu.memory_space<smem>>
    %298 = vector.extract_strided_slice %271 {offsets = [0, 5], sizes = [16, 16], strides = [1, 1]} : vector<16x22xf32> to vector<16x16xf32>
    %299 = vector.broadcast %297 : f32 to vector<16x16xf32>
    %300 = arith.mulf %299, %298 : vector<16x16xf32>
    %301 = arith.addf %296, %300 : vector<16x16xf32>
    %c55 = arith.constant 55 : index
    %302 = memref.load %arg2[%c55] : memref<98xf32, #tpu.memory_space<smem>>
    %303 = vector.extract_strided_slice %271 {offsets = [0, 6], sizes = [16, 16], strides = [1, 1]} : vector<16x22xf32> to vector<16x16xf32>
    %304 = vector.broadcast %302 : f32 to vector<16x16xf32>
    %305 = arith.mulf %304, %303 : vector<16x16xf32>
    %306 = arith.addf %301, %305 : vector<16x16xf32>
    %307 = vector.extract_strided_slice %270 {offsets = [6, 125], sizes = [16, 22], strides = [1, 1]} : vector<32x272xf32> to vector<16x22xf32>
    %c56 = arith.constant 56 : index
    %308 = memref.load %arg2[%c56] : memref<98xf32, #tpu.memory_space<smem>>
    %309 = vector.extract_strided_slice %307 {offsets = [0, 0], sizes = [16, 16], strides = [1, 1]} : vector<16x22xf32> to vector<16x16xf32>
    %310 = vector.broadcast %308 : f32 to vector<16x16xf32>
    %311 = arith.mulf %310, %309 : vector<16x16xf32>
    %312 = arith.addf %306, %311 : vector<16x16xf32>
    %c57 = arith.constant 57 : index
    %313 = memref.load %arg2[%c57] : memref<98xf32, #tpu.memory_space<smem>>
    %314 = vector.extract_strided_slice %307 {offsets = [0, 1], sizes = [16, 16], strides = [1, 1]} : vector<16x22xf32> to vector<16x16xf32>
    %315 = vector.broadcast %313 : f32 to vector<16x16xf32>
    %316 = arith.mulf %315, %314 : vector<16x16xf32>
    %317 = arith.addf %312, %316 : vector<16x16xf32>
    %c58 = arith.constant 58 : index
    %318 = memref.load %arg2[%c58] : memref<98xf32, #tpu.memory_space<smem>>
    %319 = vector.extract_strided_slice %307 {offsets = [0, 2], sizes = [16, 16], strides = [1, 1]} : vector<16x22xf32> to vector<16x16xf32>
    %320 = vector.broadcast %318 : f32 to vector<16x16xf32>
    %321 = arith.mulf %320, %319 : vector<16x16xf32>
    %322 = arith.addf %317, %321 : vector<16x16xf32>
    %c59 = arith.constant 59 : index
    %323 = memref.load %arg2[%c59] : memref<98xf32, #tpu.memory_space<smem>>
    %324 = vector.extract_strided_slice %307 {offsets = [0, 3], sizes = [16, 16], strides = [1, 1]} : vector<16x22xf32> to vector<16x16xf32>
    %325 = vector.broadcast %323 : f32 to vector<16x16xf32>
    %326 = arith.mulf %325, %324 : vector<16x16xf32>
    %327 = arith.addf %322, %326 : vector<16x16xf32>
    %c60 = arith.constant 60 : index
    %328 = memref.load %arg2[%c60] : memref<98xf32, #tpu.memory_space<smem>>
    %329 = vector.extract_strided_slice %307 {offsets = [0, 4], sizes = [16, 16], strides = [1, 1]} : vector<16x22xf32> to vector<16x16xf32>
    %330 = vector.broadcast %328 : f32 to vector<16x16xf32>
    %331 = arith.mulf %330, %329 : vector<16x16xf32>
    %332 = arith.addf %327, %331 : vector<16x16xf32>
    %c61 = arith.constant 61 : index
    %333 = memref.load %arg2[%c61] : memref<98xf32, #tpu.memory_space<smem>>
    %334 = vector.extract_strided_slice %307 {offsets = [0, 5], sizes = [16, 16], strides = [1, 1]} : vector<16x22xf32> to vector<16x16xf32>
    %335 = vector.broadcast %333 : f32 to vector<16x16xf32>
    %336 = arith.mulf %335, %334 : vector<16x16xf32>
    %337 = arith.addf %332, %336 : vector<16x16xf32>
    %c62 = arith.constant 62 : index
    %338 = memref.load %arg2[%c62] : memref<98xf32, #tpu.memory_space<smem>>
    %339 = vector.extract_strided_slice %307 {offsets = [0, 6], sizes = [16, 16], strides = [1, 1]} : vector<16x22xf32> to vector<16x16xf32>
    %340 = vector.broadcast %338 : f32 to vector<16x16xf32>
    %341 = arith.mulf %340, %339 : vector<16x16xf32>
    %342 = arith.addf %337, %341 : vector<16x16xf32>
    %343 = vector.extract_strided_slice %270 {offsets = [7, 125], sizes = [16, 22], strides = [1, 1]} : vector<32x272xf32> to vector<16x22xf32>
    %c63 = arith.constant 63 : index
    %344 = memref.load %arg2[%c63] : memref<98xf32, #tpu.memory_space<smem>>
    %345 = vector.extract_strided_slice %343 {offsets = [0, 0], sizes = [16, 16], strides = [1, 1]} : vector<16x22xf32> to vector<16x16xf32>
    %346 = vector.broadcast %344 : f32 to vector<16x16xf32>
    %347 = arith.mulf %346, %345 : vector<16x16xf32>
    %348 = arith.addf %342, %347 : vector<16x16xf32>
    %c64 = arith.constant 64 : index
    %349 = memref.load %arg2[%c64] : memref<98xf32, #tpu.memory_space<smem>>
    %350 = vector.extract_strided_slice %343 {offsets = [0, 1], sizes = [16, 16], strides = [1, 1]} : vector<16x22xf32> to vector<16x16xf32>
    %351 = vector.broadcast %349 : f32 to vector<16x16xf32>
    %352 = arith.mulf %351, %350 : vector<16x16xf32>
    %353 = arith.addf %348, %352 : vector<16x16xf32>
    %c65 = arith.constant 65 : index
    %354 = memref.load %arg2[%c65] : memref<98xf32, #tpu.memory_space<smem>>
    %355 = vector.extract_strided_slice %343 {offsets = [0, 2], sizes = [16, 16], strides = [1, 1]} : vector<16x22xf32> to vector<16x16xf32>
    %356 = vector.broadcast %354 : f32 to vector<16x16xf32>
    %357 = arith.mulf %356, %355 : vector<16x16xf32>
    %358 = arith.addf %353, %357 : vector<16x16xf32>
    %c66 = arith.constant 66 : index
    %359 = memref.load %arg2[%c66] : memref<98xf32, #tpu.memory_space<smem>>
    %360 = vector.extract_strided_slice %343 {offsets = [0, 3], sizes = [16, 16], strides = [1, 1]} : vector<16x22xf32> to vector<16x16xf32>
    %361 = vector.broadcast %359 : f32 to vector<16x16xf32>
    %362 = arith.mulf %361, %360 : vector<16x16xf32>
    %363 = arith.addf %358, %362 : vector<16x16xf32>
    %c67 = arith.constant 67 : index
    %364 = memref.load %arg2[%c67] : memref<98xf32, #tpu.memory_space<smem>>
    %365 = vector.extract_strided_slice %343 {offsets = [0, 4], sizes = [16, 16], strides = [1, 1]} : vector<16x22xf32> to vector<16x16xf32>
    %366 = vector.broadcast %364 : f32 to vector<16x16xf32>
    %367 = arith.mulf %366, %365 : vector<16x16xf32>
    %368 = arith.addf %363, %367 : vector<16x16xf32>
    %c68 = arith.constant 68 : index
    %369 = memref.load %arg2[%c68] : memref<98xf32, #tpu.memory_space<smem>>
    %370 = vector.extract_strided_slice %343 {offsets = [0, 5], sizes = [16, 16], strides = [1, 1]} : vector<16x22xf32> to vector<16x16xf32>
    %371 = vector.broadcast %369 : f32 to vector<16x16xf32>
    %372 = arith.mulf %371, %370 : vector<16x16xf32>
    %373 = arith.addf %368, %372 : vector<16x16xf32>
    %c69 = arith.constant 69 : index
    %374 = memref.load %arg2[%c69] : memref<98xf32, #tpu.memory_space<smem>>
    %375 = vector.extract_strided_slice %343 {offsets = [0, 6], sizes = [16, 16], strides = [1, 1]} : vector<16x22xf32> to vector<16x16xf32>
    %376 = vector.broadcast %374 : f32 to vector<16x16xf32>
    %377 = arith.mulf %376, %375 : vector<16x16xf32>
    %378 = arith.addf %373, %377 : vector<16x16xf32>
    %379 = vector.extract_strided_slice %270 {offsets = [8, 125], sizes = [16, 22], strides = [1, 1]} : vector<32x272xf32> to vector<16x22xf32>
    %c70 = arith.constant 70 : index
    %380 = memref.load %arg2[%c70] : memref<98xf32, #tpu.memory_space<smem>>
    %381 = vector.extract_strided_slice %379 {offsets = [0, 0], sizes = [16, 16], strides = [1, 1]} : vector<16x22xf32> to vector<16x16xf32>
    %382 = vector.broadcast %380 : f32 to vector<16x16xf32>
    %383 = arith.mulf %382, %381 : vector<16x16xf32>
    %384 = arith.addf %378, %383 : vector<16x16xf32>
    %c71 = arith.constant 71 : index
    %385 = memref.load %arg2[%c71] : memref<98xf32, #tpu.memory_space<smem>>
    %386 = vector.extract_strided_slice %379 {offsets = [0, 1], sizes = [16, 16], strides = [1, 1]} : vector<16x22xf32> to vector<16x16xf32>
    %387 = vector.broadcast %385 : f32 to vector<16x16xf32>
    %388 = arith.mulf %387, %386 : vector<16x16xf32>
    %389 = arith.addf %384, %388 : vector<16x16xf32>
    %c72 = arith.constant 72 : index
    %390 = memref.load %arg2[%c72] : memref<98xf32, #tpu.memory_space<smem>>
    %391 = vector.extract_strided_slice %379 {offsets = [0, 2], sizes = [16, 16], strides = [1, 1]} : vector<16x22xf32> to vector<16x16xf32>
    %392 = vector.broadcast %390 : f32 to vector<16x16xf32>
    %393 = arith.mulf %392, %391 : vector<16x16xf32>
    %394 = arith.addf %389, %393 : vector<16x16xf32>
    %c73 = arith.constant 73 : index
    %395 = memref.load %arg2[%c73] : memref<98xf32, #tpu.memory_space<smem>>
    %396 = vector.extract_strided_slice %379 {offsets = [0, 3], sizes = [16, 16], strides = [1, 1]} : vector<16x22xf32> to vector<16x16xf32>
    %397 = vector.broadcast %395 : f32 to vector<16x16xf32>
    %398 = arith.mulf %397, %396 : vector<16x16xf32>
    %399 = arith.addf %394, %398 : vector<16x16xf32>
    %c74 = arith.constant 74 : index
    %400 = memref.load %arg2[%c74] : memref<98xf32, #tpu.memory_space<smem>>
    %401 = vector.extract_strided_slice %379 {offsets = [0, 4], sizes = [16, 16], strides = [1, 1]} : vector<16x22xf32> to vector<16x16xf32>
    %402 = vector.broadcast %400 : f32 to vector<16x16xf32>
    %403 = arith.mulf %402, %401 : vector<16x16xf32>
    %404 = arith.addf %399, %403 : vector<16x16xf32>
    %c75 = arith.constant 75 : index
    %405 = memref.load %arg2[%c75] : memref<98xf32, #tpu.memory_space<smem>>
    %406 = vector.extract_strided_slice %379 {offsets = [0, 5], sizes = [16, 16], strides = [1, 1]} : vector<16x22xf32> to vector<16x16xf32>
    %407 = vector.broadcast %405 : f32 to vector<16x16xf32>
    %408 = arith.mulf %407, %406 : vector<16x16xf32>
    %409 = arith.addf %404, %408 : vector<16x16xf32>
    %c76 = arith.constant 76 : index
    %410 = memref.load %arg2[%c76] : memref<98xf32, #tpu.memory_space<smem>>
    %411 = vector.extract_strided_slice %379 {offsets = [0, 6], sizes = [16, 16], strides = [1, 1]} : vector<16x22xf32> to vector<16x16xf32>
    %412 = vector.broadcast %410 : f32 to vector<16x16xf32>
    %413 = arith.mulf %412, %411 : vector<16x16xf32>
    %414 = arith.addf %409, %413 : vector<16x16xf32>
    %415 = vector.extract_strided_slice %270 {offsets = [9, 125], sizes = [16, 22], strides = [1, 1]} : vector<32x272xf32> to vector<16x22xf32>
    %c77 = arith.constant 77 : index
    %416 = memref.load %arg2[%c77] : memref<98xf32, #tpu.memory_space<smem>>
    %417 = vector.extract_strided_slice %415 {offsets = [0, 0], sizes = [16, 16], strides = [1, 1]} : vector<16x22xf32> to vector<16x16xf32>
    %418 = vector.broadcast %416 : f32 to vector<16x16xf32>
    %419 = arith.mulf %418, %417 : vector<16x16xf32>
    %420 = arith.addf %414, %419 : vector<16x16xf32>
    %c78 = arith.constant 78 : index
    %421 = memref.load %arg2[%c78] : memref<98xf32, #tpu.memory_space<smem>>
    %422 = vector.extract_strided_slice %415 {offsets = [0, 1], sizes = [16, 16], strides = [1, 1]} : vector<16x22xf32> to vector<16x16xf32>
    %423 = vector.broadcast %421 : f32 to vector<16x16xf32>
    %424 = arith.mulf %423, %422 : vector<16x16xf32>
    %425 = arith.addf %420, %424 : vector<16x16xf32>
    %c79 = arith.constant 79 : index
    %426 = memref.load %arg2[%c79] : memref<98xf32, #tpu.memory_space<smem>>
    %427 = vector.extract_strided_slice %415 {offsets = [0, 2], sizes = [16, 16], strides = [1, 1]} : vector<16x22xf32> to vector<16x16xf32>
    %428 = vector.broadcast %426 : f32 to vector<16x16xf32>
    %429 = arith.mulf %428, %427 : vector<16x16xf32>
    %430 = arith.addf %425, %429 : vector<16x16xf32>
    %c80 = arith.constant 80 : index
    %431 = memref.load %arg2[%c80] : memref<98xf32, #tpu.memory_space<smem>>
    %432 = vector.extract_strided_slice %415 {offsets = [0, 3], sizes = [16, 16], strides = [1, 1]} : vector<16x22xf32> to vector<16x16xf32>
    %433 = vector.broadcast %431 : f32 to vector<16x16xf32>
    %434 = arith.mulf %433, %432 : vector<16x16xf32>
    %435 = arith.addf %430, %434 : vector<16x16xf32>
    %c81 = arith.constant 81 : index
    %436 = memref.load %arg2[%c81] : memref<98xf32, #tpu.memory_space<smem>>
    %437 = vector.extract_strided_slice %415 {offsets = [0, 4], sizes = [16, 16], strides = [1, 1]} : vector<16x22xf32> to vector<16x16xf32>
    %438 = vector.broadcast %436 : f32 to vector<16x16xf32>
    %439 = arith.mulf %438, %437 : vector<16x16xf32>
    %440 = arith.addf %435, %439 : vector<16x16xf32>
    %c82 = arith.constant 82 : index
    %441 = memref.load %arg2[%c82] : memref<98xf32, #tpu.memory_space<smem>>
    %442 = vector.extract_strided_slice %415 {offsets = [0, 5], sizes = [16, 16], strides = [1, 1]} : vector<16x22xf32> to vector<16x16xf32>
    %443 = vector.broadcast %441 : f32 to vector<16x16xf32>
    %444 = arith.mulf %443, %442 : vector<16x16xf32>
    %445 = arith.addf %440, %444 : vector<16x16xf32>
    %c83 = arith.constant 83 : index
    %446 = memref.load %arg2[%c83] : memref<98xf32, #tpu.memory_space<smem>>
    %447 = vector.extract_strided_slice %415 {offsets = [0, 6], sizes = [16, 16], strides = [1, 1]} : vector<16x22xf32> to vector<16x16xf32>
    %448 = vector.broadcast %446 : f32 to vector<16x16xf32>
    %449 = arith.mulf %448, %447 : vector<16x16xf32>
    %450 = arith.addf %445, %449 : vector<16x16xf32>
    %451 = vector.extract_strided_slice %270 {offsets = [10, 125], sizes = [16, 22], strides = [1, 1]} : vector<32x272xf32> to vector<16x22xf32>
    %c84 = arith.constant 84 : index
    %452 = memref.load %arg2[%c84] : memref<98xf32, #tpu.memory_space<smem>>
    %453 = vector.extract_strided_slice %451 {offsets = [0, 0], sizes = [16, 16], strides = [1, 1]} : vector<16x22xf32> to vector<16x16xf32>
    %454 = vector.broadcast %452 : f32 to vector<16x16xf32>
    %455 = arith.mulf %454, %453 : vector<16x16xf32>
    %456 = arith.addf %450, %455 : vector<16x16xf32>
    %c85 = arith.constant 85 : index
    %457 = memref.load %arg2[%c85] : memref<98xf32, #tpu.memory_space<smem>>
    %458 = vector.extract_strided_slice %451 {offsets = [0, 1], sizes = [16, 16], strides = [1, 1]} : vector<16x22xf32> to vector<16x16xf32>
    %459 = vector.broadcast %457 : f32 to vector<16x16xf32>
    %460 = arith.mulf %459, %458 : vector<16x16xf32>
    %461 = arith.addf %456, %460 : vector<16x16xf32>
    %c86 = arith.constant 86 : index
    %462 = memref.load %arg2[%c86] : memref<98xf32, #tpu.memory_space<smem>>
    %463 = vector.extract_strided_slice %451 {offsets = [0, 2], sizes = [16, 16], strides = [1, 1]} : vector<16x22xf32> to vector<16x16xf32>
    %464 = vector.broadcast %462 : f32 to vector<16x16xf32>
    %465 = arith.mulf %464, %463 : vector<16x16xf32>
    %466 = arith.addf %461, %465 : vector<16x16xf32>
    %c87 = arith.constant 87 : index
    %467 = memref.load %arg2[%c87] : memref<98xf32, #tpu.memory_space<smem>>
    %468 = vector.extract_strided_slice %451 {offsets = [0, 3], sizes = [16, 16], strides = [1, 1]} : vector<16x22xf32> to vector<16x16xf32>
    %469 = vector.broadcast %467 : f32 to vector<16x16xf32>
    %470 = arith.mulf %469, %468 : vector<16x16xf32>
    %471 = arith.addf %466, %470 : vector<16x16xf32>
    %c88 = arith.constant 88 : index
    %472 = memref.load %arg2[%c88] : memref<98xf32, #tpu.memory_space<smem>>
    %473 = vector.extract_strided_slice %451 {offsets = [0, 4], sizes = [16, 16], strides = [1, 1]} : vector<16x22xf32> to vector<16x16xf32>
    %474 = vector.broadcast %472 : f32 to vector<16x16xf32>
    %475 = arith.mulf %474, %473 : vector<16x16xf32>
    %476 = arith.addf %471, %475 : vector<16x16xf32>
    %c89 = arith.constant 89 : index
    %477 = memref.load %arg2[%c89] : memref<98xf32, #tpu.memory_space<smem>>
    %478 = vector.extract_strided_slice %451 {offsets = [0, 5], sizes = [16, 16], strides = [1, 1]} : vector<16x22xf32> to vector<16x16xf32>
    %479 = vector.broadcast %477 : f32 to vector<16x16xf32>
    %480 = arith.mulf %479, %478 : vector<16x16xf32>
    %481 = arith.addf %476, %480 : vector<16x16xf32>
    %c90 = arith.constant 90 : index
    %482 = memref.load %arg2[%c90] : memref<98xf32, #tpu.memory_space<smem>>
    %483 = vector.extract_strided_slice %451 {offsets = [0, 6], sizes = [16, 16], strides = [1, 1]} : vector<16x22xf32> to vector<16x16xf32>
    %484 = vector.broadcast %482 : f32 to vector<16x16xf32>
    %485 = arith.mulf %484, %483 : vector<16x16xf32>
    %486 = arith.addf %481, %485 : vector<16x16xf32>
    %487 = vector.extract_strided_slice %270 {offsets = [11, 125], sizes = [16, 22], strides = [1, 1]} : vector<32x272xf32> to vector<16x22xf32>
    %c91 = arith.constant 91 : index
    %488 = memref.load %arg2[%c91] : memref<98xf32, #tpu.memory_space<smem>>
    %489 = vector.extract_strided_slice %487 {offsets = [0, 0], sizes = [16, 16], strides = [1, 1]} : vector<16x22xf32> to vector<16x16xf32>
    %490 = vector.broadcast %488 : f32 to vector<16x16xf32>
    %491 = arith.mulf %490, %489 : vector<16x16xf32>
    %492 = arith.addf %486, %491 : vector<16x16xf32>
    %c92 = arith.constant 92 : index
    %493 = memref.load %arg2[%c92] : memref<98xf32, #tpu.memory_space<smem>>
    %494 = vector.extract_strided_slice %487 {offsets = [0, 1], sizes = [16, 16], strides = [1, 1]} : vector<16x22xf32> to vector<16x16xf32>
    %495 = vector.broadcast %493 : f32 to vector<16x16xf32>
    %496 = arith.mulf %495, %494 : vector<16x16xf32>
    %497 = arith.addf %492, %496 : vector<16x16xf32>
    %c93 = arith.constant 93 : index
    %498 = memref.load %arg2[%c93] : memref<98xf32, #tpu.memory_space<smem>>
    %499 = vector.extract_strided_slice %487 {offsets = [0, 2], sizes = [16, 16], strides = [1, 1]} : vector<16x22xf32> to vector<16x16xf32>
    %500 = vector.broadcast %498 : f32 to vector<16x16xf32>
    %501 = arith.mulf %500, %499 : vector<16x16xf32>
    %502 = arith.addf %497, %501 : vector<16x16xf32>
    %c94 = arith.constant 94 : index
    %503 = memref.load %arg2[%c94] : memref<98xf32, #tpu.memory_space<smem>>
    %504 = vector.extract_strided_slice %487 {offsets = [0, 3], sizes = [16, 16], strides = [1, 1]} : vector<16x22xf32> to vector<16x16xf32>
    %505 = vector.broadcast %503 : f32 to vector<16x16xf32>
    %506 = arith.mulf %505, %504 : vector<16x16xf32>
    %507 = arith.addf %502, %506 : vector<16x16xf32>
    %c95 = arith.constant 95 : index
    %508 = memref.load %arg2[%c95] : memref<98xf32, #tpu.memory_space<smem>>
    %509 = vector.extract_strided_slice %487 {offsets = [0, 4], sizes = [16, 16], strides = [1, 1]} : vector<16x22xf32> to vector<16x16xf32>
    %510 = vector.broadcast %508 : f32 to vector<16x16xf32>
    %511 = arith.mulf %510, %509 : vector<16x16xf32>
    %512 = arith.addf %507, %511 : vector<16x16xf32>
    %c96 = arith.constant 96 : index
    %513 = memref.load %arg2[%c96] : memref<98xf32, #tpu.memory_space<smem>>
    %514 = vector.extract_strided_slice %487 {offsets = [0, 5], sizes = [16, 16], strides = [1, 1]} : vector<16x22xf32> to vector<16x16xf32>
    %515 = vector.broadcast %513 : f32 to vector<16x16xf32>
    %516 = arith.mulf %515, %514 : vector<16x16xf32>
    %517 = arith.addf %512, %516 : vector<16x16xf32>
    %c97 = arith.constant 97 : index
    %518 = memref.load %arg2[%c97] : memref<98xf32, #tpu.memory_space<smem>>
    %519 = vector.extract_strided_slice %487 {offsets = [0, 6], sizes = [16, 16], strides = [1, 1]} : vector<16x22xf32> to vector<16x16xf32>
    %520 = vector.broadcast %518 : f32 to vector<16x16xf32>
    %521 = arith.mulf %520, %519 : vector<16x16xf32>
    %522 = arith.addf %517, %521 : vector<16x16xf32>
    %cst_22 = arith.constant 0.000000e+00 : f32
    %523 = vector.broadcast %cst_22 : f32 to vector<16x16xf32>
    %524 = arith.subf %523, %522 : vector<16x16xf32>
    %525 = math.exp %524 : vector<16x16xf32>
    %cst_23 = arith.constant 1.000000e+00 : f32
    %526 = vector.broadcast %cst_23 : f32 to vector<16x16xf32>
    %527 = arith.addf %526, %525 : vector<16x16xf32>
    %cst_24 = arith.constant 1.000000e+00 : f32
    %528 = vector.broadcast %cst_24 : f32 to vector<16x16xf32>
    %529 = arith.divf %528, %527 : vector<16x16xf32>
    %530 = vector.shape_cast %529 : vector<16x16xf32> to vector<1x16x16xf32>
    %531 = vector.broadcast %530 : vector<1x16x16xf32> to vector<4x16x16xf32>
    %532 = arith.mulf %1, %531 : vector<4x16x16xf32>
    %c0_25 = arith.constant 0 : index
    %c0_26 = arith.constant 0 : index
    %c0_27 = arith.constant 0 : index
    %c0_28 = arith.constant 0 : index
    %533 = vector.load %arg3[%c0_25, %c0_26, %c0_27, %c0_28] : memref<1x4x16x16xf32, #tpu.memory_space<vmem>>, vector<1x4x16x16xf32>
    %534 = vector.shape_cast %533 : vector<1x4x16x16xf32> to vector<4x16x16xf32>
    %535 = vector.shape_cast %532 : vector<4x16x16xf32> to vector<1x4x16x16xf32>
    tpu.vector_store %arg3[%c0_25, %c0_26, %c0_27, %c0_28], %535 {strides = array<i32>} : memref<1x4x16x16xf32, #tpu.memory_space<vmem>>, vector<1x4x16x16xf32>,
    return
  }
  func.func @transform_0(%arg0: i32) -> (i32, i32, i32, i32) {
    %c0_i32 = arith.constant 0 : i32
    %c0_i32_0 = arith.constant 0 : i32
    %c0_i32_1 = arith.constant 0 : i32
    %c0_i32_2 = arith.constant 0 : i32
    return %arg0, %c0_i32, %c0_i32_0, %c0_i32_1 : i32, i32, i32, i32
  }
  func.func @transform_1(%arg0: i32) -> i32 {
    %c0_i32 = arith.constant 0 : i32
    %c0_i32_0 = arith.constant 0 : i32
    return %c0_i32 : i32
  }
  func.func @transform_2(%arg0: i32) -> (i32, i32, i32, i32) {
    %c0_i32 = arith.constant 0 : i32
    %c0_i32_0 = arith.constant 0 : i32
    %c0_i32_1 = arith.constant 0 : i32
    %c0_i32_2 = arith.constant 0 : i32
    return %arg0, %c0_i32, %c0_i32_0, %c0_i32_1 : i32, i32, i32, i32
  }
}

</mosaic_0001>

<llo_original>
// kernel: tpu_custom_call.1
$region0: #{tpu_custom_call.1}
  #allocation0 [shape = 'u32[]', space=smem, size = 0x4, offset = 0x4, fixed_abs, tag = 'smem constant byte address 0x4 - core index']
  #allocation1 [shape = 'u32[72,128]{1,0:T(1,128)}', space=vmem, size = 0x9000, scoped, tag = 'internal scratch']
  #allocation2 [shape = 'f32[2,32,272]{2,1,0:T(8,128)}', space=vmem, size = 0x18000, scoped, tag = 'scratch operand']
  %s0 = inlined_call_operand.hbm [shape: f32[2,4,16,16], index: 0, kind: input, shape index: {}]
  %s1 = inlined_call_operand.hbm [shape: f32[98], index: 1, kind: input, shape index: {}]
  %s2 = inlined_call_operand.hbm [shape: f32[2,4,16,16], index: 2, kind: output, shape index: {}]
  %s3 = sld [smem:[#allocation0]]
  $region49: #{tpu_custom_call.1} parent=0
    _
  %s5 = ssub.s32 1, %s3
  %s6 = scalar_select 0, %s5, %s3
  $region1: #{tpu_custom_call.1} parent=0
    #allocation3 [shape = 'u8[65536]{0}', space=vmem, size = 0x10000, scoped, tag = 'input window, operand 0']
    #allocation4 [shape = 's32[2]{0}', space=sflag, size = 0x8, scoped, tag = 'scoped memory for tpu_custom_call.1']
    #allocation5 [shape = 's32[2]{0}', space=sflag, size = 0x8, scoped, tag = 'scoped memory for tpu_custom_call.1']
    #allocation6 [shape = 's32[2]{0}', space=sflag, size = 0x8, scoped, tag = 'scoped memory for tpu_custom_call.1']
    #allocation7 [shape = 'u8[512]{0}', space=smem, size = 0x200, scoped, tag = 'input window, operand 1, single buffered']
    #allocation8 [shape = 'u8[65536]{0}', space=vmem, size = 0x10000, scoped, tag = 'output window, operand 0']
    %7 = vsyncpa [#allocation4], 0
    %s8 = scalar_lea.sflag [#allocation4], 1
    %9 = vsyncpa %s8, 0
    %10 = vsyncpa [#allocation6], 0
    %11 = vsyncpa [#allocation5], 0
    %s12 = scalar_lea.sflag [#allocation5], 1
    %13 = vsyncpa %s12, 0
    loop: start=0, step=1, limit=4
    $region2: #{tpu_custom_call.1} parent=1 // loop_pre_header
      _
    $region3: #{tpu_custom_call.1} parent=1 // loop_header
      %s15 = sphi 0, %s19
      %p16 = scmp.ge.s32.totalorder %s15, 4
      %s25 = sphi 0, %s27
      %s28 = sphi 0, %s25
      %s29 = sphi 0, %s28
      %s45 = sphi 0, %s29
      %s49 = sphi 0, %s49
      %s51 = sphi 0, %s49
      %s52 = sphi 0, %s51
      %s66 = sphi 0, %s52
      %s72 = sphi 0, %s74
      %s75 = sphi 0, %s72
      %s76 = sphi 0, %s75
      %s92 = sphi 0, %s76
    $region4: #{tpu_custom_call.1} parent=1 // loop_header_branch
      %18 = sbr.rel (%p16) target = $region8
    $region5: #{tpu_custom_call.1} parent=1 // loop_body
      %s20 = ssub.s32 %s15, 1
      %s21 = ssub.s32 %s15, 2
      %s22 = sadd.s32 %s15, 1
      %s23 = ssub.s32 %s15, %s22
      %p24 = scmp.eq.s32.totalorder %s23, 0
      %s26 = sadd.s32 %s25, 1
      %s27 = scalar_select %p24, %s25, %s26
      %p30 = pneg %p24
      %p31 = scmp.eq.s32.totalorder %s15, 1
      %p32 = por %p30, %p31
      %p33 = scmp.ne.s32.totalorder %s25, %s28
      %p34 = scmp.eq.s32.totalorder %s15, 0
      %p35 = por %p33, %p34
      %p36 = scmp.ne.s32.totalorder %s25, %s28
      %p37 = scmp.eq.s32.totalorder %s20, 1
      %p38 = por %p36, %p37
      %p39 = scmp.ne.s32.totalorder %s28, %s29
      %p40 = scmp.eq.s32.totalorder %s20, 0
      %p41 = por %p39, %p40
      %p42 = scmp.ne.s32.totalorder %s28, %s29
      %p43 = scmp.eq.s32.totalorder %s21, 1
      %p44 = por %p42, %p43
      %p46 = scmp.ne.s32.totalorder %s29, %s45
      %p47 = scmp.eq.s32.totalorder %s21, 0
      %p48 = por %p46, %p47
      %s50 = sadd.s32 %s49, 1
      %p53 = scmp.eq.s32.totalorder %s15, 1
      %p54 = scmp.ne.s32.totalorder %s49, %s51
      %p55 = scmp.eq.s32.totalorder %s15, 0
      %p56 = por %p54, %p55
      %p57 = scmp.ne.s32.totalorder %s49, %s51
      %p58 = scmp.eq.s32.totalorder %s20, 1
      %p59 = por %p57, %p58
      %p60 = scmp.ne.s32.totalorder %s51, %s52
      %p61 = scmp.eq.s32.totalorder %s20, 0
      %p62 = por %p60, %p61
      %p63 = scmp.ne.s32.totalorder %s51, %s52
      %p64 = scmp.eq.s32.totalorder %s21, 1
      %p65 = por %p63, %p64
      %p67 = scmp.ne.s32.totalorder %s52, %s66
      %p68 = scmp.eq.s32.totalorder %s21, 0
      %p69 = por %p67, %p68
      %s70 = ssub.s32 %s15, %s22
      %p71 = scmp.eq.s32.totalorder %s70, 0
      %s73 = sadd.s32 %s72, 1
      %s74 = scalar_select %p71, %s72, %s73
      %p77 = pneg %p71
      %p78 = scmp.eq.s32.totalorder %s15, 1
      %p79 = por %p77, %p78
      %p80 = scmp.ne.s32.totalorder %s72, %s75
      %p81 = scmp.eq.s32.totalorder %s15, 0
      %p82 = por %p80, %p81
      %p83 = scmp.ne.s32.totalorder %s72, %s75
      %p84 = scmp.eq.s32.totalorder %s20, 1
      %p85 = por %p83, %p84
      %p86 = scmp.ne.s32.totalorder %s75, %s76
      %p87 = scmp.eq.s32.totalorder %s20, 0
      %p88 = por %p86, %p87
      %p89 = scmp.ne.s32.totalorder %s75, %s76
      %p90 = scmp.eq.s32.totalorder %s21, 1
      %p91 = por %p89, %p90
      %p93 = scmp.ne.s32.totalorder %s76, %s92
      %p94 = scmp.eq.s32.totalorder %s21, 0
      %p95 = por %p93, %p94
      %p96 = scmp.le.s32.totalorder 1, %s15
      %p97 = scmp.lt.s32.totalorder %s15, 3
      %p98 = pnand %p96, %p97
      %p99 = pneg %p98
      // Predicated region
      $region9: #{tpu_custom_call.1} parent=5 // pred_check
        _
      $region10: #{tpu_custom_call.1} parent=5 // pred_check_branch
        %101 = sbr.rel (%p98) target = $region12
      $region11: #{tpu_custom_call.1} parent=5 // pred_region
        %s102 = ssub.s32 %s15, 1
        // Predicated region
        $region13: #{tpu_custom_call.1} parent=11 // pred_check
          %p103 = pneg %p62
        $region14: #{tpu_custom_call.1} parent=11 // pred_check_branch
          %105 = sbr.rel (%p103) target = $region16
        $region15: #{tpu_custom_call.1} parent=11 // pred_region
          %107 = vsyncadd [#allocation6], 0
          %s109 = sshll.u32 %s1, 4
          %s110 = int_to_ptr.hbm [resolvable:$true] %s109
          %112 = dma.hbm_to_smem %s110, 16, [#allocation7], [#allocation6]
        $region16: #{tpu_custom_call.1} parent=11 // pred_fallthru
          _
      $region12: #{tpu_custom_call.1} parent=5 // pred_fallthru
        _
      %p113 = scmp.lt.s32.totalorder %s15, 2
      // Predicated region
      $region17: #{tpu_custom_call.1} parent=5 // pred_check
        %p114 = pneg %p113
      $region18: #{tpu_custom_call.1} parent=5 // pred_check_branch
        %116 = sbr.rel (%p114) target = $region20
      $region19: #{tpu_custom_call.1} parent=5 // pred_region
        // Predicated region
        $region21: #{tpu_custom_call.1} parent=19 // pred_check
          %p117 = pneg %p35
        $region22: #{tpu_custom_call.1} parent=19 // pred_check_branch
          %119 = sbr.rel (%p117) target = $region24
        $region23: #{tpu_custom_call.1} parent=19 // pred_region
          %s120 = sand.u32 %s25, 1
          %s121 = scalar_lea.sflag [#allocation4], %s120
          %s122 = sand.u32 %s25, 1
          %s123 = smul.addr %s122, 64
          %s124 = scalar_lea.vmem [#allocation3], %s123
          %126 = vsyncadd %s121, 0
          %s127 = smul.addr %s15, 8
          %s128 = smul.addr %s127, 8
          %s129 = scalar_lea.hbm %s0, %s128
          %s130 = sshll.u32 %s129, 4
          %s131 = int_to_ptr.hbm [resolvable:$true] %s130
          %s132 = sshll.u32 %s124, 4
          %s133 = int_to_ptr.vmem [resolvable:$true] %s132
          %138 = dma.hbm_to_vmem [thread:$0]  %s131, 1024, %s133, %s121, 128, 128, 8
        $region24: #{tpu_custom_call.1} parent=19 // pred_fallthru
          _
      $region20: #{tpu_custom_call.1} parent=5 // pred_fallthru
        _
      %p139 = scmp.le.s32.totalorder 1, %s15
      %p140 = scmp.lt.s32.totalorder %s15, 3
      %p141 = pnand %p139, %p140
      %p142 = pneg %p141
      // Predicated region
      $region25: #{tpu_custom_call.1} parent=5 // pred_check
        _
      $region26: #{tpu_custom_call.1} parent=5 // pred_check_branch
        %144 = sbr.rel (%p141) target = $region28
      $region27: #{tpu_custom_call.1} parent=5 // pred_region
        %s145 = ssub.s32 %s15, 1
        %s146 = sand.u32 %s28, 1
        %s147 = scalar_lea.sflag [#allocation4], %s146
        %s148 = sand.u32 %s28, 1
        %s149 = smul.addr %s148, 64
        %s150 = scalar_lea.vmem [#allocation3], %s149
        // Predicated region
        $region29: #{tpu_custom_call.1} parent=27 // pred_check
          %p151 = pneg %p41
        $region30: #{tpu_custom_call.1} parent=27 // pred_check_branch
          %153 = sbr.rel (%p151) target = $region32
        $region31: #{tpu_custom_call.1} parent=27 // pred_region
          %155 = dma.done %s147, 1024
        $region32: #{tpu_custom_call.1} parent=27 // pred_fallthru
          _
        // Predicated region
        $region33: #{tpu_custom_call.1} parent=27 // pred_check
          %p156 = pneg %p62
        $region34: #{tpu_custom_call.1} parent=27 // pred_check_branch
          %158 = sbr.rel (%p156) target = $region36
        $region35: #{tpu_custom_call.1} parent=27 // pred_region
          %160 = dma.done [#allocation6], 16
        $region36: #{tpu_custom_call.1} parent=27 // pred_fallthru
          _
        %161 = sfence
        %s162 = sand.u32 %s28, 1
        %s163 = scalar_lea.sflag [#allocation4], %s162
        %s164 = sand.u32 %s28, 1
        %s165 = smul.addr %s164, 64
        %s166 = scalar_lea.vmem [#allocation3], %s165
        %p167 = pneg %p41
        %p168 = pneg %p38
        %p169 = pneg %p62
        %p170 = pneg %p59
        %p171 = pneg %p88
        %p172 = pneg %p85
        %s173 = sand.u32 %s75, 1
        %s174 = scalar_lea.sflag [#allocation5], %s173
        %s175 = sand.u32 %s75, 1
        %s176 = smul.addr %s175, 64
        %s177 = scalar_lea.vmem [#allocation8], %s176
        %v178 = vld [vmem:[%s150] sm:$0xff]
        %v179 = vld [vmem:[%s150 + $0x8] sm:$0xff]
        %v180 = vld [vmem:[%s150 + $0x10] sm:$0xff]
        %v181 = vld [vmem:[%s150 + $0x18] sm:$0xff]
        %v182 = vld [vmem:[%s150 + $0x20] sm:$0xff]
        %v183 = vld [vmem:[%s150 + $0x28] sm:$0xff]
        %v184 = vld [vmem:[%s150 + $0x30] sm:$0xff]
        %v185 = vld [vmem:[%s150 + $0x38] sm:$0xff]
        %vm186 = vcmask 130048
        %v187 = vsel %vm186, %v178, 0.0
        %v188 = vsel %vm186, %v180, 0.0
        %v189 = vadd.f32 %v187, %v188
        %v190 = vsel %vm186, %v182, 0.0
        %v191 = vadd.f32 %v189, %v190
        %v192 = vsel %vm186, %v184, 0.0
        %v193 = vadd.f32 %v191, %v192
        %v194 = vsel %vm186, %v179, 0.0
        %v195 = vsel %vm186, %v181, 0.0
        %v196 = vadd.f32 %v194, %v195
        %v197 = vsel %vm186, %v183, 0.0
        %v198 = vadd.f32 %v196, %v197
        %v199 = vsel %vm186, %v185, 0.0
        %v200 = vadd.f32 %v198, %v199
        %v201 = vrcp.pop 4.0
        %v202 = vmul.f32 4.0, %v201
        %v203 = vsub.f32 1.0, %v202
        %v204 = vmul.f32 %v201, %v203
        %v205 = vadd.f32 %v201, %v204
        %vm206 = vweird.f32 %v201
        %v207 = vsel %vm206, %v201, %v205
        %v208 = vmul.f32 %v193, %v207
        %v209 = vmul.f32 %v200, %v207
        %v210 = vsel %vm186, %v178, -inf
        %v211 = vsel %vm186, %v180, -inf
        %v212 = vsel %vm186, %v182, -inf
        %v213 = vmax.f32 %v210, %v212
        %v214 = vsel %vm186, %v184, -inf
        %v215 = vmax.f32 %v211, %v214
        %v216 = vmax.f32 %v213, %v215
        %v217 = vsel %vm186, %v179, -inf
        %v218 = vsel %vm186, %v181, -inf
        %v219 = vsel %vm186, %v183, -inf
        %v220 = vmax.f32 %v217, %v219
        %v221 = vsel %vm186, %v185, -inf
        %v222 = vmax.f32 %v218, %v221
        %v223 = vmax.f32 %v220, %v222
        %224 = vst [vmem:[#allocation2] sm:$0xff] 0.0
        %225 = vst [vmem:[#allocation2 + $0x8] sm:$0xff] 0.0
        %226 = vst.msk [vmem:[#allocation2 + $0x10] sm:$0xff] %vm186, 0.0
        %227 = vst [vmem:[#allocation2 + $0x18] sm:$0xff] 0.0
        %228 = vst [vmem:[#allocation2 + $0x20] sm:$0xff] 0.0
        %229 = vst.msk [vmem:[#allocation2 + $0x28] sm:$0xff] %vm186, 0.0
        %230 = vst [vmem:[#allocation2 + $0x30] sm:$0xff] 0.0
        %231 = vst [vmem:[#allocation2 + $0x38] sm:$0xff] 0.0
        %232 = vst.msk [vmem:[#allocation2 + $0x40] sm:$0xff] %vm186, 0.0
        %233 = vst [vmem:[#allocation2 + $0x48] sm:$0xff] 0.0
        %234 = vst [vmem:[#allocation2 + $0x50] sm:$0xff] 0.0
        %235 = vst.msk [vmem:[#allocation2 + $0x58] sm:$0xff] %vm186, 0.0
        %236 = vst [vmem:[#allocation2 + $0x60] sm:$0xff] 0.0
        %237 = vst [vmem:[#allocation2 + $0x68] sm:$0xff] 0.0
        %238 = vst.msk [vmem:[#allocation2 + $0x70] sm:$0xff] %vm186, 0.0
        %239 = vst [vmem:[#allocation2 + $0x78] sm:$0xff] 0.0
        %240 = vst [vmem:[#allocation2 + $0x80] sm:$0xff] 0.0
        %241 = vst.msk [vmem:[#allocation2 + $0x88] sm:$0xff] %vm186, 0.0
        %242 = vst [vmem:[#allocation2 + $0x90] sm:$0xff] 0.0
        %243 = vst [vmem:[#allocation2 + $0x98] sm:$0xff] 0.0
        %244 = vst.msk [vmem:[#allocation2 + $0xa0] sm:$0xff] %vm186, 0.0
        %245 = vst [vmem:[#allocation2 + $0xa8] sm:$0xff] 0.0
        %246 = vst [vmem:[#allocation2 + $0xb0] sm:$0xff] 0.0
        %247 = vst.msk [vmem:[#allocation2 + $0xb8] sm:$0xff] %vm186, 0.0
        %248 = vst.msk [vmem:[#allocation2 + $0x20] sm:$0xff] %vm186, %v208
        %249 = vst.msk [vmem:[#allocation2 + $0x38] sm:$0xff] %vm186, %v209
        %s250 = scalar_lea.vmem [#allocation2], 96
        %251 = vst.msk [vmem:[%s250 + $0x20] sm:$0xff] %vm186, %v216
        %252 = vst.msk [vmem:[%s250 + $0x38] sm:$0xff] %vm186, %v223
        %v253 = vld [vmem:[#allocation2] sm:$0xff]
        %v254 = vld [vmem:[#allocation2 + $0x8] sm:$0xff]
        %v255 = vld [vmem:[#allocation2 + $0x18] sm:$0xff]
        %v256 = vld [vmem:[#allocation2 + $0x20] sm:$0xff]
        %v257 = vld [vmem:[#allocation2 + $0x30] sm:$0xff]
        %v258 = vld [vmem:[#allocation2 + $0x38] sm:$0xff]
        %v259 = vld [vmem:[#allocation2 + $0x48] sm:$0xff]
        %v260 = vld [vmem:[#allocation2 + $0x50] sm:$0xff]
        %s261 = sld [smem:[#allocation7]]
        %v262 = vstv %s261
        %v263 = vmul.f32 %v262, %v253
        %v264 = vmul.f32 %v262, %v254
        %v265 = vmul.f32 %v262, %v255
        %v266 = vmul.f32 %v262, %v256
        %v267 = vmul.f32 %v262, %v257
        %v268 = vmul.f32 %v262, %v258
        %v269 = vadd.f32 %v263, 0.0
        %v270 = vadd.f32 %v264, 0.0
        %v271 = vadd.f32 %v265, 0.0
        %v272 = vadd.f32 %v266, 0.0
        %v273 = vadd.f32 %v267, 0.0
        %v274 = vadd.f32 %v268, 0.0
        %s275 = sld [smem:[#allocation7 + $0x1]]
        %v276 = vstv %s275
        %v277 = vmul.f32 %v276, %v253
        %v278 = vmul.f32 %v276, %v254
        %v279 = vmul.f32 %v276, %v255
        %v280 = vmul.f32 %v276, %v256
        %v281 = vmul.f32 %v276, %v257
        %v282 = vmul.f32 %v276, %v258
        %289 = vrot.lane.b32.xlu0 %v277, 127
        %v290 = vpop.permute.xlu0 %289
        %291 = vrot.lane.b32.xlu0 %v278, 127
        %v292 = vpop.permute.xlu0 %291
        %293 = vrot.lane.b32.xlu0 %v279, 127
        %v294 = vpop.permute.xlu0 %293
        %295 = vrot.lane.b32.xlu0 %v280, 127
        %v296 = vpop.permute.xlu0 %295
        %297 = vrot.lane.b32.xlu0 %v281, 127
        %v298 = vpop.permute.xlu0 %297
        %299 = vrot.lane.b32.xlu0 %v282, 127
        %v300 = vpop.permute.xlu0 %299
        %vm301 = vcmask 1039360
        %v302 = vsel %vm301, %v290, %v292
        %v303 = vsel %vm301, %v294, %v296
        %v304 = vsel %vm301, %v298, %v300
        %v311 = vadd.f32 %v269, %v302
        %v312 = vadd.f32 %v270, %v292
        %v313 = vadd.f32 %v271, %v303
        %v314 = vadd.f32 %v272, %v296
        %v315 = vadd.f32 %v273, %v304
        %v316 = vadd.f32 %v274, %v300
        %s317 = sld [smem:[#allocation7 + $0x2]]
        %v318 = vstv %s317
        %v319 = vmul.f32 %v318, %v253
        %v320 = vmul.f32 %v318, %v254
        %v321 = vmul.f32 %v318, %v255
        %v322 = vmul.f32 %v318, %v256
        %v323 = vmul.f32 %v318, %v257
        %v324 = vmul.f32 %v318, %v258
        %331 = vrot.lane.b32.xlu0 %v319, 126
        %v332 = vpop.permute.xlu0 %331
        %333 = vrot.lane.b32.xlu0 %v320, 126
        %v334 = vpop.permute.xlu0 %333
        %335 = vrot.lane.b32.xlu0 %v321, 126
        %v336 = vpop.permute.xlu0 %335
        %337 = vrot.lane.b32.xlu0 %v322, 126
        %v338 = vpop.permute.xlu0 %337
        %339 = vrot.lane.b32.xlu0 %v323, 126
        %v340 = vpop.permute.xlu0 %339
        %341 = vrot.lane.b32.xlu0 %v324, 126
        %v342 = vpop.permute.xlu0 %341
        %vm343 = vcmask 1031168
        %v344 = vsel %vm343, %v332, %v334
        %v345 = vsel %vm343, %v336, %v338
        %v346 = vsel %vm343, %v340, %v342
        %v353 = vadd.f32 %v311, %v344
        %v354 = vadd.f32 %v312, %v334
        %v355 = vadd.f32 %v313, %v345
        %v356 = vadd.f32 %v314, %v338
        %v357 = vadd.f32 %v315, %v346
        %v358 = vadd.f32 %v316, %v342
        %s359 = sld [smem:[#allocation7 + $0x3]]
        %v360 = vstv %s359
        %v361 = vmul.f32 %v360, %v254
        %v362 = vmul.f32 %v360, %v256
        %v363 = vmul.f32 %v360, %v258
        %367 = vrot.lane.b32.xlu0 %v361, 125
        %v368 = vpop.permute.xlu0 %367
        %369 = vrot.lane.b32.xlu0 %v362, 125
        %v370 = vpop.permute.xlu0 %369
        %371 = vrot.lane.b32.xlu0 %v363, 125
        %v372 = vpop.permute.xlu0 %371
        %v376 = vadd.f32 %v353, %v368
        %v377 = vadd.f32 %v354, %v368
        %v378 = vadd.f32 %v355, %v370
        %v379 = vadd.f32 %v356, %v370
        %v380 = vadd.f32 %v357, %v372
        %v381 = vadd.f32 %v358, %v372
        %s382 = sld [smem:[#allocation7 + $0x4]]
        %v383 = vstv %s382
        %v384 = vmul.f32 %v383, %v254
        %v385 = vmul.f32 %v383, %v256
        %v386 = vmul.f32 %v383, %v258
        %390 = vrot.lane.b32.xlu0 %v384, 124
        %v391 = vpop.permute.xlu0 %390
        %392 = vrot.lane.b32.xlu0 %v385, 124
        %v393 = vpop.permute.xlu0 %392
        %394 = vrot.lane.b32.xlu0 %v386, 124
        %v395 = vpop.permute.xlu0 %394
        %v399 = vadd.f32 %v376, %v391
        %v400 = vadd.f32 %v377, %v391
        %v401 = vadd.f32 %v378, %v393
        %v402 = vadd.f32 %v379, %v393
        %v403 = vadd.f32 %v380, %v395
        %v404 = vadd.f32 %v381, %v395
        %s405 = sld [smem:[#allocation7 + $0x5]]
        %v406 = vstv %s405
        %v407 = vmul.f32 %v406, %v254
        %v408 = vmul.f32 %v406, %v256
        %v409 = vmul.f32 %v406, %v258
        %413 = vrot.lane.b32.xlu0 %v407, 123
        %v414 = vpop.permute.xlu0 %413
        %415 = vrot.lane.b32.xlu0 %v408, 123
        %v416 = vpop.permute.xlu0 %415
        %417 = vrot.lane.b32.xlu0 %v409, 123
        %v418 = vpop.permute.xlu0 %417
        %v422 = vadd.f32 %v399, %v414
        %v423 = vadd.f32 %v400, %v414
        %v424 = vadd.f32 %v401, %v416
        %v425 = vadd.f32 %v402, %v416
        %v426 = vadd.f32 %v403, %v418
        %v427 = vadd.f32 %v404, %v418
        %s428 = sld [smem:[#allocation7 + $0x6]]
        %v429 = vstv %s428
        %v430 = vmul.f32 %v429, %v254
        %v431 = vmul.f32 %v429, %v256
        %v432 = vmul.f32 %v429, %v258
        %436 = vrot.lane.b32.xlu0 %v430, 122
        %v437 = vpop.permute.xlu0 %436
        %438 = vrot.lane.b32.xlu0 %v431, 122
        %v439 = vpop.permute.xlu0 %438
        %440 = vrot.lane.b32.xlu0 %v432, 122
        %v441 = vpop.permute.xlu0 %440
        %v445 = vadd.f32 %v422, %v437
        %v446 = vadd.f32 %v423, %v437
        %v447 = vadd.f32 %v424, %v439
        %v448 = vadd.f32 %v425, %v439
        %v449 = vadd.f32 %v426, %v441
        %v450 = vadd.f32 %v427, %v441
        %s451 = sld [smem:[#allocation7 + $0x7]]
        %v452 = vstv %s451
        %v453 = vmul.f32 %v452, %v253
        %v454 = vmul.f32 %v452, %v254
        %v455 = vmul.f32 %v452, %v255
        %v456 = vmul.f32 %v452, %v256
        %v457 = vmul.f32 %v452, %v257
        %v458 = vmul.f32 %v452, %v258
        %vm465 = vcmask 1046528
        %v466 = vrot.slane %v453, 1
        %v467 = vrot.slane %v455, 1
        %v468 = vsel %vm465, %v466, %v467
        %v469 = vrot.slane %v454, 1
        %v470 = vrot.slane %v456, 1
        %v471 = vsel %vm465, %v469, %v470
        %v472 = vrot.slane %v457, 1
        %v473 = vsel %vm465, %v467, %v472
        %v474 = vrot.slane %v458, 1
        %v475 = vsel %vm465, %v470, %v474
        %v482 = vadd.f32 %v445, %v468
        %v483 = vadd.f32 %v446, %v471
        %v484 = vadd.f32 %v447, %v473
        %v485 = vadd.f32 %v448, %v475
        %v486 = vadd.f32 %v449, %v472
        %v487 = vadd.f32 %v450, %v474
        %s488 = sld [smem:[#allocation7 + $0x8]]
        %v489 = vstv %s488
        %v490 = vmul.f32 %v489, %v253
        %v491 = vmul.f32 %v489, %v254
        %v492 = vmul.f32 %v489, %v255
        %v493 = vmul.f32 %v489, %v256
        %v494 = vmul.f32 %v489, %v257
        %v495 = vmul.f32 %v489, %v258
        %v502 = vrot.slane %v490, 1
        %v503 = vrot.slane %v492, 1
        %v504 = vsel %vm465, %v502, %v503
        %v505 = vrot.slane %v491, 1
        %v506 = vrot.slane %v493, 1
        %v507 = vsel %vm465, %v505, %v506
        %v508 = vrot.slane %v494, 1
        %v509 = vsel %vm465, %v503, %v508
        %v510 = vrot.slane %v495, 1
        %v511 = vsel %vm465, %v506, %v510
        %512 = vrot.lane.b32.xlu0 %v504, 127
        %v513 = vpop.permute.xlu0 %512
        %514 = vrot.lane.b32.xlu0 %v507, 127
        %v515 = vpop.permute.xlu0 %514
        %516 = vrot.lane.b32.xlu0 %v509, 127
        %v517 = vpop.permute.xlu0 %516
        %518 = vrot.lane.b32.xlu0 %v511, 127
        %v519 = vpop.permute.xlu0 %518
        %520 = vrot.lane.b32.xlu0 %v508, 127
        %v521 = vpop.permute.xlu0 %520
        %522 = vrot.lane.b32.xlu0 %v510, 127
        %v523 = vpop.permute.xlu0 %522
        %v524 = vsel %vm301, %v513, %v515
        %v525 = vsel %vm301, %v517, %v519
        %v526 = vsel %vm301, %v521, %v523
        %v533 = vadd.f32 %v482, %v524
        %v534 = vadd.f32 %v483, %v515
        %v535 = vadd.f32 %v484, %v525
        %v536 = vadd.f32 %v485, %v519
        %v537 = vadd.f32 %v486, %v526
        %v538 = vadd.f32 %v487, %v523
        %s539 = sld [smem:[#allocation7 + $0x9]]
        %v540 = vstv %s539
        %v541 = vmul.f32 %v540, %v253
        %v542 = vmul.f32 %v540, %v254
        %v543 = vmul.f32 %v540, %v255
        %v544 = vmul.f32 %v540, %v256
        %v545 = vmul.f32 %v540, %v257
        %v546 = vmul.f32 %v540, %v258
        %v553 = vrot.slane %v541, 1
        %v554 = vrot.slane %v543, 1
        %v555 = vsel %vm465, %v553, %v554
        %v556 = vrot.slane %v542, 1
        %v557 = vrot.slane %v544, 1
        %v558 = vsel %vm465, %v556, %v557
        %v559 = vrot.slane %v545, 1
        %v560 = vsel %vm465, %v554, %v559
        %v561 = vrot.slane %v546, 1
        %v562 = vsel %vm465, %v557, %v561
        %563 = vrot.lane.b32.xlu0 %v555, 126
        %v564 = vpop.permute.xlu0 %563
        %565 = vrot.lane.b32.xlu0 %v558, 126
        %v566 = vpop.permute.xlu0 %565
        %567 = vrot.lane.b32.xlu0 %v560, 126
        %v568 = vpop.permute.xlu0 %567
        %569 = vrot.lane.b32.xlu0 %v562, 126
        %v570 = vpop.permute.xlu0 %569
        %571 = vrot.lane.b32.xlu0 %v559, 126
        %v572 = vpop.permute.xlu0 %571
        %573 = vrot.lane.b32.xlu0 %v561, 126
        %v574 = vpop.permute.xlu0 %573
        %v575 = vsel %vm343, %v564, %v566
        %v576 = vsel %vm343, %v568, %v570
        %v577 = vsel %vm343, %v572, %v574
        %v584 = vadd.f32 %v533, %v575
        %v585 = vadd.f32 %v534, %v566
        %v586 = vadd.f32 %v535, %v576
        %v587 = vadd.f32 %v536, %v570
        %v588 = vadd.f32 %v537, %v577
        %v589 = vadd.f32 %v538, %v574
        %s590 = sld [smem:[#allocation7 + $0xa]]
        %v591 = vstv %s590
        %v592 = vmul.f32 %v591, %v254
        %v593 = vmul.f32 %v591, %v256
        %v594 = vmul.f32 %v591, %v258
        %v598 = vrot.slane %v592, 1
        %v599 = vrot.slane %v593, 1
        %v600 = vsel %vm465, %v598, %v599
        %v601 = vrot.slane %v594, 1
        %v602 = vsel %vm465, %v599, %v601
        %603 = vrot.lane.b32.xlu0 %v600, 125
        %v604 = vpop.permute.xlu0 %603
        %605 = vrot.lane.b32.xlu0 %v602, 125
        %v606 = vpop.permute.xlu0 %605
        %607 = vrot.lane.b32.xlu0 %v601, 125
        %v608 = vpop.permute.xlu0 %607
        %v612 = vadd.f32 %v584, %v604
        %v613 = vadd.f32 %v585, %v604
        %v614 = vadd.f32 %v586, %v606
        %v615 = vadd.f32 %v587, %v606
        %v616 = vadd.f32 %v588, %v608
        %v617 = vadd.f32 %v589, %v608
        %s618 = sld [smem:[#allocation7 + $0xb]]
        %v619 = vstv %s618
        %v620 = vmul.f32 %v619, %v254
        %v621 = vmul.f32 %v619, %v256
        %v622 = vmul.f32 %v619, %v258
        %v626 = vrot.slane %v620, 1
        %v627 = vrot.slane %v621, 1
        %v628 = vsel %vm465, %v626, %v627
        %v629 = vrot.slane %v622, 1
        %v630 = vsel %vm465, %v627, %v629
        %631 = vrot.lane.b32.xlu0 %v628, 124
        %v632 = vpop.permute.xlu0 %631
        %633 = vrot.lane.b32.xlu0 %v630, 124
        %v634 = vpop.permute.xlu0 %633
        %635 = vrot.lane.b32.xlu0 %v629, 124
        %v636 = vpop.permute.xlu0 %635
        %v640 = vadd.f32 %v612, %v632
        %v641 = vadd.f32 %v613, %v632
        %v642 = vadd.f32 %v614, %v634
        %v643 = vadd.f32 %v615, %v634
        %v644 = vadd.f32 %v616, %v636
        %v645 = vadd.f32 %v617, %v636
        %s646 = sld [smem:[#allocation7 + $0xc]]
        %v647 = vstv %s646
        %v648 = vmul.f32 %v647, %v254
        %v649 = vmul.f32 %v647, %v256
        %v650 = vmul.f32 %v647, %v258
        %v654 = vrot.slane %v648, 1
        %v655 = vrot.slane %v649, 1
        %v656 = vsel %vm465, %v654, %v655
        %v657 = vrot.slane %v650, 1
        %v658 = vsel %vm465, %v655, %v657
        %659 = vrot.lane.b32.xlu0 %v656, 123
        %v660 = vpop.permute.xlu0 %659
        %661 = vrot.lane.b32.xlu0 %v658, 123
        %v662 = vpop.permute.xlu0 %661
        %663 = vrot.lane.b32.xlu0 %v657, 123
        %v664 = vpop.permute.xlu0 %663
        %v668 = vadd.f32 %v640, %v660
        %v669 = vadd.f32 %v641, %v660
        %v670 = vadd.f32 %v642, %v662
        %v671 = vadd.f32 %v643, %v662
        %v672 = vadd.f32 %v644, %v664
        %v673 = vadd.f32 %v645, %v664
        %s674 = sld [smem:[#allocation7 + $0xd]]
        %v675 = vstv %s674
        %v676 = vmul.f32 %v675, %v254
        %v677 = vmul.f32 %v675, %v256
        %v678 = vmul.f32 %v675, %v258
        %v682 = vrot.slane %v676, 1
        %v683 = vrot.slane %v677, 1
        %v684 = vsel %vm465, %v682, %v683
        %v685 = vrot.slane %v678, 1
        %v686 = vsel %vm465, %v683, %v685
        %687 = vrot.lane.b32.xlu0 %v684, 122
        %v688 = vpop.permute.xlu0 %687
        %689 = vrot.lane.b32.xlu0 %v686, 122
        %v690 = vpop.permute.xlu0 %689
        %691 = vrot.lane.b32.xlu0 %v685, 122
        %v692 = vpop.permute.xlu0 %691
        %v696 = vadd.f32 %v668, %v688
        %v697 = vadd.f32 %v669, %v688
        %v698 = vadd.f32 %v670, %v690
        %v699 = vadd.f32 %v671, %v690
        %v700 = vadd.f32 %v672, %v692
        %v701 = vadd.f32 %v673, %v692
        %s702 = sld [smem:[#allocation7 + $0xe]]
        %v703 = vstv %s702
        %v704 = vmul.f32 %v703, %v253
        %v705 = vmul.f32 %v703, %v254
        %v706 = vmul.f32 %v703, %v255
        %v707 = vmul.f32 %v703, %v256
        %v708 = vmul.f32 %v703, %v257
        %v709 = vmul.f32 %v703, %v258
        %vm716 = vcmask 1045504
        %v717 = vrot.slane %v704, 2
        %v718 = vrot.slane %v706, 2
        %v719 = vsel %vm716, %v717, %v718
        %v720 = vrot.slane %v705, 2
        %v721 = vrot.slane %v707, 2
        %v722 = vsel %vm716, %v720, %v721
        %v723 = vrot.slane %v708, 2
        %v724 = vsel %vm716, %v718, %v723
        %v725 = vrot.slane %v709, 2
        %v726 = vsel %vm716, %v721, %v725
        %v733 = vadd.f32 %v696, %v719
        %v734 = vadd.f32 %v697, %v722
        %v735 = vadd.f32 %v698, %v724
        %v736 = vadd.f32 %v699, %v726
        %v737 = vadd.f32 %v700, %v723
        %v738 = vadd.f32 %v701, %v725
        %s739 = sld [smem:[#allocation7 + $0xf]]
        %v740 = vstv %s739
        %v741 = vmul.f32 %v740, %v253
        %v742 = vmul.f32 %v740, %v254
        %v743 = vmul.f32 %v740, %v255
        %v744 = vmul.f32 %v740, %v256
        %v745 = vmul.f32 %v740, %v257
        %v746 = vmul.f32 %v740, %v258
        %v753 = vrot.slane %v741, 2
        %v754 = vrot.slane %v743, 2
        %v755 = vsel %vm716, %v753, %v754
        %v756 = vrot.slane %v742, 2
        %v757 = vrot.slane %v744, 2
        %v758 = vsel %vm716, %v756, %v757
        %v759 = vrot.slane %v745, 2
        %v760 = vsel %vm716, %v754, %v759
        %v761 = vrot.slane %v746, 2
        %v762 = vsel %vm716, %v757, %v761
        %763 = vrot.lane.b32.xlu0 %v755, 127
        %v764 = vpop.permute.xlu0 %763
        %765 = vrot.lane.b32.xlu0 %v758, 127
        %v766 = vpop.permute.xlu0 %765
        %767 = vrot.lane.b32.xlu0 %v760, 127
        %v768 = vpop.permute.xlu0 %767
        %769 = vrot.lane.b32.xlu0 %v762, 127
        %v770 = vpop.permute.xlu0 %769
        %771 = vrot.lane.b32.xlu0 %v759, 127
        %v772 = vpop.permute.xlu0 %771
        %773 = vrot.lane.b32.xlu0 %v761, 127
        %v774 = vpop.permute.xlu0 %773
        %v775 = vsel %vm301, %v764, %v766
        %v776 = vsel %vm301, %v768, %v770
        %v777 = vsel %vm301, %v772, %v774
        %v784 = vadd.f32 %v733, %v775
        %v785 = vadd.f32 %v734, %v766
        %v786 = vadd.f32 %v735, %v776
        %v787 = vadd.f32 %v736, %v770
        %v788 = vadd.f32 %v737, %v777
        %v789 = vadd.f32 %v738, %v774
        %s790 = sld [smem:[#allocation7 + $0x10]]
        %v791 = vstv %s790
        %v792 = vmul.f32 %v791, %v253
        %v793 = vmul.f32 %v791, %v254
        %v794 = vmul.f32 %v791, %v255
        %v795 = vmul.f32 %v791, %v256
        %v796 = vmul.f32 %v791, %v257
        %v797 = vmul.f32 %v791, %v258
        %v804 = vrot.slane %v792, 2
        %v805 = vrot.slane %v794, 2
        %v806 = vsel %vm716, %v804, %v805
        %v807 = vrot.slane %v793, 2
        %v808 = vrot.slane %v795, 2
        %v809 = vsel %vm716, %v807, %v808
        %v810 = vrot.slane %v796, 2
        %v811 = vsel %vm716, %v805, %v810
        %v812 = vrot.slane %v797, 2
        %v813 = vsel %vm716, %v808, %v812
        %814 = vrot.lane.b32.xlu0 %v806, 126
        %v815 = vpop.permute.xlu0 %814
        %816 = vrot.lane.b32.xlu0 %v809, 126
        %v817 = vpop.permute.xlu0 %816
        %818 = vrot.lane.b32.xlu0 %v811, 126
        %v819 = vpop.permute.xlu0 %818
        %820 = vrot.lane.b32.xlu0 %v813, 126
        %v821 = vpop.permute.xlu0 %820
        %822 = vrot.lane.b32.xlu0 %v810, 126
        %v823 = vpop.permute.xlu0 %822
        %824 = vrot.lane.b32.xlu0 %v812, 126
        %v825 = vpop.permute.xlu0 %824
        %v826 = vsel %vm343, %v815, %v817
        %v827 = vsel %vm343, %v819, %v821
        %v828 = vsel %vm343, %v823, %v825
        %v835 = vadd.f32 %v784, %v826
        %v836 = vadd.f32 %v785, %v817
        %v837 = vadd.f32 %v786, %v827
        %v838 = vadd.f32 %v787, %v821
        %v839 = vadd.f32 %v788, %v828
        %v840 = vadd.f32 %v789, %v825
        %s841 = sld [smem:[#allocation7 + $0x11]]
        %v842 = vstv %s841
        %v843 = vmul.f32 %v842, %v254
        %v844 = vmul.f32 %v842, %v256
        %v845 = vmul.f32 %v842, %v258
        %v849 = vrot.slane %v843, 2
        %v850 = vrot.slane %v844, 2
        %v851 = vsel %vm716, %v849, %v850
        %v852 = vrot.slane %v845, 2
        %v853 = vsel %vm716, %v850, %v852
        %854 = vrot.lane.b32.xlu0 %v851, 125
        %v855 = vpop.permute.xlu0 %854
        %856 = vrot.lane.b32.xlu0 %v853, 125
        %v857 = vpop.permute.xlu0 %856
        %858 = vrot.lane.b32.xlu0 %v852, 125
        %v859 = vpop.permute.xlu0 %858
        %v863 = vadd.f32 %v835, %v855
        %v864 = vadd.f32 %v836, %v855
        %v865 = vadd.f32 %v837, %v857
        %v866 = vadd.f32 %v838, %v857
        %v867 = vadd.f32 %v839, %v859
        %v868 = vadd.f32 %v840, %v859
        %s869 = sld [smem:[#allocation7 + $0x12]]
        %v870 = vstv %s869
        %v871 = vmul.f32 %v870, %v254
        %v872 = vmul.f32 %v870, %v256
        %v873 = vmul.f32 %v870, %v258
        %v877 = vrot.slane %v871, 2
        %v878 = vrot.slane %v872, 2
        %v879 = vsel %vm716, %v877, %v878
        %v880 = vrot.slane %v873, 2
        %v881 = vsel %vm716, %v878, %v880
        %882 = vrot.lane.b32.xlu0 %v879, 124
        %v883 = vpop.permute.xlu0 %882
        %884 = vrot.lane.b32.xlu0 %v881, 124
        %v885 = vpop.permute.xlu0 %884
        %886 = vrot.lane.b32.xlu0 %v880, 124
        %v887 = vpop.permute.xlu0 %886
        %v891 = vadd.f32 %v863, %v883
        %v892 = vadd.f32 %v864, %v883
        %v893 = vadd.f32 %v865, %v885
        %v894 = vadd.f32 %v866, %v885
        %v895 = vadd.f32 %v867, %v887
        %v896 = vadd.f32 %v868, %v887
        %s897 = sld [smem:[#allocation7 + $0x13]]
        %v898 = vstv %s897
        %v899 = vmul.f32 %v898, %v254
        %v900 = vmul.f32 %v898, %v256
        %v901 = vmul.f32 %v898, %v258
        %v905 = vrot.slane %v899, 2
        %v906 = vrot.slane %v900, 2
        %v907 = vsel %vm716, %v905, %v906
        %v908 = vrot.slane %v901, 2
        %v909 = vsel %vm716, %v906, %v908
        %910 = vrot.lane.b32.xlu0 %v907, 123
        %v911 = vpop.permute.xlu0 %910
        %912 = vrot.lane.b32.xlu0 %v909, 123
        %v913 = vpop.permute.xlu0 %912
        %914 = vrot.lane.b32.xlu0 %v908, 123
        %v915 = vpop.permute.xlu0 %914
        %v919 = vadd.f32 %v891, %v911
        %v920 = vadd.f32 %v892, %v911
        %v921 = vadd.f32 %v893, %v913
        %v922 = vadd.f32 %v894, %v913
        %v923 = vadd.f32 %v895, %v915
        %v924 = vadd.f32 %v896, %v915
        %s925 = sld [smem:[#allocation7 + $0x14]]
        %v926 = vstv %s925
        %v927 = vmul.f32 %v926, %v254
        %v928 = vmul.f32 %v926, %v256
        %v929 = vmul.f32 %v926, %v258
        %v933 = vrot.slane %v927, 2
        %v934 = vrot.slane %v928, 2
        %v935 = vsel %vm716, %v933, %v934
        %v936 = vrot.slane %v929, 2
        %v937 = vsel %vm716, %v934, %v936
        %938 = vrot.lane.b32.xlu0 %v935, 122
        %v939 = vpop.permute.xlu0 %938
        %940 = vrot.lane.b32.xlu0 %v937, 122
        %v941 = vpop.permute.xlu0 %940
        %942 = vrot.lane.b32.xlu0 %v936, 122
        %v943 = vpop.permute.xlu0 %942
        %v947 = vadd.f32 %v919, %v939
        %v948 = vadd.f32 %v920, %v939
        %v949 = vadd.f32 %v921, %v941
        %v950 = vadd.f32 %v922, %v941
        %v951 = vadd.f32 %v923, %v943
        %v952 = vadd.f32 %v924, %v943
        %s953 = sld [smem:[#allocation7 + $0x15]]
        %v954 = vstv %s953
        %v955 = vmul.f32 %v954, %v255
        %v956 = vmul.f32 %v954, %v256
        %v957 = vmul.f32 %v954, %v257
        %v958 = vmul.f32 %v954, %v258
        %vm963 = vcmask 1044480
        %v964 = vrot.slane %v955, 3
        %v965 = vrot.slane %v956, 3
        %v966 = vrot.slane %v957, 3
        %v967 = vsel %vm963, %v964, %v966
        %v968 = vrot.slane %v958, 3
        %v969 = vsel %vm963, %v965, %v968
        %v976 = vadd.f32 %v947, %v964
        %v977 = vadd.f32 %v948, %v965
        %v978 = vadd.f32 %v949, %v967
        %v979 = vadd.f32 %v950, %v969
        %v980 = vadd.f32 %v951, %v966
        %v981 = vadd.f32 %v952, %v968
        %s982 = sld [smem:[#allocation7 + $0x16]]
        %v983 = vstv %s982
        %v984 = vmul.f32 %v983, %v255
        %v985 = vmul.f32 %v983, %v256
        %v986 = vmul.f32 %v983, %v257
        %v987 = vmul.f32 %v983, %v258
        %v992 = vrot.slane %v984, 3
        %v993 = vrot.slane %v985, 3
        %v994 = vrot.slane %v986, 3
        %v995 = vsel %vm963, %v992, %v994
        %v996 = vrot.slane %v987, 3
        %v997 = vsel %vm963, %v993, %v996
        %998 = vrot.lane.b32.xlu0 %v992, 127
        %v999 = vpop.permute.xlu0 %998
        %1000 = vrot.lane.b32.xlu0 %v993, 127
        %v1001 = vpop.permute.xlu0 %1000
        %1002 = vrot.lane.b32.xlu0 %v995, 127
        %v1003 = vpop.permute.xlu0 %1002
        %1004 = vrot.lane.b32.xlu0 %v997, 127
        %v1005 = vpop.permute.xlu0 %1004
        %1006 = vrot.lane.b32.xlu0 %v994, 127
        %v1007 = vpop.permute.xlu0 %1006
        %1008 = vrot.lane.b32.xlu0 %v996, 127
        %v1009 = vpop.permute.xlu0 %1008
        %v1010 = vsel %vm301, %v999, %v1001
        %v1011 = vsel %vm301, %v1003, %v1005
        %v1012 = vsel %vm301, %v1007, %v1009
        %v1019 = vadd.f32 %v976, %v1010
        %v1020 = vadd.f32 %v977, %v1001
        %v1021 = vadd.f32 %v978, %v1011
        %v1022 = vadd.f32 %v979, %v1005
        %v1023 = vadd.f32 %v980, %v1012
        %v1024 = vadd.f32 %v981, %v1009
        %s1025 = sld [smem:[#allocation7 + $0x17]]
        %v1026 = vstv %s1025
        %v1027 = vmul.f32 %v1026, %v255
        %v1028 = vmul.f32 %v1026, %v256
        %v1029 = vmul.f32 %v1026, %v257
        %v1030 = vmul.f32 %v1026, %v258
        %v1035 = vrot.slane %v1027, 3
        %v1036 = vrot.slane %v1028, 3
        %v1037 = vrot.slane %v1029, 3
        %v1038 = vsel %vm963, %v1035, %v1037
        %v1039 = vrot.slane %v1030, 3
        %v1040 = vsel %vm963, %v1036, %v1039
        %1041 = vrot.lane.b32.xlu0 %v1035, 126
        %v1042 = vpop.permute.xlu0 %1041
        %1043 = vrot.lane.b32.xlu0 %v1036, 126
        %v1044 = vpop.permute.xlu0 %1043
        %1045 = vrot.lane.b32.xlu0 %v1038, 126
        %v1046 = vpop.permute.xlu0 %1045
        %1047 = vrot.lane.b32.xlu0 %v1040, 126
        %v1048 = vpop.permute.xlu0 %1047
        %1049 = vrot.lane.b32.xlu0 %v1037, 126
        %v1050 = vpop.permute.xlu0 %1049
        %1051 = vrot.lane.b32.xlu0 %v1039, 126
        %v1052 = vpop.permute.xlu0 %1051
        %v1053 = vsel %vm343, %v1042, %v1044
        %v1054 = vsel %vm343, %v1046, %v1048
        %v1055 = vsel %vm343, %v1050, %v1052
        %v1062 = vadd.f32 %v1019, %v1053
        %v1063 = vadd.f32 %v1020, %v1044
        %v1064 = vadd.f32 %v1021, %v1054
        %v1065 = vadd.f32 %v1022, %v1048
        %v1066 = vadd.f32 %v1023, %v1055
        %v1067 = vadd.f32 %v1024, %v1052
        %s1068 = sld [smem:[#allocation7 + $0x18]]
        %v1069 = vstv %s1068
        %v1070 = vmul.f32 %v1069, %v256
        %v1071 = vmul.f32 %v1069, %v258
        %v1074 = vrot.slane %v1070, 3
        %v1075 = vrot.slane %v1071, 3
        %v1076 = vsel %vm963, %v1074, %v1075
        %1077 = vrot.lane.b32.xlu0 %v1074, 125
        %v1078 = vpop.permute.xlu0 %1077
        %1079 = vrot.lane.b32.xlu0 %v1076, 125
        %v1080 = vpop.permute.xlu0 %1079
        %1081 = vrot.lane.b32.xlu0 %v1075, 125
        %v1082 = vpop.permute.xlu0 %1081
        %v1086 = vadd.f32 %v1062, %v1078
        %v1087 = vadd.f32 %v1063, %v1078
        %v1088 = vadd.f32 %v1064, %v1080
        %v1089 = vadd.f32 %v1065, %v1080
        %v1090 = vadd.f32 %v1066, %v1082
        %v1091 = vadd.f32 %v1067, %v1082
        %s1092 = sld [smem:[#allocation7 + $0x19]]
        %v1093 = vstv %s1092
        %v1094 = vmul.f32 %v1093, %v256
        %v1095 = vmul.f32 %v1093, %v258
        %v1098 = vrot.slane %v1094, 3
        %v1099 = vrot.slane %v1095, 3
        %v1100 = vsel %vm963, %v1098, %v1099
        %1101 = vrot.lane.b32.xlu0 %v1098, 124
        %v1102 = vpop.permute.xlu0 %1101
        %1103 = vrot.lane.b32.xlu0 %v1100, 124
        %v1104 = vpop.permute.xlu0 %1103
        %1105 = vrot.lane.b32.xlu0 %v1099, 124
        %v1106 = vpop.permute.xlu0 %1105
        %v1110 = vadd.f32 %v1086, %v1102
        %v1111 = vadd.f32 %v1087, %v1102
        %v1112 = vadd.f32 %v1088, %v1104
        %v1113 = vadd.f32 %v1089, %v1104
        %v1114 = vadd.f32 %v1090, %v1106
        %v1115 = vadd.f32 %v1091, %v1106
        %s1116 = sld [smem:[#allocation7 + $0x1a]]
        %v1117 = vstv %s1116
        %v1118 = vmul.f32 %v1117, %v256
        %v1119 = vmul.f32 %v1117, %v258
        %v1122 = vrot.slane %v1118, 3
        %v1123 = vrot.slane %v1119, 3
        %v1124 = vsel %vm963, %v1122, %v1123
        %1125 = vrot.lane.b32.xlu0 %v1122, 123
        %v1126 = vpop.permute.xlu0 %1125
        %1127 = vrot.lane.b32.xlu0 %v1124, 123
        %v1128 = vpop.permute.xlu0 %1127
        %1129 = vrot.lane.b32.xlu0 %v1123, 123
        %v1130 = vpop.permute.xlu0 %1129
        %v1134 = vadd.f32 %v1110, %v1126
        %v1135 = vadd.f32 %v1111, %v1126
        %v1136 = vadd.f32 %v1112, %v1128
        %v1137 = vadd.f32 %v1113, %v1128
        %v1138 = vadd.f32 %v1114, %v1130
        %v1139 = vadd.f32 %v1115, %v1130
        %s1140 = sld [smem:[#allocation7 + $0x1b]]
        %v1141 = vstv %s1140
        %v1142 = vmul.f32 %v1141, %v256
        %v1143 = vmul.f32 %v1141, %v258
        %v1146 = vrot.slane %v1142, 3
        %v1147 = vrot.slane %v1143, 3
        %v1148 = vsel %vm963, %v1146, %v1147
        %1149 = vrot.lane.b32.xlu0 %v1146, 122
        %v1150 = vpop.permute.xlu0 %1149
        %1151 = vrot.lane.b32.xlu0 %v1148, 122
        %v1152 = vpop.permute.xlu0 %1151
        %1153 = vrot.lane.b32.xlu0 %v1147, 122
        %v1154 = vpop.permute.xlu0 %1153
        %v1158 = vadd.f32 %v1134, %v1150
        %v1159 = vadd.f32 %v1135, %v1150
        %v1160 = vadd.f32 %v1136, %v1152
        %v1161 = vadd.f32 %v1137, %v1152
        %v1162 = vadd.f32 %v1138, %v1154
        %v1163 = vadd.f32 %v1139, %v1154
        %s1164 = sld [smem:[#allocation7 + $0x1c]]
        %v1165 = vstv %s1164
        %v1166 = vmul.f32 %v1165, %v255
        %v1167 = vmul.f32 %v1165, %v256
        %v1168 = vmul.f32 %v1165, %v257
        %v1169 = vmul.f32 %v1165, %v258
        %v1170 = vmul.f32 %v1165, %v259
        %v1171 = vmul.f32 %v1165, %v260
        %vm1178 = vcmask 1043456
        %v1179 = vrot.slane %v1166, 4
        %v1180 = vrot.slane %v1167, 4
        %v1181 = vrot.slane %v1168, 4
        %v1182 = vsel %vm1178, %v1179, %v1181
        %v1183 = vrot.slane %v1169, 4
        %v1184 = vsel %vm1178, %v1180, %v1183
        %v1185 = vrot.slane %v1170, 4
        %v1186 = vsel %vm1178, %v1181, %v1185
        %v1187 = vrot.slane %v1171, 4
        %v1188 = vsel %vm1178, %v1183, %v1187
        %v1195 = vadd.f32 %v1158, %v1179
        %v1196 = vadd.f32 %v1159, %v1180
        %v1197 = vadd.f32 %v1160, %v1182
        %v1198 = vadd.f32 %v1161, %v1184
        %v1199 = vadd.f32 %v1162, %v1186
        %v1200 = vadd.f32 %v1163, %v1188
        %s1201 = sld [smem:[#allocation7 + $0x1d]]
        %v1202 = vstv %s1201
        %v1203 = vmul.f32 %v1202, %v255
        %v1204 = vmul.f32 %v1202, %v256
        %v1205 = vmul.f32 %v1202, %v257
        %v1206 = vmul.f32 %v1202, %v258
        %v1207 = vmul.f32 %v1202, %v259
        %v1208 = vmul.f32 %v1202, %v260
        %v1215 = vrot.slane %v1203, 4
        %v1216 = vrot.slane %v1204, 4
        %v1217 = vrot.slane %v1205, 4
        %v1218 = vsel %vm1178, %v1215, %v1217
        %v1219 = vrot.slane %v1206, 4
        %v1220 = vsel %vm1178, %v1216, %v1219
        %v1221 = vrot.slane %v1207, 4
        %v1222 = vsel %vm1178, %v1217, %v1221
        %v1223 = vrot.slane %v1208, 4
        %v1224 = vsel %vm1178, %v1219, %v1223
        %1225 = vrot.lane.b32.xlu0 %v1215, 127
        %v1226 = vpop.permute.xlu0 %1225
        %1227 = vrot.lane.b32.xlu0 %v1216, 127
        %v1228 = vpop.permute.xlu0 %1227
        %1229 = vrot.lane.b32.xlu0 %v1218, 127
        %v1230 = vpop.permute.xlu0 %1229
        %1231 = vrot.lane.b32.xlu0 %v1220, 127
        %v1232 = vpop.permute.xlu0 %1231
        %1233 = vrot.lane.b32.xlu0 %v1222, 127
        %v1234 = vpop.permute.xlu0 %1233
        %1235 = vrot.lane.b32.xlu0 %v1224, 127
        %v1236 = vpop.permute.xlu0 %1235
        %v1237 = vsel %vm301, %v1226, %v1228
        %v1238 = vsel %vm301, %v1230, %v1232
        %v1239 = vsel %vm301, %v1234, %v1236
        %v1246 = vadd.f32 %v1195, %v1237
        %v1247 = vadd.f32 %v1196, %v1228
        %v1248 = vadd.f32 %v1197, %v1238
        %v1249 = vadd.f32 %v1198, %v1232
        %v1250 = vadd.f32 %v1199, %v1239
        %v1251 = vadd.f32 %v1200, %v1236
        %s1252 = sld [smem:[#allocation7 + $0x1e]]
        %v1253 = vstv %s1252
        %v1254 = vmul.f32 %v1253, %v255
        %v1255 = vmul.f32 %v1253, %v256
        %v1256 = vmul.f32 %v1253, %v257
        %v1257 = vmul.f32 %v1253, %v258
        %v1258 = vmul.f32 %v1253, %v259
        %v1259 = vmul.f32 %v1253, %v260
        %v1266 = vrot.slane %v1254, 4
        %v1267 = vrot.slane %v1255, 4
        %v1268 = vrot.slane %v1256, 4
        %v1269 = vsel %vm1178, %v1266, %v1268
        %v1270 = vrot.slane %v1257, 4
        %v1271 = vsel %vm1178, %v1267, %v1270
        %v1272 = vrot.slane %v1258, 4
        %v1273 = vsel %vm1178, %v1268, %v1272
        %v1274 = vrot.slane %v1259, 4
        %v1275 = vsel %vm1178, %v1270, %v1274
        %1276 = vrot.lane.b32.xlu0 %v1266, 126
        %v1277 = vpop.permute.xlu0 %1276
        %1278 = vrot.lane.b32.xlu0 %v1267, 126
        %v1279 = vpop.permute.xlu0 %1278
        %1280 = vrot.lane.b32.xlu0 %v1269, 126
        %v1281 = vpop.permute.xlu0 %1280
        %1282 = vrot.lane.b32.xlu0 %v1271, 126
        %v1283 = vpop.permute.xlu0 %1282
        %1284 = vrot.lane.b32.xlu0 %v1273, 126
        %v1285 = vpop.permute.xlu0 %1284
        %1286 = vrot.lane.b32.xlu0 %v1275, 126
        %v1287 = vpop.permute.xlu0 %1286
        %v1288 = vsel %vm343, %v1277, %v1279
        %v1289 = vsel %vm343, %v1281, %v1283
        %v1290 = vsel %vm343, %v1285, %v1287
        %v1297 = vadd.f32 %v1246, %v1288
        %v1298 = vadd.f32 %v1247, %v1279
        %v1299 = vadd.f32 %v1248, %v1289
        %v1300 = vadd.f32 %v1249, %v1283
        %v1301 = vadd.f32 %v1250, %v1290
        %v1302 = vadd.f32 %v1251, %v1287
        %s1303 = sld [smem:[#allocation7 + $0x1f]]
        %v1304 = vstv %s1303
        %v1305 = vmul.f32 %v1304, %v256
        %v1306 = vmul.f32 %v1304, %v258
        %v1307 = vmul.f32 %v1304, %v260
        %v1311 = vrot.slane %v1305, 4
        %v1312 = vrot.slane %v1306, 4
        %v1313 = vsel %vm1178, %v1311, %v1312
        %v1314 = vrot.slane %v1307, 4
        %v1315 = vsel %vm1178, %v1312, %v1314
        %1316 = vrot.lane.b32.xlu0 %v1311, 125
        %v1317 = vpop.permute.xlu0 %1316
        %1318 = vrot.lane.b32.xlu0 %v1313, 125
        %v1319 = vpop.permute.xlu0 %1318
        %1320 = vrot.lane.b32.xlu0 %v1315, 125
        %v1321 = vpop.permute.xlu0 %1320
        %v1325 = vadd.f32 %v1297, %v1317
        %v1326 = vadd.f32 %v1298, %v1317
        %v1327 = vadd.f32 %v1299, %v1319
        %v1328 = vadd.f32 %v1300, %v1319
        %v1329 = vadd.f32 %v1301, %v1321
        %v1330 = vadd.f32 %v1302, %v1321
        %s1331 = sld [smem:[#allocation7 + $0x20]]
        %v1332 = vstv %s1331
        %v1333 = vmul.f32 %v1332, %v256
        %v1334 = vmul.f32 %v1332, %v258
        %v1335 = vmul.f32 %v1332, %v260
        %v1339 = vrot.slane %v1333, 4
        %v1340 = vrot.slane %v1334, 4
        %v1341 = vsel %vm1178, %v1339, %v1340
        %v1342 = vrot.slane %v1335, 4
        %v1343 = vsel %vm1178, %v1340, %v1342
        %1344 = vrot.lane.b32.xlu0 %v1339, 124
        %v1345 = vpop.permute.xlu0 %1344
        %1346 = vrot.lane.b32.xlu0 %v1341, 124
        %v1347 = vpop.permute.xlu0 %1346
        %1348 = vrot.lane.b32.xlu0 %v1343, 124
        %v1349 = vpop.permute.xlu0 %1348
        %v1353 = vadd.f32 %v1325, %v1345
        %v1354 = vadd.f32 %v1326, %v1345
        %v1355 = vadd.f32 %v1327, %v1347
        %v1356 = vadd.f32 %v1328, %v1347
        %v1357 = vadd.f32 %v1329, %v1349
        %v1358 = vadd.f32 %v1330, %v1349
        %s1359 = sld [smem:[#allocation7 + $0x21]]
        %v1360 = vstv %s1359
        %v1361 = vmul.f32 %v1360, %v256
        %v1362 = vmul.f32 %v1360, %v258
        %v1363 = vmul.f32 %v1360, %v260
        %v1367 = vrot.slane %v1361, 4
        %v1368 = vrot.slane %v1362, 4
        %v1369 = vsel %vm1178, %v1367, %v1368
        %v1370 = vrot.slane %v1363, 4
        %v1371 = vsel %vm1178, %v1368, %v1370
        %1372 = vrot.lane.b32.xlu0 %v1367, 123
        %v1373 = vpop.permute.xlu0 %1372
        %1374 = vrot.lane.b32.xlu0 %v1369, 123
        %v1375 = vpop.permute.xlu0 %1374
        %1376 = vrot.lane.b32.xlu0 %v1371, 123
        %v1377 = vpop.permute.xlu0 %1376
        %v1381 = vadd.f32 %v1353, %v1373
        %v1382 = vadd.f32 %v1354, %v1373
        %v1383 = vadd.f32 %v1355, %v1375
        %v1384 = vadd.f32 %v1356, %v1375
        %v1385 = vadd.f32 %v1357, %v1377
        %v1386 = vadd.f32 %v1358, %v1377
        %s1387 = sld [smem:[#allocation7 + $0x22]]
        %v1388 = vstv %s1387
        %v1389 = vmul.f32 %v1388, %v256
        %v1390 = vmul.f32 %v1388, %v258
        %v1391 = vmul.f32 %v1388, %v260
        %v1395 = vrot.slane %v1389, 4
        %v1396 = vrot.slane %v1390, 4
        %v1397 = vsel %vm1178, %v1395, %v1396
        %v1398 = vrot.slane %v1391, 4
        %v1399 = vsel %vm1178, %v1396, %v1398
        %1400 = vrot.lane.b32.xlu0 %v1395, 122
        %v1401 = vpop.permute.xlu0 %1400
        %1402 = vrot.lane.b32.xlu0 %v1397, 122
        %v1403 = vpop.permute.xlu0 %1402
        %1404 = vrot.lane.b32.xlu0 %v1399, 122
        %v1405 = vpop.permute.xlu0 %1404
        %v1409 = vadd.f32 %v1381, %v1401
        %v1410 = vadd.f32 %v1382, %v1401
        %v1411 = vadd.f32 %v1383, %v1403
        %v1412 = vadd.f32 %v1384, %v1403
        %v1413 = vadd.f32 %v1385, %v1405
        %v1414 = vadd.f32 %v1386, %v1405
        %s1415 = sld [smem:[#allocation7 + $0x23]]
        %v1416 = vstv %s1415
        %v1417 = vmul.f32 %v1416, %v255
        %v1418 = vmul.f32 %v1416, %v256
        %v1419 = vmul.f32 %v1416, %v257
        %v1420 = vmul.f32 %v1416, %v258
        %v1421 = vmul.f32 %v1416, %v259
        %v1422 = vmul.f32 %v1416, %v260
        %vm1429 = vcmask 1042432
        %v1430 = vrot.slane %v1417, 5
        %v1431 = vrot.slane %v1418, 5
        %v1432 = vrot.slane %v1419, 5
        %v1433 = vsel %vm1429, %v1430, %v1432
        %v1434 = vrot.slane %v1420, 5
        %v1435 = vsel %vm1429, %v1431, %v1434
        %v1436 = vrot.slane %v1421, 5
        %v1437 = vsel %vm1429, %v1432, %v1436
        %v1438 = vrot.slane %v1422, 5
        %v1439 = vsel %vm1429, %v1434, %v1438
        %v1446 = vadd.f32 %v1409, %v1430
        %v1447 = vadd.f32 %v1410, %v1431
        %v1448 = vadd.f32 %v1411, %v1433
        %v1449 = vadd.f32 %v1412, %v1435
        %v1450 = vadd.f32 %v1413, %v1437
        %v1451 = vadd.f32 %v1414, %v1439
        %s1452 = sld [smem:[#allocation7 + $0x24]]
        %v1453 = vstv %s1452
        %v1454 = vmul.f32 %v1453, %v255
        %v1455 = vmul.f32 %v1453, %v256
        %v1456 = vmul.f32 %v1453, %v257
        %v1457 = vmul.f32 %v1453, %v258
        %v1458 = vmul.f32 %v1453, %v259
        %v1459 = vmul.f32 %v1453, %v260
        %v1466 = vrot.slane %v1454, 5
        %v1467 = vrot.slane %v1455, 5
        %v1468 = vrot.slane %v1456, 5
        %v1469 = vsel %vm1429, %v1466, %v1468
        %v1470 = vrot.slane %v1457, 5
        %v1471 = vsel %vm1429, %v1467, %v1470
        %v1472 = vrot.slane %v1458, 5
        %v1473 = vsel %vm1429, %v1468, %v1472
        %v1474 = vrot.slane %v1459, 5
        %v1475 = vsel %vm1429, %v1470, %v1474
        %1476 = vrot.lane.b32.xlu0 %v1466, 127
        %v1477 = vpop.permute.xlu0 %1476
        %1478 = vrot.lane.b32.xlu0 %v1467, 127
        %v1479 = vpop.permute.xlu0 %1478
        %1480 = vrot.lane.b32.xlu0 %v1469, 127
        %v1481 = vpop.permute.xlu0 %1480
        %1482 = vrot.lane.b32.xlu0 %v1471, 127
        %v1483 = vpop.permute.xlu0 %1482
        %1484 = vrot.lane.b32.xlu0 %v1473, 127
        %v1485 = vpop.permute.xlu0 %1484
        %1486 = vrot.lane.b32.xlu0 %v1475, 127
        %v1487 = vpop.permute.xlu0 %1486
        %v1488 = vsel %vm301, %v1477, %v1479
        %v1489 = vsel %vm301, %v1481, %v1483
        %v1490 = vsel %vm301, %v1485, %v1487
        %v1497 = vadd.f32 %v1446, %v1488
        %v1498 = vadd.f32 %v1447, %v1479
        %v1499 = vadd.f32 %v1448, %v1489
        %v1500 = vadd.f32 %v1449, %v1483
        %v1501 = vadd.f32 %v1450, %v1490
        %v1502 = vadd.f32 %v1451, %v1487
        %s1503 = sld [smem:[#allocation7 + $0x25]]
        %v1504 = vstv %s1503
        %v1505 = vmul.f32 %v1504, %v255
        %v1506 = vmul.f32 %v1504, %v256
        %v1507 = vmul.f32 %v1504, %v257
        %v1508 = vmul.f32 %v1504, %v258
        %v1509 = vmul.f32 %v1504, %v259
        %v1510 = vmul.f32 %v1504, %v260
        %v1517 = vrot.slane %v1505, 5
        %v1518 = vrot.slane %v1506, 5
        %v1519 = vrot.slane %v1507, 5
        %v1520 = vsel %vm1429, %v1517, %v1519
        %v1521 = vrot.slane %v1508, 5
        %v1522 = vsel %vm1429, %v1518, %v1521
        %v1523 = vrot.slane %v1509, 5
        %v1524 = vsel %vm1429, %v1519, %v1523
        %v1525 = vrot.slane %v1510, 5
        %v1526 = vsel %vm1429, %v1521, %v1525
        %1527 = vrot.lane.b32.xlu0 %v1517, 126
        %v1528 = vpop.permute.xlu0 %1527
        %1529 = vrot.lane.b32.xlu0 %v1518, 126
        %v1530 = vpop.permute.xlu0 %1529
        %1531 = vrot.lane.b32.xlu0 %v1520, 126
        %v1532 = vpop.permute.xlu0 %1531
        %1533 = vrot.lane.b32.xlu0 %v1522, 126
        %v1534 = vpop.permute.xlu0 %1533
        %1535 = vrot.lane.b32.xlu0 %v1524, 126
        %v1536 = vpop.permute.xlu0 %1535
        %1537 = vrot.lane.b32.xlu0 %v1526, 126
        %v1538 = vpop.permute.xlu0 %1537
        %v1539 = vsel %vm343, %v1528, %v1530
        %v1540 = vsel %vm343, %v1532, %v1534
        %v1541 = vsel %vm343, %v1536, %v1538
        %v1548 = vadd.f32 %v1497, %v1539
        %v1549 = vadd.f32 %v1498, %v1530
        %v1550 = vadd.f32 %v1499, %v1540
        %v1551 = vadd.f32 %v1500, %v1534
        %v1552 = vadd.f32 %v1501, %v1541
        %v1553 = vadd.f32 %v1502, %v1538
        %s1554 = sld [smem:[#allocation7 + $0x26]]
        %v1555 = vstv %s1554
        %v1556 = vmul.f32 %v1555, %v256
        %v1557 = vmul.f32 %v1555, %v258
        %v1558 = vmul.f32 %v1555, %v260
        %v1562 = vrot.slane %v1556, 5
        %v1563 = vrot.slane %v1557, 5
        %v1564 = vsel %vm1429, %v1562, %v1563
        %v1565 = vrot.slane %v1558, 5
        %v1566 = vsel %vm1429, %v1563, %v1565
        %1567 = vrot.lane.b32.xlu0 %v1562, 125
        %v1568 = vpop.permute.xlu0 %1567
        %1569 = vrot.lane.b32.xlu0 %v1564, 125
        %v1570 = vpop.permute.xlu0 %1569
        %1571 = vrot.lane.b32.xlu0 %v1566, 125
        %v1572 = vpop.permute.xlu0 %1571
        %v1576 = vadd.f32 %v1548, %v1568
        %v1577 = vadd.f32 %v1549, %v1568
        %v1578 = vadd.f32 %v1550, %v1570
        %v1579 = vadd.f32 %v1551, %v1570
        %v1580 = vadd.f32 %v1552, %v1572
        %v1581 = vadd.f32 %v1553, %v1572
        %s1582 = sld [smem:[#allocation7 + $0x27]]
        %v1583 = vstv %s1582
        %v1584 = vmul.f32 %v1583, %v256
        %v1585 = vmul.f32 %v1583, %v258
        %v1586 = vmul.f32 %v1583, %v260
        %v1590 = vrot.slane %v1584, 5
        %v1591 = vrot.slane %v1585, 5
        %v1592 = vsel %vm1429, %v1590, %v1591
        %v1593 = vrot.slane %v1586, 5
        %v1594 = vsel %vm1429, %v1591, %v1593
        %1595 = vrot.lane.b32.xlu0 %v1590, 124
        %v1596 = vpop.permute.xlu0 %1595
        %1597 = vrot.lane.b32.xlu0 %v1592, 124
        %v1598 = vpop.permute.xlu0 %1597
        %1599 = vrot.lane.b32.xlu0 %v1594, 124
        %v1600 = vpop.permute.xlu0 %1599
        %v1604 = vadd.f32 %v1576, %v1596
        %v1605 = vadd.f32 %v1577, %v1596
        %v1606 = vadd.f32 %v1578, %v1598
        %v1607 = vadd.f32 %v1579, %v1598
        %v1608 = vadd.f32 %v1580, %v1600
        %v1609 = vadd.f32 %v1581, %v1600
        %s1610 = sld [smem:[#allocation7 + $0x28]]
        %v1611 = vstv %s1610
        %v1612 = vmul.f32 %v1611, %v256
        %v1613 = vmul.f32 %v1611, %v258
        %v1614 = vmul.f32 %v1611, %v260
        %v1618 = vrot.slane %v1612, 5
        %v1619 = vrot.slane %v1613, 5
        %v1620 = vsel %vm1429, %v1618, %v1619
        %v1621 = vrot.slane %v1614, 5
        %v1622 = vsel %vm1429, %v1619, %v1621
        %1623 = vrot.lane.b32.xlu0 %v1618, 123
        %v1624 = vpop.permute.xlu0 %1623
        %1625 = vrot.lane.b32.xlu0 %v1620, 123
        %v1626 = vpop.permute.xlu0 %1625
        %1627 = vrot.lane.b32.xlu0 %v1622, 123
        %v1628 = vpop.permute.xlu0 %1627
        %v1632 = vadd.f32 %v1604, %v1624
        %v1633 = vadd.f32 %v1605, %v1624
        %v1634 = vadd.f32 %v1606, %v1626
        %v1635 = vadd.f32 %v1607, %v1626
        %v1636 = vadd.f32 %v1608, %v1628
        %v1637 = vadd.f32 %v1609, %v1628
        %s1638 = sld [smem:[#allocation7 + $0x29]]
        %v1639 = vstv %s1638
        %v1640 = vmul.f32 %v1639, %v256
        %v1641 = vmul.f32 %v1639, %v258
        %v1642 = vmul.f32 %v1639, %v260
        %v1646 = vrot.slane %v1640, 5
        %v1647 = vrot.slane %v1641, 5
        %v1648 = vsel %vm1429, %v1646, %v1647
        %v1649 = vrot.slane %v1642, 5
        %v1650 = vsel %vm1429, %v1647, %v1649
        %1651 = vrot.lane.b32.xlu0 %v1646, 122
        %v1652 = vpop.permute.xlu0 %1651
        %1653 = vrot.lane.b32.xlu0 %v1648, 122
        %v1654 = vpop.permute.xlu0 %1653
        %1655 = vrot.lane.b32.xlu0 %v1650, 122
        %v1656 = vpop.permute.xlu0 %1655
        %v1660 = vadd.f32 %v1632, %v1652
        %v1661 = vadd.f32 %v1633, %v1652
        %v1662 = vadd.f32 %v1634, %v1654
        %v1663 = vadd.f32 %v1635, %v1654
        %v1664 = vadd.f32 %v1636, %v1656
        %v1665 = vadd.f32 %v1637, %v1656
        %s1666 = sld [smem:[#allocation7 + $0x2a]]
        %v1667 = vstv %s1666
        %v1668 = vmul.f32 %v1667, %v255
        %v1669 = vmul.f32 %v1667, %v256
        %v1670 = vmul.f32 %v1667, %v257
        %v1671 = vmul.f32 %v1667, %v258
        %v1672 = vmul.f32 %v1667, %v259
        %v1673 = vmul.f32 %v1667, %v260
        %vm1680 = vcmask 1041408
        %v1681 = vrot.slane %v1668, 6
        %v1682 = vrot.slane %v1669, 6
        %v1683 = vrot.slane %v1670, 6
        %v1684 = vsel %vm1680, %v1681, %v1683
        %v1685 = vrot.slane %v1671, 6
        %v1686 = vsel %vm1680, %v1682, %v1685
        %v1687 = vrot.slane %v1672, 6
        %v1688 = vsel %vm1680, %v1683, %v1687
        %v1689 = vrot.slane %v1673, 6
        %v1690 = vsel %vm1680, %v1685, %v1689
        %v1697 = vadd.f32 %v1660, %v1681
        %v1698 = vadd.f32 %v1661, %v1682
        %v1699 = vadd.f32 %v1662, %v1684
        %v1700 = vadd.f32 %v1663, %v1686
        %v1701 = vadd.f32 %v1664, %v1688
        %v1702 = vadd.f32 %v1665, %v1690
        %s1703 = sld [smem:[#allocation7 + $0x2b]]
        %v1704 = vstv %s1703
        %v1705 = vmul.f32 %v1704, %v255
        %v1706 = vmul.f32 %v1704, %v256
        %v1707 = vmul.f32 %v1704, %v257
        %v1708 = vmul.f32 %v1704, %v258
        %v1709 = vmul.f32 %v1704, %v259
        %v1710 = vmul.f32 %v1704, %v260
        %v1717 = vrot.slane %v1705, 6
        %v1718 = vrot.slane %v1706, 6
        %v1719 = vrot.slane %v1707, 6
        %v1720 = vsel %vm1680, %v1717, %v1719
        %v1721 = vrot.slane %v1708, 6
        %v1722 = vsel %vm1680, %v1718, %v1721
        %v1723 = vrot.slane %v1709, 6
        %v1724 = vsel %vm1680, %v1719, %v1723
        %v1725 = vrot.slane %v1710, 6
        %v1726 = vsel %vm1680, %v1721, %v1725
        %1727 = vrot.lane.b32.xlu0 %v1717, 127
        %v1728 = vpop.permute.xlu0 %1727
        %1729 = vrot.lane.b32.xlu0 %v1718, 127
        %v1730 = vpop.permute.xlu0 %1729
        %1731 = vrot.lane.b32.xlu0 %v1720, 127
        %v1732 = vpop.permute.xlu0 %1731
        %1733 = vrot.lane.b32.xlu0 %v1722, 127
        %v1734 = vpop.permute.xlu0 %1733
        %1735 = vrot.lane.b32.xlu0 %v1724, 127
        %v1736 = vpop.permute.xlu0 %1735
        %1737 = vrot.lane.b32.xlu0 %v1726, 127
        %v1738 = vpop.permute.xlu0 %1737
        %v1739 = vsel %vm301, %v1728, %v1730
        %v1740 = vsel %vm301, %v1732, %v1734
        %v1741 = vsel %vm301, %v1736, %v1738
        %v1748 = vadd.f32 %v1697, %v1739
        %v1749 = vadd.f32 %v1698, %v1730
        %v1750 = vadd.f32 %v1699, %v1740
        %v1751 = vadd.f32 %v1700, %v1734
        %v1752 = vadd.f32 %v1701, %v1741
        %v1753 = vadd.f32 %v1702, %v1738
        %s1754 = sld [smem:[#allocation7 + $0x2c]]
        %v1755 = vstv %s1754
        %v1756 = vmul.f32 %v1755, %v255
        %v1757 = vmul.f32 %v1755, %v256
        %v1758 = vmul.f32 %v1755, %v257
        %v1759 = vmul.f32 %v1755, %v258
        %v1760 = vmul.f32 %v1755, %v259
        %v1761 = vmul.f32 %v1755, %v260
        %v1768 = vrot.slane %v1756, 6
        %v1769 = vrot.slane %v1757, 6
        %v1770 = vrot.slane %v1758, 6
        %v1771 = vsel %vm1680, %v1768, %v1770
        %v1772 = vrot.slane %v1759, 6
        %v1773 = vsel %vm1680, %v1769, %v1772
        %v1774 = vrot.slane %v1760, 6
        %v1775 = vsel %vm1680, %v1770, %v1774
        %v1776 = vrot.slane %v1761, 6
        %v1777 = vsel %vm1680, %v1772, %v1776
        %1778 = vrot.lane.b32.xlu0 %v1768, 126
        %v1779 = vpop.permute.xlu0 %1778
        %1780 = vrot.lane.b32.xlu0 %v1769, 126
        %v1781 = vpop.permute.xlu0 %1780
        %1782 = vrot.lane.b32.xlu0 %v1771, 126
        %v1783 = vpop.permute.xlu0 %1782
        %1784 = vrot.lane.b32.xlu0 %v1773, 126
        %v1785 = vpop.permute.xlu0 %1784
        %1786 = vrot.lane.b32.xlu0 %v1775, 126
        %v1787 = vpop.permute.xlu0 %1786
        %1788 = vrot.lane.b32.xlu0 %v1777, 126
        %v1789 = vpop.permute.xlu0 %1788
        %v1790 = vsel %vm343, %v1779, %v1781
        %v1791 = vsel %vm343, %v1783, %v1785
        %v1792 = vsel %vm343, %v1787, %v1789
        %v1799 = vadd.f32 %v1748, %v1790
        %v1800 = vadd.f32 %v1749, %v1781
        %v1801 = vadd.f32 %v1750, %v1791
        %v1802 = vadd.f32 %v1751, %v1785
        %v1803 = vadd.f32 %v1752, %v1792
        %v1804 = vadd.f32 %v1753, %v1789
        %s1805 = sld [smem:[#allocation7 + $0x2d]]
        %v1806 = vstv %s1805
        %v1807 = vmul.f32 %v1806, %v256
        %v1808 = vmul.f32 %v1806, %v258
        %v1809 = vmul.f32 %v1806, %v260
        %v1813 = vrot.slane %v1807, 6
        %v1814 = vrot.slane %v1808, 6
        %v1815 = vsel %vm1680, %v1813, %v1814
        %v1816 = vrot.slane %v1809, 6
        %v1817 = vsel %vm1680, %v1814, %v1816
        %1818 = vrot.lane.b32.xlu0 %v1813, 125
        %v1819 = vpop.permute.xlu0 %1818
        %1820 = vrot.lane.b32.xlu0 %v1815, 125
        %v1821 = vpop.permute.xlu0 %1820
        %1822 = vrot.lane.b32.xlu0 %v1817, 125
        %v1823 = vpop.permute.xlu0 %1822
        %v1827 = vadd.f32 %v1799, %v1819
        %v1828 = vadd.f32 %v1800, %v1819
        %v1829 = vadd.f32 %v1801, %v1821
        %v1830 = vadd.f32 %v1802, %v1821
        %v1831 = vadd.f32 %v1803, %v1823
        %v1832 = vadd.f32 %v1804, %v1823
        %s1833 = sld [smem:[#allocation7 + $0x2e]]
        %v1834 = vstv %s1833
        %v1835 = vmul.f32 %v1834, %v256
        %v1836 = vmul.f32 %v1834, %v258
        %v1837 = vmul.f32 %v1834, %v260
        %v1841 = vrot.slane %v1835, 6
        %v1842 = vrot.slane %v1836, 6
        %v1843 = vsel %vm1680, %v1841, %v1842
        %v1844 = vrot.slane %v1837, 6
        %v1845 = vsel %vm1680, %v1842, %v1844
        %1846 = vrot.lane.b32.xlu0 %v1841, 124
        %v1847 = vpop.permute.xlu0 %1846
        %1848 = vrot.lane.b32.xlu0 %v1843, 124
        %v1849 = vpop.permute.xlu0 %1848
        %1850 = vrot.lane.b32.xlu0 %v1845, 124
        %v1851 = vpop.permute.xlu0 %1850
        %v1855 = vadd.f32 %v1827, %v1847
        %v1856 = vadd.f32 %v1828, %v1847
        %v1857 = vadd.f32 %v1829, %v1849
        %v1858 = vadd.f32 %v1830, %v1849
        %v1859 = vadd.f32 %v1831, %v1851
        %v1860 = vadd.f32 %v1832, %v1851
        %s1861 = sld [smem:[#allocation7 + $0x2f]]
        %v1862 = vstv %s1861
        %v1863 = vmul.f32 %v1862, %v256
        %v1864 = vmul.f32 %v1862, %v258
        %v1865 = vmul.f32 %v1862, %v260
        %v1869 = vrot.slane %v1863, 6
        %v1870 = vrot.slane %v1864, 6
        %v1871 = vsel %vm1680, %v1869, %v1870
        %v1872 = vrot.slane %v1865, 6
        %v1873 = vsel %vm1680, %v1870, %v1872
        %1874 = vrot.lane.b32.xlu0 %v1869, 123
        %v1875 = vpop.permute.xlu0 %1874
        %1876 = vrot.lane.b32.xlu0 %v1871, 123
        %v1877 = vpop.permute.xlu0 %1876
        %1878 = vrot.lane.b32.xlu0 %v1873, 123
        %v1879 = vpop.permute.xlu0 %1878
        %v1883 = vadd.f32 %v1855, %v1875
        %v1884 = vadd.f32 %v1856, %v1875
        %v1885 = vadd.f32 %v1857, %v1877
        %v1886 = vadd.f32 %v1858, %v1877
        %v1887 = vadd.f32 %v1859, %v1879
        %v1888 = vadd.f32 %v1860, %v1879
        %s1889 = sld [smem:[#allocation7 + $0x30]]
        %v1890 = vstv %s1889
        %v1891 = vmul.f32 %v1890, %v256
        %v1892 = vmul.f32 %v1890, %v258
        %v1893 = vmul.f32 %v1890, %v260
        %v1897 = vrot.slane %v1891, 6
        %v1898 = vrot.slane %v1892, 6
        %v1899 = vsel %vm1680, %v1897, %v1898
        %v1900 = vrot.slane %v1893, 6
        %v1901 = vsel %vm1680, %v1898, %v1900
        %1902 = vrot.lane.b32.xlu0 %v1897, 122
        %v1903 = vpop.permute.xlu0 %1902
        %1904 = vrot.lane.b32.xlu0 %v1899, 122
        %v1905 = vpop.permute.xlu0 %1904
        %1906 = vrot.lane.b32.xlu0 %v1901, 122
        %v1907 = vpop.permute.xlu0 %1906
        %v1911 = vadd.f32 %v1883, %v1903
        %v1912 = vadd.f32 %v1884, %v1903
        %v1913 = vadd.f32 %v1885, %v1905
        %v1914 = vadd.f32 %v1886, %v1905
        %v1915 = vadd.f32 %v1887, %v1907
        %v1916 = vadd.f32 %v1888, %v1907
        %v1917 = vld [vmem:[%s250] sm:$0xff]
        %v1918 = vld [vmem:[%s250 + $0x8] sm:$0xff]
        %v1919 = vld [vmem:[%s250 + $0x18] sm:$0xff]
        %v1920 = vld [vmem:[%s250 + $0x20] sm:$0xff]
        %v1921 = vld [vmem:[%s250 + $0x30] sm:$0xff]
        %v1922 = vld [vmem:[%s250 + $0x38] sm:$0xff]
        %v1923 = vld [vmem:[%s250 + $0x48] sm:$0xff]
        %v1924 = vld [vmem:[%s250 + $0x50] sm:$0xff]
        %s1925 = sld [smem:[#allocation7 + $0x31]]
        %v1926 = vstv %s1925
        %v1927 = vmul.f32 %v1926, %v1917
        %v1928 = vmul.f32 %v1926, %v1918
        %v1929 = vmul.f32 %v1926, %v1919
        %v1930 = vmul.f32 %v1926, %v1920
        %v1931 = vmul.f32 %v1926, %v1921
        %v1932 = vmul.f32 %v1926, %v1922
        %v1933 = vadd.f32 %v1911, %v1927
        %v1934 = vadd.f32 %v1912, %v1928
        %v1935 = vadd.f32 %v1913, %v1929
        %v1936 = vadd.f32 %v1914, %v1930
        %v1937 = vadd.f32 %v1915, %v1931
        %v1938 = vadd.f32 %v1916, %v1932
        %s1939 = sld [smem:[#allocation7 + $0x32]]
        %v1940 = vstv %s1939
        %v1941 = vmul.f32 %v1940, %v1917
        %v1942 = vmul.f32 %v1940, %v1918
        %v1943 = vmul.f32 %v1940, %v1919
        %v1944 = vmul.f32 %v1940, %v1920
        %v1945 = vmul.f32 %v1940, %v1921
        %v1946 = vmul.f32 %v1940, %v1922
        %1953 = vrot.lane.b32.xlu0 %v1941, 127
        %v1954 = vpop.permute.xlu0 %1953
        %1955 = vrot.lane.b32.xlu0 %v1942, 127
        %v1956 = vpop.permute.xlu0 %1955
        %1957 = vrot.lane.b32.xlu0 %v1943, 127
        %v1958 = vpop.permute.xlu0 %1957
        %1959 = vrot.lane.b32.xlu0 %v1944, 127
        %v1960 = vpop.permute.xlu0 %1959
        %1961 = vrot.lane.b32.xlu0 %v1945, 127
        %v1962 = vpop.permute.xlu0 %1961
        %1963 = vrot.lane.b32.xlu0 %v1946, 127
        %v1964 = vpop.permute.xlu0 %1963
        %v1965 = vsel %vm301, %v1954, %v1956
        %v1966 = vsel %vm301, %v1958, %v1960
        %v1967 = vsel %vm301, %v1962, %v1964
        %v1974 = vadd.f32 %v1933, %v1965
        %v1975 = vadd.f32 %v1934, %v1956
        %v1976 = vadd.f32 %v1935, %v1966
        %v1977 = vadd.f32 %v1936, %v1960
        %v1978 = vadd.f32 %v1937, %v1967
        %v1979 = vadd.f32 %v1938, %v1964
        %s1980 = sld [smem:[#allocation7 + $0x33]]
        %v1981 = vstv %s1980
        %v1982 = vmul.f32 %v1981, %v1917
        %v1983 = vmul.f32 %v1981, %v1918
        %v1984 = vmul.f32 %v1981, %v1919
        %v1985 = vmul.f32 %v1981, %v1920
        %v1986 = vmul.f32 %v1981, %v1921
        %v1987 = vmul.f32 %v1981, %v1922
        %1994 = vrot.lane.b32.xlu0 %v1982, 126
        %v1995 = vpop.permute.xlu0 %1994
        %1996 = vrot.lane.b32.xlu0 %v1983, 126
        %v1997 = vpop.permute.xlu0 %1996
        %1998 = vrot.lane.b32.xlu0 %v1984, 126
        %v1999 = vpop.permute.xlu0 %1998
        %2000 = vrot.lane.b32.xlu0 %v1985, 126
        %v2001 = vpop.permute.xlu0 %2000
        %2002 = vrot.lane.b32.xlu0 %v1986, 126
        %v2003 = vpop.permute.xlu0 %2002
        %2004 = vrot.lane.b32.xlu0 %v1987, 126
        %v2005 = vpop.permute.xlu0 %2004
        %v2006 = vsel %vm343, %v1995, %v1997
        %v2007 = vsel %vm343, %v1999, %v2001
        %v2008 = vsel %vm343, %v2003, %v2005
        %v2015 = vadd.f32 %v1974, %v2006
        %v2016 = vadd.f32 %v1975, %v1997
        %v2017 = vadd.f32 %v1976, %v2007
        %v2018 = vadd.f32 %v1977, %v2001
        %v2019 = vadd.f32 %v1978, %v2008
        %v2020 = vadd.f32 %v1979, %v2005
        %s2021 = sld [smem:[#allocation7 + $0x34]]
        %v2022 = vstv %s2021
        %v2023 = vmul.f32 %v2022, %v1918
        %v2024 = vmul.f32 %v2022, %v1920
        %v2025 = vmul.f32 %v2022, %v1922
        %2029 = vrot.lane.b32.xlu0 %v2023, 125
        %v2030 = vpop.permute.xlu0 %2029
        %2031 = vrot.lane.b32.xlu0 %v2024, 125
        %v2032 = vpop.permute.xlu0 %2031
        %2033 = vrot.lane.b32.xlu0 %v2025, 125
        %v2034 = vpop.permute.xlu0 %2033
        %v2038 = vadd.f32 %v2015, %v2030
        %v2039 = vadd.f32 %v2016, %v2030
        %v2040 = vadd.f32 %v2017, %v2032
        %v2041 = vadd.f32 %v2018, %v2032
        %v2042 = vadd.f32 %v2019, %v2034
        %v2043 = vadd.f32 %v2020, %v2034
        %s2044 = sld [smem:[#allocation7 + $0x35]]
        %v2045 = vstv %s2044
        %v2046 = vmul.f32 %v2045, %v1918
        %v2047 = vmul.f32 %v2045, %v1920
        %v2048 = vmul.f32 %v2045, %v1922
        %2052 = vrot.lane.b32.xlu0 %v2046, 124
        %v2053 = vpop.permute.xlu0 %2052
        %2054 = vrot.lane.b32.xlu0 %v2047, 124
        %v2055 = vpop.permute.xlu0 %2054
        %2056 = vrot.lane.b32.xlu0 %v2048, 124
        %v2057 = vpop.permute.xlu0 %2056
        %v2061 = vadd.f32 %v2038, %v2053
        %v2062 = vadd.f32 %v2039, %v2053
        %v2063 = vadd.f32 %v2040, %v2055
        %v2064 = vadd.f32 %v2041, %v2055
        %v2065 = vadd.f32 %v2042, %v2057
        %v2066 = vadd.f32 %v2043, %v2057
        %s2067 = sld [smem:[#allocation7 + $0x36]]
        %v2068 = vstv %s2067
        %v2069 = vmul.f32 %v2068, %v1918
        %v2070 = vmul.f32 %v2068, %v1920
        %v2071 = vmul.f32 %v2068, %v1922
        %2075 = vrot.lane.b32.xlu0 %v2069, 123
        %v2076 = vpop.permute.xlu0 %2075
        %2077 = vrot.lane.b32.xlu0 %v2070, 123
        %v2078 = vpop.permute.xlu0 %2077
        %2079 = vrot.lane.b32.xlu0 %v2071, 123
        %v2080 = vpop.permute.xlu0 %2079
        %v2084 = vadd.f32 %v2061, %v2076
        %v2085 = vadd.f32 %v2062, %v2076
        %v2086 = vadd.f32 %v2063, %v2078
        %v2087 = vadd.f32 %v2064, %v2078
        %v2088 = vadd.f32 %v2065, %v2080
        %v2089 = vadd.f32 %v2066, %v2080
        %s2090 = sld [smem:[#allocation7 + $0x37]]
        %v2091 = vstv %s2090
        %v2092 = vmul.f32 %v2091, %v1918
        %v2093 = vmul.f32 %v2091, %v1920
        %v2094 = vmul.f32 %v2091, %v1922
        %2098 = vrot.lane.b32.xlu0 %v2092, 122
        %v2099 = vpop.permute.xlu0 %2098
        %2100 = vrot.lane.b32.xlu0 %v2093, 122
        %v2101 = vpop.permute.xlu0 %2100
        %2102 = vrot.lane.b32.xlu0 %v2094, 122
        %v2103 = vpop.permute.xlu0 %2102
        %v2107 = vadd.f32 %v2084, %v2099
        %v2108 = vadd.f32 %v2085, %v2099
        %v2109 = vadd.f32 %v2086, %v2101
        %v2110 = vadd.f32 %v2087, %v2101
        %v2111 = vadd.f32 %v2088, %v2103
        %v2112 = vadd.f32 %v2089, %v2103
        %s2113 = sld [smem:[#allocation7 + $0x38]]
        %v2114 = vstv %s2113
        %v2115 = vmul.f32 %v2114, %v1917
        %v2116 = vmul.f32 %v2114, %v1918
        %v2117 = vmul.f32 %v2114, %v1919
        %v2118 = vmul.f32 %v2114, %v1920
        %v2119 = vmul.f32 %v2114, %v1921
        %v2120 = vmul.f32 %v2114, %v1922
        %v2127 = vrot.slane %v2115, 1
        %v2128 = vrot.slane %v2117, 1
        %v2129 = vsel %vm465, %v2127, %v2128
        %v2130 = vrot.slane %v2116, 1
        %v2131 = vrot.slane %v2118, 1
        %v2132 = vsel %vm465, %v2130, %v2131
        %v2133 = vrot.slane %v2119, 1
        %v2134 = vsel %vm465, %v2128, %v2133
        %v2135 = vrot.slane %v2120, 1
        %v2136 = vsel %vm465, %v2131, %v2135
        %v2143 = vadd.f32 %v2107, %v2129
        %v2144 = vadd.f32 %v2108, %v2132
        %v2145 = vadd.f32 %v2109, %v2134
        %v2146 = vadd.f32 %v2110, %v2136
        %v2147 = vadd.f32 %v2111, %v2133
        %v2148 = vadd.f32 %v2112, %v2135
        %s2149 = sld [smem:[#allocation7 + $0x39]]
        %v2150 = vstv %s2149
        %v2151 = vmul.f32 %v2150, %v1917
        %v2152 = vmul.f32 %v2150, %v1918
        %v2153 = vmul.f32 %v2150, %v1919
        %v2154 = vmul.f32 %v2150, %v1920
        %v2155 = vmul.f32 %v2150, %v1921
        %v2156 = vmul.f32 %v2150, %v1922
        %v2163 = vrot.slane %v2151, 1
        %v2164 = vrot.slane %v2153, 1
        %v2165 = vsel %vm465, %v2163, %v2164
        %v2166 = vrot.slane %v2152, 1
        %v2167 = vrot.slane %v2154, 1
        %v2168 = vsel %vm465, %v2166, %v2167
        %v2169 = vrot.slane %v2155, 1
        %v2170 = vsel %vm465, %v2164, %v2169
        %v2171 = vrot.slane %v2156, 1
        %v2172 = vsel %vm465, %v2167, %v2171
        %2173 = vrot.lane.b32.xlu0 %v2165, 127
        %v2174 = vpop.permute.xlu0 %2173
        %2175 = vrot.lane.b32.xlu0 %v2168, 127
        %v2176 = vpop.permute.xlu0 %2175
        %2177 = vrot.lane.b32.xlu0 %v2170, 127
        %v2178 = vpop.permute.xlu0 %2177
        %2179 = vrot.lane.b32.xlu0 %v2172, 127
        %v2180 = vpop.permute.xlu0 %2179
        %2181 = vrot.lane.b32.xlu0 %v2169, 127
        %v2182 = vpop.permute.xlu0 %2181
        %2183 = vrot.lane.b32.xlu0 %v2171, 127
        %v2184 = vpop.permute.xlu0 %2183
        %v2185 = vsel %vm301, %v2174, %v2176
        %v2186 = vsel %vm301, %v2178, %v2180
        %v2187 = vsel %vm301, %v2182, %v2184
        %v2194 = vadd.f32 %v2143, %v2185
        %v2195 = vadd.f32 %v2144, %v2176
        %v2196 = vadd.f32 %v2145, %v2186
        %v2197 = vadd.f32 %v2146, %v2180
        %v2198 = vadd.f32 %v2147, %v2187
        %v2199 = vadd.f32 %v2148, %v2184
        %s2200 = sld [smem:[#allocation7 + $0x3a]]
        %v2201 = vstv %s2200
        %v2202 = vmul.f32 %v2201, %v1917
        %v2203 = vmul.f32 %v2201, %v1918
        %v2204 = vmul.f32 %v2201, %v1919
        %v2205 = vmul.f32 %v2201, %v1920
        %v2206 = vmul.f32 %v2201, %v1921
        %v2207 = vmul.f32 %v2201, %v1922
        %v2214 = vrot.slane %v2202, 1
        %v2215 = vrot.slane %v2204, 1
        %v2216 = vsel %vm465, %v2214, %v2215
        %v2217 = vrot.slane %v2203, 1
        %v2218 = vrot.slane %v2205, 1
        %v2219 = vsel %vm465, %v2217, %v2218
        %v2220 = vrot.slane %v2206, 1
        %v2221 = vsel %vm465, %v2215, %v2220
        %v2222 = vrot.slane %v2207, 1
        %v2223 = vsel %vm465, %v2218, %v2222
        %2224 = vrot.lane.b32.xlu0 %v2216, 126
        %v2225 = vpop.permute.xlu0 %2224
        %2226 = vrot.lane.b32.xlu0 %v2219, 126
        %v2227 = vpop.permute.xlu0 %2226
        %2228 = vrot.lane.b32.xlu0 %v2221, 126
        %v2229 = vpop.permute.xlu0 %2228
        %2230 = vrot.lane.b32.xlu0 %v2223, 126
        %v2231 = vpop.permute.xlu0 %2230
        %2232 = vrot.lane.b32.xlu0 %v2220, 126
        %v2233 = vpop.permute.xlu0 %2232
        %2234 = vrot.lane.b32.xlu0 %v2222, 126
        %v2235 = vpop.permute.xlu0 %2234
        %v2236 = vsel %vm343, %v2225, %v2227
        %v2237 = vsel %vm343, %v2229, %v2231
        %v2238 = vsel %vm343, %v2233, %v2235
        %v2245 = vadd.f32 %v2194, %v2236
        %v2246 = vadd.f32 %v2195, %v2227
        %v2247 = vadd.f32 %v2196, %v2237
        %v2248 = vadd.f32 %v2197, %v2231
        %v2249 = vadd.f32 %v2198, %v2238
        %v2250 = vadd.f32 %v2199, %v2235
        %s2251 = sld [smem:[#allocation7 + $0x3b]]
        %v2252 = vstv %s2251
        %v2253 = vmul.f32 %v2252, %v1918
        %v2254 = vmul.f32 %v2252, %v1920
        %v2255 = vmul.f32 %v2252, %v1922
        %v2259 = vrot.slane %v2253, 1
        %v2260 = vrot.slane %v2254, 1
        %v2261 = vsel %vm465, %v2259, %v2260
        %v2262 = vrot.slane %v2255, 1
        %v2263 = vsel %vm465, %v2260, %v2262
        %2264 = vrot.lane.b32.xlu0 %v2261, 125
        %v2265 = vpop.permute.xlu0 %2264
        %2266 = vrot.lane.b32.xlu0 %v2263, 125
        %v2267 = vpop.permute.xlu0 %2266
        %2268 = vrot.lane.b32.xlu0 %v2262, 125
        %v2269 = vpop.permute.xlu0 %2268
        %v2273 = vadd.f32 %v2245, %v2265
        %v2274 = vadd.f32 %v2246, %v2265
        %v2275 = vadd.f32 %v2247, %v2267
        %v2276 = vadd.f32 %v2248, %v2267
        %v2277 = vadd.f32 %v2249, %v2269
        %v2278 = vadd.f32 %v2250, %v2269
        %s2279 = sld [smem:[#allocation7 + $0x3c]]
        %v2280 = vstv %s2279
        %v2281 = vmul.f32 %v2280, %v1918
        %v2282 = vmul.f32 %v2280, %v1920
        %v2283 = vmul.f32 %v2280, %v1922
        %v2287 = vrot.slane %v2281, 1
        %v2288 = vrot.slane %v2282, 1
        %v2289 = vsel %vm465, %v2287, %v2288
        %v2290 = vrot.slane %v2283, 1
        %v2291 = vsel %vm465, %v2288, %v2290
        %2292 = vrot.lane.b32.xlu0 %v2289, 124
        %v2293 = vpop.permute.xlu0 %2292
        %2294 = vrot.lane.b32.xlu0 %v2291, 124
        %v2295 = vpop.permute.xlu0 %2294
        %2296 = vrot.lane.b32.xlu0 %v2290, 124
        %v2297 = vpop.permute.xlu0 %2296
        %v2301 = vadd.f32 %v2273, %v2293
        %v2302 = vadd.f32 %v2274, %v2293
        %v2303 = vadd.f32 %v2275, %v2295
        %v2304 = vadd.f32 %v2276, %v2295
        %v2305 = vadd.f32 %v2277, %v2297
        %v2306 = vadd.f32 %v2278, %v2297
        %s2307 = sld [smem:[#allocation7 + $0x3d]]
        %v2308 = vstv %s2307
        %v2309 = vmul.f32 %v2308, %v1918
        %v2310 = vmul.f32 %v2308, %v1920
        %v2311 = vmul.f32 %v2308, %v1922
        %v2315 = vrot.slane %v2309, 1
        %v2316 = vrot.slane %v2310, 1
        %v2317 = vsel %vm465, %v2315, %v2316
        %v2318 = vrot.slane %v2311, 1
        %v2319 = vsel %vm465, %v2316, %v2318
        %2320 = vrot.lane.b32.xlu0 %v2317, 123
        %v2321 = vpop.permute.xlu0 %2320
        %2322 = vrot.lane.b32.xlu0 %v2319, 123
        %v2323 = vpop.permute.xlu0 %2322
        %2324 = vrot.lane.b32.xlu0 %v2318, 123
        %v2325 = vpop.permute.xlu0 %2324
        %v2329 = vadd.f32 %v2301, %v2321
        %v2330 = vadd.f32 %v2302, %v2321
        %v2331 = vadd.f32 %v2303, %v2323
        %v2332 = vadd.f32 %v2304, %v2323
        %v2333 = vadd.f32 %v2305, %v2325
        %v2334 = vadd.f32 %v2306, %v2325
        %s2335 = sld [smem:[#allocation7 + $0x3e]]
        %v2336 = vstv %s2335
        %v2337 = vmul.f32 %v2336, %v1918
        %v2338 = vmul.f32 %v2336, %v1920
        %v2339 = vmul.f32 %v2336, %v1922
        %v2343 = vrot.slane %v2337, 1
        %v2344 = vrot.slane %v2338, 1
        %v2345 = vsel %vm465, %v2343, %v2344
        %v2346 = vrot.slane %v2339, 1
        %v2347 = vsel %vm465, %v2344, %v2346
        %2348 = vrot.lane.b32.xlu0 %v2345, 122
        %v2349 = vpop.permute.xlu0 %2348
        %2350 = vrot.lane.b32.xlu0 %v2347, 122
        %v2351 = vpop.permute.xlu0 %2350
        %2352 = vrot.lane.b32.xlu0 %v2346, 122
        %v2353 = vpop.permute.xlu0 %2352
        %v2357 = vadd.f32 %v2329, %v2349
        %v2358 = vadd.f32 %v2330, %v2349
        %v2359 = vadd.f32 %v2331, %v2351
        %v2360 = vadd.f32 %v2332, %v2351
        %v2361 = vadd.f32 %v2333, %v2353
        %v2362 = vadd.f32 %v2334, %v2353
        %s2363 = sld [smem:[#allocation7 + $0x3f]]
        %v2364 = vstv %s2363
        %v2365 = vmul.f32 %v2364, %v1917
        %v2366 = vmul.f32 %v2364, %v1918
        %v2367 = vmul.f32 %v2364, %v1919
        %v2368 = vmul.f32 %v2364, %v1920
        %v2369 = vmul.f32 %v2364, %v1921
        %v2370 = vmul.f32 %v2364, %v1922
        %v2377 = vrot.slane %v2365, 2
        %v2378 = vrot.slane %v2367, 2
        %v2379 = vsel %vm716, %v2377, %v2378
        %v2380 = vrot.slane %v2366, 2
        %v2381 = vrot.slane %v2368, 2
        %v2382 = vsel %vm716, %v2380, %v2381
        %v2383 = vrot.slane %v2369, 2
        %v2384 = vsel %vm716, %v2378, %v2383
        %v2385 = vrot.slane %v2370, 2
        %v2386 = vsel %vm716, %v2381, %v2385
        %v2393 = vadd.f32 %v2357, %v2379
        %v2394 = vadd.f32 %v2358, %v2382
        %v2395 = vadd.f32 %v2359, %v2384
        %v2396 = vadd.f32 %v2360, %v2386
        %v2397 = vadd.f32 %v2361, %v2383
        %v2398 = vadd.f32 %v2362, %v2385
        %s2399 = sld [smem:[#allocation7 + $0x40]]
        %v2400 = vstv %s2399
        %v2401 = vmul.f32 %v2400, %v1917
        %v2402 = vmul.f32 %v2400, %v1918
        %v2403 = vmul.f32 %v2400, %v1919
        %v2404 = vmul.f32 %v2400, %v1920
        %v2405 = vmul.f32 %v2400, %v1921
        %v2406 = vmul.f32 %v2400, %v1922
        %v2413 = vrot.slane %v2401, 2
        %v2414 = vrot.slane %v2403, 2
        %v2415 = vsel %vm716, %v2413, %v2414
        %v2416 = vrot.slane %v2402, 2
        %v2417 = vrot.slane %v2404, 2
        %v2418 = vsel %vm716, %v2416, %v2417
        %v2419 = vrot.slane %v2405, 2
        %v2420 = vsel %vm716, %v2414, %v2419
        %v2421 = vrot.slane %v2406, 2
        %v2422 = vsel %vm716, %v2417, %v2421
        %2423 = vrot.lane.b32.xlu0 %v2415, 127
        %v2424 = vpop.permute.xlu0 %2423
        %2425 = vrot.lane.b32.xlu0 %v2418, 127
        %v2426 = vpop.permute.xlu0 %2425
        %2427 = vrot.lane.b32.xlu0 %v2420, 127
        %v2428 = vpop.permute.xlu0 %2427
        %2429 = vrot.lane.b32.xlu0 %v2422, 127
        %v2430 = vpop.permute.xlu0 %2429
        %2431 = vrot.lane.b32.xlu0 %v2419, 127
        %v2432 = vpop.permute.xlu0 %2431
        %2433 = vrot.lane.b32.xlu0 %v2421, 127
        %v2434 = vpop.permute.xlu0 %2433
        %v2435 = vsel %vm301, %v2424, %v2426
        %v2436 = vsel %vm301, %v2428, %v2430
        %v2437 = vsel %vm301, %v2432, %v2434
        %v2444 = vadd.f32 %v2393, %v2435
        %v2445 = vadd.f32 %v2394, %v2426
        %v2446 = vadd.f32 %v2395, %v2436
        %v2447 = vadd.f32 %v2396, %v2430
        %v2448 = vadd.f32 %v2397, %v2437
        %v2449 = vadd.f32 %v2398, %v2434
        %s2450 = sld [smem:[#allocation7 + $0x41]]
        %v2451 = vstv %s2450
        %v2452 = vmul.f32 %v2451, %v1917
        %v2453 = vmul.f32 %v2451, %v1918
        %v2454 = vmul.f32 %v2451, %v1919
        %v2455 = vmul.f32 %v2451, %v1920
        %v2456 = vmul.f32 %v2451, %v1921
        %v2457 = vmul.f32 %v2451, %v1922
        %v2464 = vrot.slane %v2452, 2
        %v2465 = vrot.slane %v2454, 2
        %v2466 = vsel %vm716, %v2464, %v2465
        %v2467 = vrot.slane %v2453, 2
        %v2468 = vrot.slane %v2455, 2
        %v2469 = vsel %vm716, %v2467, %v2468
        %v2470 = vrot.slane %v2456, 2
        %v2471 = vsel %vm716, %v2465, %v2470
        %v2472 = vrot.slane %v2457, 2
        %v2473 = vsel %vm716, %v2468, %v2472
        %2474 = vrot.lane.b32.xlu0 %v2466, 126
        %v2475 = vpop.permute.xlu0 %2474
        %2476 = vrot.lane.b32.xlu0 %v2469, 126
        %v2477 = vpop.permute.xlu0 %2476
        %2478 = vrot.lane.b32.xlu0 %v2471, 126
        %v2479 = vpop.permute.xlu0 %2478
        %2480 = vrot.lane.b32.xlu0 %v2473, 126
        %v2481 = vpop.permute.xlu0 %2480
        %2482 = vrot.lane.b32.xlu0 %v2470, 126
        %v2483 = vpop.permute.xlu0 %2482
        %2484 = vrot.lane.b32.xlu0 %v2472, 126
        %v2485 = vpop.permute.xlu0 %2484
        %v2486 = vsel %vm343, %v2475, %v2477
        %v2487 = vsel %vm343, %v2479, %v2481
        %v2488 = vsel %vm343, %v2483, %v2485
        %v2495 = vadd.f32 %v2444, %v2486
        %v2496 = vadd.f32 %v2445, %v2477
        %v2497 = vadd.f32 %v2446, %v2487
        %v2498 = vadd.f32 %v2447, %v2481
        %v2499 = vadd.f32 %v2448, %v2488
        %v2500 = vadd.f32 %v2449, %v2485
        %s2501 = sld [smem:[#allocation7 + $0x42]]
        %v2502 = vstv %s2501
        %v2503 = vmul.f32 %v2502, %v1918
        %v2504 = vmul.f32 %v2502, %v1920
        %v2505 = vmul.f32 %v2502, %v1922
        %v2509 = vrot.slane %v2503, 2
        %v2510 = vrot.slane %v2504, 2
        %v2511 = vsel %vm716, %v2509, %v2510
        %v2512 = vrot.slane %v2505, 2
        %v2513 = vsel %vm716, %v2510, %v2512
        %2514 = vrot.lane.b32.xlu0 %v2511, 125
        %v2515 = vpop.permute.xlu0 %2514
        %2516 = vrot.lane.b32.xlu0 %v2513, 125
        %v2517 = vpop.permute.xlu0 %2516
        %2518 = vrot.lane.b32.xlu0 %v2512, 125
        %v2519 = vpop.permute.xlu0 %2518
        %v2523 = vadd.f32 %v2495, %v2515
        %v2524 = vadd.f32 %v2496, %v2515
        %v2525 = vadd.f32 %v2497, %v2517
        %v2526 = vadd.f32 %v2498, %v2517
        %v2527 = vadd.f32 %v2499, %v2519
        %v2528 = vadd.f32 %v2500, %v2519
        %s2529 = sld [smem:[#allocation7 + $0x43]]
        %v2530 = vstv %s2529
        %v2531 = vmul.f32 %v2530, %v1918
        %v2532 = vmul.f32 %v2530, %v1920
        %v2533 = vmul.f32 %v2530, %v1922
        %v2537 = vrot.slane %v2531, 2
        %v2538 = vrot.slane %v2532, 2
        %v2539 = vsel %vm716, %v2537, %v2538
        %v2540 = vrot.slane %v2533, 2
        %v2541 = vsel %vm716, %v2538, %v2540
        %2542 = vrot.lane.b32.xlu0 %v2539, 124
        %v2543 = vpop.permute.xlu0 %2542
        %2544 = vrot.lane.b32.xlu0 %v2541, 124
        %v2545 = vpop.permute.xlu0 %2544
        %2546 = vrot.lane.b32.xlu0 %v2540, 124
        %v2547 = vpop.permute.xlu0 %2546
        %v2551 = vadd.f32 %v2523, %v2543
        %v2552 = vadd.f32 %v2524, %v2543
        %v2553 = vadd.f32 %v2525, %v2545
        %v2554 = vadd.f32 %v2526, %v2545
        %v2555 = vadd.f32 %v2527, %v2547
        %v2556 = vadd.f32 %v2528, %v2547
        %s2557 = sld [smem:[#allocation7 + $0x44]]
        %v2558 = vstv %s2557
        %v2559 = vmul.f32 %v2558, %v1918
        %v2560 = vmul.f32 %v2558, %v1920
        %v2561 = vmul.f32 %v2558, %v1922
        %v2565 = vrot.slane %v2559, 2
        %v2566 = vrot.slane %v2560, 2
        %v2567 = vsel %vm716, %v2565, %v2566
        %v2568 = vrot.slane %v2561, 2
        %v2569 = vsel %vm716, %v2566, %v2568
        %2570 = vrot.lane.b32.xlu0 %v2567, 123
        %v2571 = vpop.permute.xlu0 %2570
        %2572 = vrot.lane.b32.xlu0 %v2569, 123
        %v2573 = vpop.permute.xlu0 %2572
        %2574 = vrot.lane.b32.xlu0 %v2568, 123
        %v2575 = vpop.permute.xlu0 %2574
        %v2579 = vadd.f32 %v2551, %v2571
        %v2580 = vadd.f32 %v2552, %v2571
        %v2581 = vadd.f32 %v2553, %v2573
        %v2582 = vadd.f32 %v2554, %v2573
        %v2583 = vadd.f32 %v2555, %v2575
        %v2584 = vadd.f32 %v2556, %v2575
        %s2585 = sld [smem:[#allocation7 + $0x45]]
        %v2586 = vstv %s2585
        %v2587 = vmul.f32 %v2586, %v1918
        %v2588 = vmul.f32 %v2586, %v1920
        %v2589 = vmul.f32 %v2586, %v1922
        %v2593 = vrot.slane %v2587, 2
        %v2594 = vrot.slane %v2588, 2
        %v2595 = vsel %vm716, %v2593, %v2594
        %v2596 = vrot.slane %v2589, 2
        %v2597 = vsel %vm716, %v2594, %v2596
        %2598 = vrot.lane.b32.xlu0 %v2595, 122
        %v2599 = vpop.permute.xlu0 %2598
        %2600 = vrot.lane.b32.xlu0 %v2597, 122
        %v2601 = vpop.permute.xlu0 %2600
        %2602 = vrot.lane.b32.xlu0 %v2596, 122
        %v2603 = vpop.permute.xlu0 %2602
        %v2607 = vadd.f32 %v2579, %v2599
        %v2608 = vadd.f32 %v2580, %v2599
        %v2609 = vadd.f32 %v2581, %v2601
        %v2610 = vadd.f32 %v2582, %v2601
        %v2611 = vadd.f32 %v2583, %v2603
        %v2612 = vadd.f32 %v2584, %v2603
        %s2613 = sld [smem:[#allocation7 + $0x46]]
        %v2614 = vstv %s2613
        %v2615 = vmul.f32 %v2614, %v1919
        %v2616 = vmul.f32 %v2614, %v1920
        %v2617 = vmul.f32 %v2614, %v1921
        %v2618 = vmul.f32 %v2614, %v1922
        %v2623 = vrot.slane %v2615, 3
        %v2624 = vrot.slane %v2616, 3
        %v2625 = vrot.slane %v2617, 3
        %v2626 = vsel %vm963, %v2623, %v2625
        %v2627 = vrot.slane %v2618, 3
        %v2628 = vsel %vm963, %v2624, %v2627
        %v2635 = vadd.f32 %v2607, %v2623
        %v2636 = vadd.f32 %v2608, %v2624
        %v2637 = vadd.f32 %v2609, %v2626
        %v2638 = vadd.f32 %v2610, %v2628
        %v2639 = vadd.f32 %v2611, %v2625
        %v2640 = vadd.f32 %v2612, %v2627
        %s2641 = sld [smem:[#allocation7 + $0x47]]
        %v2642 = vstv %s2641
        %v2643 = vmul.f32 %v2642, %v1919
        %v2644 = vmul.f32 %v2642, %v1920
        %v2645 = vmul.f32 %v2642, %v1921
        %v2646 = vmul.f32 %v2642, %v1922
        %v2651 = vrot.slane %v2643, 3
        %v2652 = vrot.slane %v2644, 3
        %v2653 = vrot.slane %v2645, 3
        %v2654 = vsel %vm963, %v2651, %v2653
        %v2655 = vrot.slane %v2646, 3
        %v2656 = vsel %vm963, %v2652, %v2655
        %2657 = vrot.lane.b32.xlu0 %v2651, 127
        %v2658 = vpop.permute.xlu0 %2657
        %2659 = vrot.lane.b32.xlu0 %v2652, 127
        %v2660 = vpop.permute.xlu0 %2659
        %2661 = vrot.lane.b32.xlu0 %v2654, 127
        %v2662 = vpop.permute.xlu0 %2661
        %2663 = vrot.lane.b32.xlu0 %v2656, 127
        %v2664 = vpop.permute.xlu0 %2663
        %2665 = vrot.lane.b32.xlu0 %v2653, 127
        %v2666 = vpop.permute.xlu0 %2665
        %2667 = vrot.lane.b32.xlu0 %v2655, 127
        %v2668 = vpop.permute.xlu0 %2667
        %v2669 = vsel %vm301, %v2658, %v2660
        %v2670 = vsel %vm301, %v2662, %v2664
        %v2671 = vsel %vm301, %v2666, %v2668
        %v2678 = vadd.f32 %v2635, %v2669
        %v2679 = vadd.f32 %v2636, %v2660
        %v2680 = vadd.f32 %v2637, %v2670
        %v2681 = vadd.f32 %v2638, %v2664
        %v2682 = vadd.f32 %v2639, %v2671
        %v2683 = vadd.f32 %v2640, %v2668
        %s2684 = sld [smem:[#allocation7 + $0x48]]
        %v2685 = vstv %s2684
        %v2686 = vmul.f32 %v2685, %v1919
        %v2687 = vmul.f32 %v2685, %v1920
        %v2688 = vmul.f32 %v2685, %v1921
        %v2689 = vmul.f32 %v2685, %v1922
        %v2694 = vrot.slane %v2686, 3
        %v2695 = vrot.slane %v2687, 3
        %v2696 = vrot.slane %v2688, 3
        %v2697 = vsel %vm963, %v2694, %v2696
        %v2698 = vrot.slane %v2689, 3
        %v2699 = vsel %vm963, %v2695, %v2698
        %2700 = vrot.lane.b32.xlu0 %v2694, 126
        %v2701 = vpop.permute.xlu0 %2700
        %2702 = vrot.lane.b32.xlu0 %v2695, 126
        %v2703 = vpop.permute.xlu0 %2702
        %2704 = vrot.lane.b32.xlu0 %v2697, 126
        %v2705 = vpop.permute.xlu0 %2704
        %2706 = vrot.lane.b32.xlu0 %v2699, 126
        %v2707 = vpop.permute.xlu0 %2706
        %2708 = vrot.lane.b32.xlu0 %v2696, 126
        %v2709 = vpop.permute.xlu0 %2708
        %2710 = vrot.lane.b32.xlu0 %v2698, 126
        %v2711 = vpop.permute.xlu0 %2710
        %v2712 = vsel %vm343, %v2701, %v2703
        %v2713 = vsel %vm343, %v2705, %v2707
        %v2714 = vsel %vm343, %v2709, %v2711
        %v2721 = vadd.f32 %v2678, %v2712
        %v2722 = vadd.f32 %v2679, %v2703
        %v2723 = vadd.f32 %v2680, %v2713
        %v2724 = vadd.f32 %v2681, %v2707
        %v2725 = vadd.f32 %v2682, %v2714
        %v2726 = vadd.f32 %v2683, %v2711
        %s2727 = sld [smem:[#allocation7 + $0x49]]
        %v2728 = vstv %s2727
        %v2729 = vmul.f32 %v2728, %v1920
        %v2730 = vmul.f32 %v2728, %v1922
        %v2733 = vrot.slane %v2729, 3
        %v2734 = vrot.slane %v2730, 3
        %v2735 = vsel %vm963, %v2733, %v2734
        %2736 = vrot.lane.b32.xlu0 %v2733, 125
        %v2737 = vpop.permute.xlu0 %2736
        %2738 = vrot.lane.b32.xlu0 %v2735, 125
        %v2739 = vpop.permute.xlu0 %2738
        %2740 = vrot.lane.b32.xlu0 %v2734, 125
        %v2741 = vpop.permute.xlu0 %2740
        %v2745 = vadd.f32 %v2721, %v2737
        %v2746 = vadd.f32 %v2722, %v2737
        %v2747 = vadd.f32 %v2723, %v2739
        %v2748 = vadd.f32 %v2724, %v2739
        %v2749 = vadd.f32 %v2725, %v2741
        %v2750 = vadd.f32 %v2726, %v2741
        %s2751 = sld [smem:[#allocation7 + $0x4a]]
        %v2752 = vstv %s2751
        %v2753 = vmul.f32 %v2752, %v1920
        %v2754 = vmul.f32 %v2752, %v1922
        %v2757 = vrot.slane %v2753, 3
        %v2758 = vrot.slane %v2754, 3
        %v2759 = vsel %vm963, %v2757, %v2758
        %2760 = vrot.lane.b32.xlu0 %v2757, 124
        %v2761 = vpop.permute.xlu0 %2760
        %2762 = vrot.lane.b32.xlu0 %v2759, 124
        %v2763 = vpop.permute.xlu0 %2762
        %2764 = vrot.lane.b32.xlu0 %v2758, 124
        %v2765 = vpop.permute.xlu0 %2764
        %v2769 = vadd.f32 %v2745, %v2761
        %v2770 = vadd.f32 %v2746, %v2761
        %v2771 = vadd.f32 %v2747, %v2763
        %v2772 = vadd.f32 %v2748, %v2763
        %v2773 = vadd.f32 %v2749, %v2765
        %v2774 = vadd.f32 %v2750, %v2765
        %s2775 = sld [smem:[#allocation7 + $0x4b]]
        %v2776 = vstv %s2775
        %v2777 = vmul.f32 %v2776, %v1920
        %v2778 = vmul.f32 %v2776, %v1922
        %v2781 = vrot.slane %v2777, 3
        %v2782 = vrot.slane %v2778, 3
        %v2783 = vsel %vm963, %v2781, %v2782
        %2784 = vrot.lane.b32.xlu0 %v2781, 123
        %v2785 = vpop.permute.xlu0 %2784
        %2786 = vrot.lane.b32.xlu0 %v2783, 123
        %v2787 = vpop.permute.xlu0 %2786
        %2788 = vrot.lane.b32.xlu0 %v2782, 123
        %v2789 = vpop.permute.xlu0 %2788
        %v2793 = vadd.f32 %v2769, %v2785
        %v2794 = vadd.f32 %v2770, %v2785
        %v2795 = vadd.f32 %v2771, %v2787
        %v2796 = vadd.f32 %v2772, %v2787
        %v2797 = vadd.f32 %v2773, %v2789
        %v2798 = vadd.f32 %v2774, %v2789
        %s2799 = sld [smem:[#allocation7 + $0x4c]]
        %v2800 = vstv %s2799
        %v2801 = vmul.f32 %v2800, %v1920
        %v2802 = vmul.f32 %v2800, %v1922
        %v2805 = vrot.slane %v2801, 3
        %v2806 = vrot.slane %v2802, 3
        %v2807 = vsel %vm963, %v2805, %v2806
        %2808 = vrot.lane.b32.xlu0 %v2805, 122
        %v2809 = vpop.permute.xlu0 %2808
        %2810 = vrot.lane.b32.xlu0 %v2807, 122
        %v2811 = vpop.permute.xlu0 %2810
        %2812 = vrot.lane.b32.xlu0 %v2806, 122
        %v2813 = vpop.permute.xlu0 %2812
        %v2817 = vadd.f32 %v2793, %v2809
        %v2818 = vadd.f32 %v2794, %v2809
        %v2819 = vadd.f32 %v2795, %v2811
        %v2820 = vadd.f32 %v2796, %v2811
        %v2821 = vadd.f32 %v2797, %v2813
        %v2822 = vadd.f32 %v2798, %v2813
        %s2823 = sld [smem:[#allocation7 + $0x4d]]
        %v2824 = vstv %s2823
        %v2825 = vmul.f32 %v2824, %v1919
        %v2826 = vmul.f32 %v2824, %v1920
        %v2827 = vmul.f32 %v2824, %v1921
        %v2828 = vmul.f32 %v2824, %v1922
        %v2829 = vmul.f32 %v2824, %v1923
        %v2830 = vmul.f32 %v2824, %v1924
        %v2837 = vrot.slane %v2825, 4
        %v2838 = vrot.slane %v2826, 4
        %v2839 = vrot.slane %v2827, 4
        %v2840 = vsel %vm1178, %v2837, %v2839
        %v2841 = vrot.slane %v2828, 4
        %v2842 = vsel %vm1178, %v2838, %v2841
        %v2843 = vrot.slane %v2829, 4
        %v2844 = vsel %vm1178, %v2839, %v2843
        %v2845 = vrot.slane %v2830, 4
        %v2846 = vsel %vm1178, %v2841, %v2845
        %v2853 = vadd.f32 %v2817, %v2837
        %v2854 = vadd.f32 %v2818, %v2838
        %v2855 = vadd.f32 %v2819, %v2840
        %v2856 = vadd.f32 %v2820, %v2842
        %v2857 = vadd.f32 %v2821, %v2844
        %v2858 = vadd.f32 %v2822, %v2846
        %s2859 = sld [smem:[#allocation7 + $0x4e]]
        %v2860 = vstv %s2859
        %v2861 = vmul.f32 %v2860, %v1919
        %v2862 = vmul.f32 %v2860, %v1920
        %v2863 = vmul.f32 %v2860, %v1921
        %v2864 = vmul.f32 %v2860, %v1922
        %v2865 = vmul.f32 %v2860, %v1923
        %v2866 = vmul.f32 %v2860, %v1924
        %v2873 = vrot.slane %v2861, 4
        %v2874 = vrot.slane %v2862, 4
        %v2875 = vrot.slane %v2863, 4
        %v2876 = vsel %vm1178, %v2873, %v2875
        %v2877 = vrot.slane %v2864, 4
        %v2878 = vsel %vm1178, %v2874, %v2877
        %v2879 = vrot.slane %v2865, 4
        %v2880 = vsel %vm1178, %v2875, %v2879
        %v2881 = vrot.slane %v2866, 4
        %v2882 = vsel %vm1178, %v2877, %v2881
        %2883 = vrot.lane.b32.xlu0 %v2873, 127
        %v2884 = vpop.permute.xlu0 %2883
        %2885 = vrot.lane.b32.xlu0 %v2874, 127
        %v2886 = vpop.permute.xlu0 %2885
        %2887 = vrot.lane.b32.xlu0 %v2876, 127
        %v2888 = vpop.permute.xlu0 %2887
        %2889 = vrot.lane.b32.xlu0 %v2878, 127
        %v2890 = vpop.permute.xlu0 %2889
        %2891 = vrot.lane.b32.xlu0 %v2880, 127
        %v2892 = vpop.permute.xlu0 %2891
        %2893 = vrot.lane.b32.xlu0 %v2882, 127
        %v2894 = vpop.permute.xlu0 %2893
        %v2895 = vsel %vm301, %v2884, %v2886
        %v2896 = vsel %vm301, %v2888, %v2890
        %v2897 = vsel %vm301, %v2892, %v2894
        %v2904 = vadd.f32 %v2853, %v2895
        %v2905 = vadd.f32 %v2854, %v2886
        %v2906 = vadd.f32 %v2855, %v2896
        %v2907 = vadd.f32 %v2856, %v2890
        %v2908 = vadd.f32 %v2857, %v2897
        %v2909 = vadd.f32 %v2858, %v2894
        %s2910 = sld [smem:[#allocation7 + $0x4f]]
        %v2911 = vstv %s2910
        %v2912 = vmul.f32 %v2911, %v1919
        %v2913 = vmul.f32 %v2911, %v1920
        %v2914 = vmul.f32 %v2911, %v1921
        %v2915 = vmul.f32 %v2911, %v1922
        %v2916 = vmul.f32 %v2911, %v1923
        %v2917 = vmul.f32 %v2911, %v1924
        %v2924 = vrot.slane %v2912, 4
        %v2925 = vrot.slane %v2913, 4
        %v2926 = vrot.slane %v2914, 4
        %v2927 = vsel %vm1178, %v2924, %v2926
        %v2928 = vrot.slane %v2915, 4
        %v2929 = vsel %vm1178, %v2925, %v2928
        %v2930 = vrot.slane %v2916, 4
        %v2931 = vsel %vm1178, %v2926, %v2930
        %v2932 = vrot.slane %v2917, 4
        %v2933 = vsel %vm1178, %v2928, %v2932
        %2934 = vrot.lane.b32.xlu0 %v2924, 126
        %v2935 = vpop.permute.xlu0 %2934
        %2936 = vrot.lane.b32.xlu0 %v2925, 126
        %v2937 = vpop.permute.xlu0 %2936
        %2938 = vrot.lane.b32.xlu0 %v2927, 126
        %v2939 = vpop.permute.xlu0 %2938
        %2940 = vrot.lane.b32.xlu0 %v2929, 126
        %v2941 = vpop.permute.xlu0 %2940
        %2942 = vrot.lane.b32.xlu0 %v2931, 126
        %v2943 = vpop.permute.xlu0 %2942
        %2944 = vrot.lane.b32.xlu0 %v2933, 126
        %v2945 = vpop.permute.xlu0 %2944
        %v2946 = vsel %vm343, %v2935, %v2937
        %v2947 = vsel %vm343, %v2939, %v2941
        %v2948 = vsel %vm343, %v2943, %v2945
        %v2955 = vadd.f32 %v2904, %v2946
        %v2956 = vadd.f32 %v2905, %v2937
        %v2957 = vadd.f32 %v2906, %v2947
        %v2958 = vadd.f32 %v2907, %v2941
        %v2959 = vadd.f32 %v2908, %v2948
        %v2960 = vadd.f32 %v2909, %v2945
        %s2961 = sld [smem:[#allocation7 + $0x50]]
        %v2962 = vstv %s2961
        %v2963 = vmul.f32 %v2962, %v1920
        %v2964 = vmul.f32 %v2962, %v1922
        %v2965 = vmul.f32 %v2962, %v1924
        %v2969 = vrot.slane %v2963, 4
        %v2970 = vrot.slane %v2964, 4
        %v2971 = vsel %vm1178, %v2969, %v2970
        %v2972 = vrot.slane %v2965, 4
        %v2973 = vsel %vm1178, %v2970, %v2972
        %2974 = vrot.lane.b32.xlu0 %v2969, 125
        %v2975 = vpop.permute.xlu0 %2974
        %2976 = vrot.lane.b32.xlu0 %v2971, 125
        %v2977 = vpop.permute.xlu0 %2976
        %2978 = vrot.lane.b32.xlu0 %v2973, 125
        %v2979 = vpop.permute.xlu0 %2978
        %v2983 = vadd.f32 %v2955, %v2975
        %v2984 = vadd.f32 %v2956, %v2975
        %v2985 = vadd.f32 %v2957, %v2977
        %v2986 = vadd.f32 %v2958, %v2977
        %v2987 = vadd.f32 %v2959, %v2979
        %v2988 = vadd.f32 %v2960, %v2979
        %s2989 = sld [smem:[#allocation7 + $0x51]]
        %v2990 = vstv %s2989
        %v2991 = vmul.f32 %v2990, %v1920
        %v2992 = vmul.f32 %v2990, %v1922
        %v2993 = vmul.f32 %v2990, %v1924
        %v2997 = vrot.slane %v2991, 4
        %v2998 = vrot.slane %v2992, 4
        %v2999 = vsel %vm1178, %v2997, %v2998
        %v3000 = vrot.slane %v2993, 4
        %v3001 = vsel %vm1178, %v2998, %v3000
        %3002 = vrot.lane.b32.xlu0 %v2997, 124
        %v3003 = vpop.permute.xlu0 %3002
        %3004 = vrot.lane.b32.xlu0 %v2999, 124
        %v3005 = vpop.permute.xlu0 %3004
        %3006 = vrot.lane.b32.xlu0 %v3001, 124
        %v3007 = vpop.permute.xlu0 %3006
        %v3011 = vadd.f32 %v2983, %v3003
        %v3012 = vadd.f32 %v2984, %v3003
        %v3013 = vadd.f32 %v2985, %v3005
        %v3014 = vadd.f32 %v2986, %v3005
        %v3015 = vadd.f32 %v2987, %v3007
        %v3016 = vadd.f32 %v2988, %v3007
        %s3017 = sld [smem:[#allocation7 + $0x52]]
        %v3018 = vstv %s3017
        %v3019 = vmul.f32 %v3018, %v1920
        %v3020 = vmul.f32 %v3018, %v1922
        %v3021 = vmul.f32 %v3018, %v1924
        %v3025 = vrot.slane %v3019, 4
        %v3026 = vrot.slane %v3020, 4
        %v3027 = vsel %vm1178, %v3025, %v3026
        %v3028 = vrot.slane %v3021, 4
        %v3029 = vsel %vm1178, %v3026, %v3028
        %3030 = vrot.lane.b32.xlu0 %v3025, 123
        %v3031 = vpop.permute.xlu0 %3030
        %3032 = vrot.lane.b32.xlu0 %v3027, 123
        %v3033 = vpop.permute.xlu0 %3032
        %3034 = vrot.lane.b32.xlu0 %v3029, 123
        %v3035 = vpop.permute.xlu0 %3034
        %v3039 = vadd.f32 %v3011, %v3031
        %v3040 = vadd.f32 %v3012, %v3031
        %v3041 = vadd.f32 %v3013, %v3033
        %v3042 = vadd.f32 %v3014, %v3033
        %v3043 = vadd.f32 %v3015, %v3035
        %v3044 = vadd.f32 %v3016, %v3035
        %s3045 = sld [smem:[#allocation7 + $0x53]]
        %v3046 = vstv %s3045
        %v3047 = vmul.f32 %v3046, %v1920
        %v3048 = vmul.f32 %v3046, %v1922
        %v3049 = vmul.f32 %v3046, %v1924
        %v3053 = vrot.slane %v3047, 4
        %v3054 = vrot.slane %v3048, 4
        %v3055 = vsel %vm1178, %v3053, %v3054
        %v3056 = vrot.slane %v3049, 4
        %v3057 = vsel %vm1178, %v3054, %v3056
        %3058 = vrot.lane.b32.xlu0 %v3053, 122
        %v3059 = vpop.permute.xlu0 %3058
        %3060 = vrot.lane.b32.xlu0 %v3055, 122
        %v3061 = vpop.permute.xlu0 %3060
        %3062 = vrot.lane.b32.xlu0 %v3057, 122
        %v3063 = vpop.permute.xlu0 %3062
        %v3067 = vadd.f32 %v3039, %v3059
        %v3068 = vadd.f32 %v3040, %v3059
        %v3069 = vadd.f32 %v3041, %v3061
        %v3070 = vadd.f32 %v3042, %v3061
        %v3071 = vadd.f32 %v3043, %v3063
        %v3072 = vadd.f32 %v3044, %v3063
        %s3073 = sld [smem:[#allocation7 + $0x54]]
        %v3074 = vstv %s3073
        %v3075 = vmul.f32 %v3074, %v1919
        %v3076 = vmul.f32 %v3074, %v1920
        %v3077 = vmul.f32 %v3074, %v1921
        %v3078 = vmul.f32 %v3074, %v1922
        %v3079 = vmul.f32 %v3074, %v1923
        %v3080 = vmul.f32 %v3074, %v1924
        %v3087 = vrot.slane %v3075, 5
        %v3088 = vrot.slane %v3076, 5
        %v3089 = vrot.slane %v3077, 5
        %v3090 = vsel %vm1429, %v3087, %v3089
        %v3091 = vrot.slane %v3078, 5
        %v3092 = vsel %vm1429, %v3088, %v3091
        %v3093 = vrot.slane %v3079, 5
        %v3094 = vsel %vm1429, %v3089, %v3093
        %v3095 = vrot.slane %v3080, 5
        %v3096 = vsel %vm1429, %v3091, %v3095
        %v3103 = vadd.f32 %v3067, %v3087
        %v3104 = vadd.f32 %v3068, %v3088
        %v3105 = vadd.f32 %v3069, %v3090
        %v3106 = vadd.f32 %v3070, %v3092
        %v3107 = vadd.f32 %v3071, %v3094
        %v3108 = vadd.f32 %v3072, %v3096
        %s3109 = sld [smem:[#allocation7 + $0x55]]
        %v3110 = vstv %s3109
        %v3111 = vmul.f32 %v3110, %v1919
        %v3112 = vmul.f32 %v3110, %v1920
        %v3113 = vmul.f32 %v3110, %v1921
        %v3114 = vmul.f32 %v3110, %v1922
        %v3115 = vmul.f32 %v3110, %v1923
        %v3116 = vmul.f32 %v3110, %v1924
        %v3123 = vrot.slane %v3111, 5
        %v3124 = vrot.slane %v3112, 5
        %v3125 = vrot.slane %v3113, 5
        %v3126 = vsel %vm1429, %v3123, %v3125
        %v3127 = vrot.slane %v3114, 5
        %v3128 = vsel %vm1429, %v3124, %v3127
        %v3129 = vrot.slane %v3115, 5
        %v3130 = vsel %vm1429, %v3125, %v3129
        %v3131 = vrot.slane %v3116, 5
        %v3132 = vsel %vm1429, %v3127, %v3131
        %3133 = vrot.lane.b32.xlu0 %v3123, 127
        %v3134 = vpop.permute.xlu0 %3133
        %3135 = vrot.lane.b32.xlu0 %v3124, 127
        %v3136 = vpop.permute.xlu0 %3135
        %3137 = vrot.lane.b32.xlu0 %v3126, 127
        %v3138 = vpop.permute.xlu0 %3137
        %3139 = vrot.lane.b32.xlu0 %v3128, 127
        %v3140 = vpop.permute.xlu0 %3139
        %3141 = vrot.lane.b32.xlu0 %v3130, 127
        %v3142 = vpop.permute.xlu0 %3141
        %3143 = vrot.lane.b32.xlu0 %v3132, 127
        %v3144 = vpop.permute.xlu0 %3143
        %v3145 = vsel %vm301, %v3134, %v3136
        %v3146 = vsel %vm301, %v3138, %v3140
        %v3147 = vsel %vm301, %v3142, %v3144
        %v3154 = vadd.f32 %v3103, %v3145
        %v3155 = vadd.f32 %v3104, %v3136
        %v3156 = vadd.f32 %v3105, %v3146
        %v3157 = vadd.f32 %v3106, %v3140
        %v3158 = vadd.f32 %v3107, %v3147
        %v3159 = vadd.f32 %v3108, %v3144
        %s3160 = sld [smem:[#allocation7 + $0x56]]
        %v3161 = vstv %s3160
        %v3162 = vmul.f32 %v3161, %v1919
        %v3163 = vmul.f32 %v3161, %v1920
        %v3164 = vmul.f32 %v3161, %v1921
        %v3165 = vmul.f32 %v3161, %v1922
        %v3166 = vmul.f32 %v3161, %v1923
        %v3167 = vmul.f32 %v3161, %v1924
        %v3174 = vrot.slane %v3162, 5
        %v3175 = vrot.slane %v3163, 5
        %v3176 = vrot.slane %v3164, 5
        %v3177 = vsel %vm1429, %v3174, %v3176
        %v3178 = vrot.slane %v3165, 5
        %v3179 = vsel %vm1429, %v3175, %v3178
        %v3180 = vrot.slane %v3166, 5
        %v3181 = vsel %vm1429, %v3176, %v3180
        %v3182 = vrot.slane %v3167, 5
        %v3183 = vsel %vm1429, %v3178, %v3182
        %3184 = vrot.lane.b32.xlu0 %v3174, 126
        %v3185 = vpop.permute.xlu0 %3184
        %3186 = vrot.lane.b32.xlu0 %v3175, 126
        %v3187 = vpop.permute.xlu0 %3186
        %3188 = vrot.lane.b32.xlu0 %v3177, 126
        %v3189 = vpop.permute.xlu0 %3188
        %3190 = vrot.lane.b32.xlu0 %v3179, 126
        %v3191 = vpop.permute.xlu0 %3190
        %3192 = vrot.lane.b32.xlu0 %v3181, 126
        %v3193 = vpop.permute.xlu0 %3192
        %3194 = vrot.lane.b32.xlu0 %v3183, 126
        %v3195 = vpop.permute.xlu0 %3194
        %v3196 = vsel %vm343, %v3185, %v3187
        %v3197 = vsel %vm343, %v3189, %v3191
        %v3198 = vsel %vm343, %v3193, %v3195
        %v3205 = vadd.f32 %v3154, %v3196
        %v3206 = vadd.f32 %v3155, %v3187
        %v3207 = vadd.f32 %v3156, %v3197
        %v3208 = vadd.f32 %v3157, %v3191
        %v3209 = vadd.f32 %v3158, %v3198
        %v3210 = vadd.f32 %v3159, %v3195
        %s3211 = sld [smem:[#allocation7 + $0x57]]
        %v3212 = vstv %s3211
        %v3213 = vmul.f32 %v3212, %v1920
        %v3214 = vmul.f32 %v3212, %v1922
        %v3215 = vmul.f32 %v3212, %v1924
        %v3219 = vrot.slane %v3213, 5
        %v3220 = vrot.slane %v3214, 5
        %v3221 = vsel %vm1429, %v3219, %v3220
        %v3222 = vrot.slane %v3215, 5
        %v3223 = vsel %vm1429, %v3220, %v3222
        %3224 = vrot.lane.b32.xlu0 %v3219, 125
        %v3225 = vpop.permute.xlu0 %3224
        %3226 = vrot.lane.b32.xlu0 %v3221, 125
        %v3227 = vpop.permute.xlu0 %3226
        %3228 = vrot.lane.b32.xlu0 %v3223, 125
        %v3229 = vpop.permute.xlu0 %3228
        %v3233 = vadd.f32 %v3205, %v3225
        %v3234 = vadd.f32 %v3206, %v3225
        %v3235 = vadd.f32 %v3207, %v3227
        %v3236 = vadd.f32 %v3208, %v3227
        %v3237 = vadd.f32 %v3209, %v3229
        %v3238 = vadd.f32 %v3210, %v3229
        %s3239 = sld [smem:[#allocation7 + $0x58]]
        %v3240 = vstv %s3239
        %v3241 = vmul.f32 %v3240, %v1920
        %v3242 = vmul.f32 %v3240, %v1922
        %v3243 = vmul.f32 %v3240, %v1924
        %v3247 = vrot.slane %v3241, 5
        %v3248 = vrot.slane %v3242, 5
        %v3249 = vsel %vm1429, %v3247, %v3248
        %v3250 = vrot.slane %v3243, 5
        %v3251 = vsel %vm1429, %v3248, %v3250
        %3252 = vrot.lane.b32.xlu0 %v3247, 124
        %v3253 = vpop.permute.xlu0 %3252
        %3254 = vrot.lane.b32.xlu0 %v3249, 124
        %v3255 = vpop.permute.xlu0 %3254
        %3256 = vrot.lane.b32.xlu0 %v3251, 124
        %v3257 = vpop.permute.xlu0 %3256
        %v3261 = vadd.f32 %v3233, %v3253
        %v3262 = vadd.f32 %v3234, %v3253
        %v3263 = vadd.f32 %v3235, %v3255
        %v3264 = vadd.f32 %v3236, %v3255
        %v3265 = vadd.f32 %v3237, %v3257
        %v3266 = vadd.f32 %v3238, %v3257
        %s3267 = sld [smem:[#allocation7 + $0x59]]
        %v3268 = vstv %s3267
        %v3269 = vmul.f32 %v3268, %v1920
        %v3270 = vmul.f32 %v3268, %v1922
        %v3271 = vmul.f32 %v3268, %v1924
        %v3275 = vrot.slane %v3269, 5
        %v3276 = vrot.slane %v3270, 5
        %v3277 = vsel %vm1429, %v3275, %v3276
        %v3278 = vrot.slane %v3271, 5
        %v3279 = vsel %vm1429, %v3276, %v3278
        %3280 = vrot.lane.b32.xlu0 %v3275, 123
        %v3281 = vpop.permute.xlu0 %3280
        %3282 = vrot.lane.b32.xlu0 %v3277, 123
        %v3283 = vpop.permute.xlu0 %3282
        %3284 = vrot.lane.b32.xlu0 %v3279, 123
        %v3285 = vpop.permute.xlu0 %3284
        %v3289 = vadd.f32 %v3261, %v3281
        %v3290 = vadd.f32 %v3262, %v3281
        %v3291 = vadd.f32 %v3263, %v3283
        %v3292 = vadd.f32 %v3264, %v3283
        %v3293 = vadd.f32 %v3265, %v3285
        %v3294 = vadd.f32 %v3266, %v3285
        %s3295 = sld [smem:[#allocation7 + $0x5a]]
        %v3296 = vstv %s3295
        %v3297 = vmul.f32 %v3296, %v1920
        %v3298 = vmul.f32 %v3296, %v1922
        %v3299 = vmul.f32 %v3296, %v1924
        %v3303 = vrot.slane %v3297, 5
        %v3304 = vrot.slane %v3298, 5
        %v3305 = vsel %vm1429, %v3303, %v3304
        %v3306 = vrot.slane %v3299, 5
        %v3307 = vsel %vm1429, %v3304, %v3306
        %3308 = vrot.lane.b32.xlu0 %v3303, 122
        %v3309 = vpop.permute.xlu0 %3308
        %3310 = vrot.lane.b32.xlu0 %v3305, 122
        %v3311 = vpop.permute.xlu0 %3310
        %3312 = vrot.lane.b32.xlu0 %v3307, 122
        %v3313 = vpop.permute.xlu0 %3312
        %v3317 = vadd.f32 %v3289, %v3309
        %v3318 = vadd.f32 %v3290, %v3309
        %v3319 = vadd.f32 %v3291, %v3311
        %v3320 = vadd.f32 %v3292, %v3311
        %v3321 = vadd.f32 %v3293, %v3313
        %v3322 = vadd.f32 %v3294, %v3313
        %s3323 = sld [smem:[#allocation7 + $0x5b]]
        %v3324 = vstv %s3323
        %v3325 = vmul.f32 %v3324, %v1919
        %v3326 = vmul.f32 %v3324, %v1920
        %v3327 = vmul.f32 %v3324, %v1921
        %v3328 = vmul.f32 %v3324, %v1922
        %v3329 = vmul.f32 %v3324, %v1923
        %v3330 = vmul.f32 %v3324, %v1924
        %v3337 = vrot.slane %v3325, 6
        %v3338 = vrot.slane %v3326, 6
        %v3339 = vrot.slane %v3327, 6
        %v3340 = vsel %vm1680, %v3337, %v3339
        %v3341 = vrot.slane %v3328, 6
        %v3342 = vsel %vm1680, %v3338, %v3341
        %v3343 = vrot.slane %v3329, 6
        %v3344 = vsel %vm1680, %v3339, %v3343
        %v3345 = vrot.slane %v3330, 6
        %v3346 = vsel %vm1680, %v3341, %v3345
        %v3353 = vadd.f32 %v3317, %v3337
        %v3354 = vadd.f32 %v3318, %v3338
        %v3355 = vadd.f32 %v3319, %v3340
        %v3356 = vadd.f32 %v3320, %v3342
        %v3357 = vadd.f32 %v3321, %v3344
        %v3358 = vadd.f32 %v3322, %v3346
        %s3359 = sld [smem:[#allocation7 + $0x5c]]
        %v3360 = vstv %s3359
        %v3361 = vmul.f32 %v3360, %v1919
        %v3362 = vmul.f32 %v3360, %v1920
        %v3363 = vmul.f32 %v3360, %v1921
        %v3364 = vmul.f32 %v3360, %v1922
        %v3365 = vmul.f32 %v3360, %v1923
        %v3366 = vmul.f32 %v3360, %v1924
        %v3373 = vrot.slane %v3361, 6
        %v3374 = vrot.slane %v3362, 6
        %v3375 = vrot.slane %v3363, 6
        %v3376 = vsel %vm1680, %v3373, %v3375
        %v3377 = vrot.slane %v3364, 6
        %v3378 = vsel %vm1680, %v3374, %v3377
        %v3379 = vrot.slane %v3365, 6
        %v3380 = vsel %vm1680, %v3375, %v3379
        %v3381 = vrot.slane %v3366, 6
        %v3382 = vsel %vm1680, %v3377, %v3381
        %3383 = vrot.lane.b32.xlu0 %v3373, 127
        %v3384 = vpop.permute.xlu0 %3383
        %3385 = vrot.lane.b32.xlu0 %v3374, 127
        %v3386 = vpop.permute.xlu0 %3385
        %3387 = vrot.lane.b32.xlu0 %v3376, 127
        %v3388 = vpop.permute.xlu0 %3387
        %3389 = vrot.lane.b32.xlu0 %v3378, 127
        %v3390 = vpop.permute.xlu0 %3389
        %3391 = vrot.lane.b32.xlu0 %v3380, 127
        %v3392 = vpop.permute.xlu0 %3391
        %3393 = vrot.lane.b32.xlu0 %v3382, 127
        %v3394 = vpop.permute.xlu0 %3393
        %v3395 = vsel %vm301, %v3384, %v3386
        %v3396 = vsel %vm301, %v3388, %v3390
        %v3397 = vsel %vm301, %v3392, %v3394
        %v3404 = vadd.f32 %v3353, %v3395
        %v3405 = vadd.f32 %v3354, %v3386
        %v3406 = vadd.f32 %v3355, %v3396
        %v3407 = vadd.f32 %v3356, %v3390
        %v3408 = vadd.f32 %v3357, %v3397
        %v3409 = vadd.f32 %v3358, %v3394
        %s3410 = sld [smem:[#allocation7 + $0x5d]]
        %v3411 = vstv %s3410
        %v3412 = vmul.f32 %v3411, %v1919
        %v3413 = vmul.f32 %v3411, %v1920
        %v3414 = vmul.f32 %v3411, %v1921
        %v3415 = vmul.f32 %v3411, %v1922
        %v3416 = vmul.f32 %v3411, %v1923
        %v3417 = vmul.f32 %v3411, %v1924
        %v3424 = vrot.slane %v3412, 6
        %v3425 = vrot.slane %v3413, 6
        %v3426 = vrot.slane %v3414, 6
        %v3427 = vsel %vm1680, %v3424, %v3426
        %v3428 = vrot.slane %v3415, 6
        %v3429 = vsel %vm1680, %v3425, %v3428
        %v3430 = vrot.slane %v3416, 6
        %v3431 = vsel %vm1680, %v3426, %v3430
        %v3432 = vrot.slane %v3417, 6
        %v3433 = vsel %vm1680, %v3428, %v3432
        %3434 = vrot.lane.b32.xlu0 %v3424, 126
        %v3435 = vpop.permute.xlu0 %3434
        %3436 = vrot.lane.b32.xlu0 %v3425, 126
        %v3437 = vpop.permute.xlu0 %3436
        %3438 = vrot.lane.b32.xlu0 %v3427, 126
        %v3439 = vpop.permute.xlu0 %3438
        %3440 = vrot.lane.b32.xlu0 %v3429, 126
        %v3441 = vpop.permute.xlu0 %3440
        %3442 = vrot.lane.b32.xlu0 %v3431, 126
        %v3443 = vpop.permute.xlu0 %3442
        %3444 = vrot.lane.b32.xlu0 %v3433, 126
        %v3445 = vpop.permute.xlu0 %3444
        %v3446 = vsel %vm343, %v3435, %v3437
        %v3447 = vsel %vm343, %v3439, %v3441
        %v3448 = vsel %vm343, %v3443, %v3445
        %v3455 = vadd.f32 %v3404, %v3446
        %v3456 = vadd.f32 %v3405, %v3437
        %v3457 = vadd.f32 %v3406, %v3447
        %v3458 = vadd.f32 %v3407, %v3441
        %v3459 = vadd.f32 %v3408, %v3448
        %v3460 = vadd.f32 %v3409, %v3445
        %s3461 = sld [smem:[#allocation7 + $0x5e]]
        %v3462 = vstv %s3461
        %v3463 = vmul.f32 %v3462, %v1920
        %v3464 = vmul.f32 %v3462, %v1922
        %v3465 = vmul.f32 %v3462, %v1924
        %v3469 = vrot.slane %v3463, 6
        %v3470 = vrot.slane %v3464, 6
        %v3471 = vsel %vm1680, %v3469, %v3470
        %v3472 = vrot.slane %v3465, 6
        %v3473 = vsel %vm1680, %v3470, %v3472
        %3474 = vrot.lane.b32.xlu0 %v3469, 125
        %v3475 = vpop.permute.xlu0 %3474
        %3476 = vrot.lane.b32.xlu0 %v3471, 125
        %v3477 = vpop.permute.xlu0 %3476
        %3478 = vrot.lane.b32.xlu0 %v3473, 125
        %v3479 = vpop.permute.xlu0 %3478
        %v3483 = vadd.f32 %v3455, %v3475
        %v3484 = vadd.f32 %v3456, %v3475
        %v3485 = vadd.f32 %v3457, %v3477
        %v3486 = vadd.f32 %v3458, %v3477
        %v3487 = vadd.f32 %v3459, %v3479
        %v3488 = vadd.f32 %v3460, %v3479
        %s3489 = sld [smem:[#allocation7 + $0x5f]]
        %v3490 = vstv %s3489
        %v3491 = vmul.f32 %v3490, %v1920
        %v3492 = vmul.f32 %v3490, %v1922
        %v3493 = vmul.f32 %v3490, %v1924
        %v3497 = vrot.slane %v3491, 6
        %v3498 = vrot.slane %v3492, 6
        %v3499 = vsel %vm1680, %v3497, %v3498
        %v3500 = vrot.slane %v3493, 6
        %v3501 = vsel %vm1680, %v3498, %v3500
        %3502 = vrot.lane.b32.xlu0 %v3497, 124
        %v3503 = vpop.permute.xlu0 %3502
        %3504 = vrot.lane.b32.xlu0 %v3499, 124
        %v3505 = vpop.permute.xlu0 %3504
        %3506 = vrot.lane.b32.xlu0 %v3501, 124
        %v3507 = vpop.permute.xlu0 %3506
        %v3511 = vadd.f32 %v3483, %v3503
        %v3512 = vadd.f32 %v3484, %v3503
        %v3513 = vadd.f32 %v3485, %v3505
        %v3514 = vadd.f32 %v3486, %v3505
        %v3515 = vadd.f32 %v3487, %v3507
        %v3516 = vadd.f32 %v3488, %v3507
        %s3517 = sld [smem:[#allocation7 + $0x60]]
        %v3518 = vstv %s3517
        %v3519 = vmul.f32 %v3518, %v1920
        %v3520 = vmul.f32 %v3518, %v1922
        %v3521 = vmul.f32 %v3518, %v1924
        %v3525 = vrot.slane %v3519, 6
        %v3526 = vrot.slane %v3520, 6
        %v3527 = vsel %vm1680, %v3525, %v3526
        %v3528 = vrot.slane %v3521, 6
        %v3529 = vsel %vm1680, %v3526, %v3528
        %3530 = vrot.lane.b32.xlu0 %v3525, 123
        %v3531 = vpop.permute.xlu0 %3530
        %3532 = vrot.lane.b32.xlu0 %v3527, 123
        %v3533 = vpop.permute.xlu0 %3532
        %3534 = vrot.lane.b32.xlu0 %v3529, 123
        %v3535 = vpop.permute.xlu0 %3534
        %v3539 = vadd.f32 %v3511, %v3531
        %v3540 = vadd.f32 %v3512, %v3531
        %v3541 = vadd.f32 %v3513, %v3533
        %v3542 = vadd.f32 %v3514, %v3533
        %v3543 = vadd.f32 %v3515, %v3535
        %v3544 = vadd.f32 %v3516, %v3535
        %s3545 = sld [smem:[#allocation7 + $0x61]]
        %v3546 = vstv %s3545
        %v3547 = vmul.f32 %v3546, %v1920
        %v3548 = vmul.f32 %v3546, %v1922
        %v3549 = vmul.f32 %v3546, %v1924
        %v3553 = vrot.slane %v3547, 6
        %v3554 = vrot.slane %v3548, 6
        %v3555 = vsel %vm1680, %v3553, %v3554
        %v3556 = vrot.slane %v3549, 6
        %v3557 = vsel %vm1680, %v3554, %v3556
        %3558 = vrot.lane.b32.xlu0 %v3553, 122
        %v3559 = vpop.permute.xlu0 %3558
        %3560 = vrot.lane.b32.xlu0 %v3555, 122
        %v3561 = vpop.permute.xlu0 %3560
        %3562 = vrot.lane.b32.xlu0 %v3557, 122
        %v3563 = vpop.permute.xlu0 %3562
        %v3567 = vadd.f32 %v3539, %v3559
        %v3568 = vadd.f32 %v3540, %v3559
        %v3569 = vadd.f32 %v3541, %v3561
        %v3570 = vadd.f32 %v3542, %v3561
        %v3571 = vadd.f32 %v3543, %v3563
        %v3572 = vadd.f32 %v3544, %v3563
        %v3573 = vsub.f32 0.0, %v3567
        %v3574 = vsub.f32 0.0, %v3568
        %v3575 = vsub.f32 0.0, %v3569
        %v3576 = vsub.f32 0.0, %v3570
        %v3577 = vsub.f32 0.0, %v3571
        %v3578 = vsub.f32 0.0, %v3572
        %v3579 = vmul.f32 %v3573, 1.442695
        %v3580 = vpow.pop %v3579
        %v3581 = vmul.f32 %v3574, 1.442695
        %v3582 = vpow.pop %v3581
        %v3583 = vmul.f32 %v3575, 1.442695
        %v3584 = vpow.pop %v3583
        %v3585 = vmul.f32 %v3576, 1.442695
        %v3586 = vpow.pop %v3585
        %v3587 = vmul.f32 %v3577, 1.442695
        %v3588 = vpow.pop %v3587
        %v3589 = vmul.f32 %v3578, 1.442695
        %v3590 = vpow.pop %v3589
        %v3591 = vadd.f32 %v3580, 1.0
        %v3592 = vadd.f32 %v3582, 1.0
        %v3593 = vadd.f32 %v3584, 1.0
        %v3594 = vadd.f32 %v3586, 1.0
        %v3595 = vadd.f32 %v3588, 1.0
        %v3596 = vadd.f32 %v3590, 1.0
        %v3597 = vrcp.pop %v3591
        %v3598 = vmul.f32 %v3591, %v3597
        %v3599 = vsub.f32 1.0, %v3598
        %v3600 = vmul.f32 %v3597, %v3599
        %v3601 = vadd.f32 %v3597, %v3600
        %vm3602 = vweird.f32 %v3591
        %vm3603 = vweird.f32 %v3597
        %vm3604 = vmor %vm3602, %vm3603
        %v3605 = vsel %vm3604, %v3597, %v3601
        %v3606 = vand.u32 2147483647, %v3591
        %vm3607 = vcmp.eq.f32.partialorder %v3606, 8.507059e+37
        %v3608 = vand.u32 %v3591, 2147483648
        %v3609 = vor.u32 1.1754944e-38, %v3608
        %v3610 = vsel %vm3607, %v3609, %v3605
        %v3611 = vmul.f32 1.0, %v3610
        %v3612 = vrcp.pop %v3592
        %v3613 = vmul.f32 %v3592, %v3612
        %v3614 = vsub.f32 1.0, %v3613
        %v3615 = vmul.f32 %v3612, %v3614
        %v3616 = vadd.f32 %v3612, %v3615
        %vm3617 = vweird.f32 %v3592
        %vm3618 = vweird.f32 %v3612
        %vm3619 = vmor %vm3617, %vm3618
        %v3620 = vsel %vm3619, %v3612, %v3616
        %v3621 = vand.u32 2147483647, %v3592
        %vm3622 = vcmp.eq.f32.partialorder %v3621, 8.507059e+37
        %v3623 = vand.u32 %v3592, 2147483648
        %v3624 = vor.u32 1.1754944e-38, %v3623
        %v3625 = vsel %vm3622, %v3624, %v3620
        %v3626 = vmul.f32 1.0, %v3625
        %v3627 = vrcp.pop %v3593
        %v3628 = vmul.f32 %v3593, %v3627
        %v3629 = vsub.f32 1.0, %v3628
        %v3630 = vmul.f32 %v3627, %v3629
        %v3631 = vadd.f32 %v3627, %v3630
        %vm3632 = vweird.f32 %v3593
        %vm3633 = vweird.f32 %v3627
        %vm3634 = vmor %vm3632, %vm3633
        %v3635 = vsel %vm3634, %v3627, %v3631
        %v3636 = vand.u32 2147483647, %v3593
        %vm3637 = vcmp.eq.f32.partialorder %v3636, 8.507059e+37
        %v3638 = vand.u32 %v3593, 2147483648
        %v3639 = vor.u32 1.1754944e-38, %v3638
        %v3640 = vsel %vm3637, %v3639, %v3635
        %v3641 = vmul.f32 1.0, %v3640
        %v3642 = vrcp.pop %v3594
        %v3643 = vmul.f32 %v3594, %v3642
        %v3644 = vsub.f32 1.0, %v3643
        %v3645 = vmul.f32 %v3642, %v3644
        %v3646 = vadd.f32 %v3642, %v3645
        %vm3647 = vweird.f32 %v3594
        %vm3648 = vweird.f32 %v3642
        %vm3649 = vmor %vm3647, %vm3648
        %v3650 = vsel %vm3649, %v3642, %v3646
        %v3651 = vand.u32 2147483647, %v3594
        %vm3652 = vcmp.eq.f32.partialorder %v3651, 8.507059e+37
        %v3653 = vand.u32 %v3594, 2147483648
        %v3654 = vor.u32 1.1754944e-38, %v3653
        %v3655 = vsel %vm3652, %v3654, %v3650
        %v3656 = vmul.f32 1.0, %v3655
        %v3657 = vrcp.pop %v3595
        %v3658 = vmul.f32 %v3595, %v3657
        %v3659 = vsub.f32 1.0, %v3658
        %v3660 = vmul.f32 %v3657, %v3659
        %v3661 = vadd.f32 %v3657, %v3660
        %vm3662 = vweird.f32 %v3595
        %vm3663 = vweird.f32 %v3657
        %vm3664 = vmor %vm3662, %vm3663
        %v3665 = vsel %vm3664, %v3657, %v3661
        %v3666 = vand.u32 2147483647, %v3595
        %vm3667 = vcmp.eq.f32.partialorder %v3666, 8.507059e+37
        %v3668 = vand.u32 %v3595, 2147483648
        %v3669 = vor.u32 1.1754944e-38, %v3668
        %v3670 = vsel %vm3667, %v3669, %v3665
        %v3671 = vmul.f32 1.0, %v3670
        %v3672 = vrcp.pop %v3596
        %v3673 = vmul.f32 %v3596, %v3672
        %v3674 = vsub.f32 1.0, %v3673
        %v3675 = vmul.f32 %v3672, %v3674
        %v3676 = vadd.f32 %v3672, %v3675
        %vm3677 = vweird.f32 %v3596
        %vm3678 = vweird.f32 %v3672
        %vm3679 = vmor %vm3677, %vm3678
        %v3680 = vsel %vm3679, %v3672, %v3676
        %v3681 = vand.u32 2147483647, %v3596
        %vm3682 = vcmp.eq.f32.partialorder %v3681, 8.507059e+37
        %v3683 = vand.u32 %v3596, 2147483648
        %v3684 = vor.u32 1.1754944e-38, %v3683
        %v3685 = vsel %vm3682, %v3684, %v3680
        %v3686 = vmul.f32 1.0, %v3685
        %v3693 = vrot.slane %v3611, 5
        %v3694 = vrot.slane %v3641, 5
        %v3695 = vsel %vm1429, %v3693, %v3694
        %v3696 = vrot.slane %v3626, 5
        %v3697 = vrot.slane %v3656, 5
        %v3698 = vsel %vm1429, %v3696, %v3697
        %v3699 = vrot.slane %v3671, 5
        %v3700 = vsel %vm1429, %v3694, %v3699
        %v3701 = vrot.slane %v3686, 5
        %v3702 = vsel %vm1429, %v3697, %v3701
        %3703 = vrot.lane.b32.xlu0 %v3695, 3
        %v3704 = vpop.permute.xlu0 %3703
        %3705 = vrot.lane.b32.xlu0 %v3698, 3
        %v3706 = vpop.permute.xlu0 %3705
        %3707 = vrot.lane.b32.xlu0 %v3700, 3
        %v3708 = vpop.permute.xlu0 %3707
        %3709 = vrot.lane.b32.xlu0 %v3702, 3
        %v3710 = vpop.permute.xlu0 %3709
        %vm3711 = vcmask 23552
        %v3712 = vsel %vm3711, %v3704, %v3706
        %v3713 = vsel %vm3711, %v3708, %v3710
        %v3716 = vmul.f32 %v178, %v3712
        %v3717 = vmul.f32 %v179, %v3713
        %v3718 = vmul.f32 %v180, %v3712
        %v3719 = vmul.f32 %v181, %v3713
        %v3720 = vmul.f32 %v182, %v3712
        %v3721 = vmul.f32 %v183, %v3713
        %v3722 = vmul.f32 %v184, %v3712
        %v3723 = vmul.f32 %v185, %v3713
        %3724 = vst.msk [vmem:[%s177] sm:$0xff] %vm186, %v3716
        %3725 = vst.msk [vmem:[%s177 + $0x8] sm:$0xff] %vm186, %v3717
        %3726 = vst.msk [vmem:[%s177 + $0x10] sm:$0xff] %vm186, %v3718
        %3727 = vst.msk [vmem:[%s177 + $0x18] sm:$0xff] %vm186, %v3719
        %3728 = vst.msk [vmem:[%s177 + $0x20] sm:$0xff] %vm186, %v3720
        %3729 = vst.msk [vmem:[%s177 + $0x28] sm:$0xff] %vm186, %v3721
        %3730 = vst.msk [vmem:[%s177 + $0x30] sm:$0xff] %vm186, %v3722
        %3731 = vst.msk [vmem:[%s177 + $0x38] sm:$0xff] %vm186, %v3723
        %s3732 = sand.u32 %s75, 1
        %s3733 = scalar_lea.sflag [#allocation5], %s3732
        %s3734 = sand.u32 %s75, 1
        %s3735 = smul.addr %s3734, 64
        %s3736 = scalar_lea.vmem [#allocation8], %s3735
        // Predicated region
        $region37: #{tpu_custom_call.1} parent=27 // pred_check
          %p3737 = pneg %p85
        $region38: #{tpu_custom_call.1} parent=27 // pred_check_branch
          %3739 = sbr.rel (%p3737) target = $region40
        $region39: #{tpu_custom_call.1} parent=27 // pred_region
          %3741 = vsyncadd %s3733, 0
          %s3742 = smul.addr %s20, 8
          %s3743 = smul.addr %s3742, 8
          %s3744 = scalar_lea.hbm %s2, %s3743
          %s3745 = sshll.u32 %s3736, 4
          %s3746 = int_to_ptr.vmem [resolvable:$true] %s3745
          %s3747 = sshll.u32 %s3744, 4
          %s3748 = int_to_ptr.hbm [resolvable:$true] %s3747
          %3753 = dma.vmem_to_hbm [thread:$0]  %s3746, 1024, %s3748, %s3733, 128, 128, 8
        $region40: #{tpu_custom_call.1} parent=27 // pred_fallthru
          _
      $region28: #{tpu_custom_call.1} parent=5 // pred_fallthru
        _
      %p3754 = scmp.le.s32.totalorder 2, %s15
      // Predicated region
      $region41: #{tpu_custom_call.1} parent=5 // pred_check
        %p3755 = pneg %p3754
      $region42: #{tpu_custom_call.1} parent=5 // pred_check_branch
        %3757 = sbr.rel (%p3755) target = $region44
      $region43: #{tpu_custom_call.1} parent=5 // pred_region
        %s3758 = ssub.s32 %s15, 2
        // Predicated region
        $region45: #{tpu_custom_call.1} parent=43 // pred_check
          %p3759 = pneg %p91
        $region46: #{tpu_custom_call.1} parent=43 // pred_check_branch
          %3761 = sbr.rel (%p3759) target = $region48
        $region47: #{tpu_custom_call.1} parent=43 // pred_region
          %s3762 = sand.u32 %s76, 1
          %s3763 = scalar_lea.sflag [#allocation5], %s3762
          %s3764 = sand.u32 %s76, 1
          %s3765 = smul.addr %s3764, 64
          %s3766 = scalar_lea.vmem [#allocation8], %s3765
          %3768 = dma.done %s3763, 1024
        $region48: #{tpu_custom_call.1} parent=43 // pred_fallthru
          _
      $region44: #{tpu_custom_call.1} parent=5 // pred_fallthru
        _
    $region6: #{tpu_custom_call.1} parent=1 // loop_footer
      %s19 = sadd.s32 1, %s15
    $region7: #{tpu_custom_call.1} parent=1 // loop_footer_branch
      %14 = sbr.rel target = $region3
    $region8: #{tpu_custom_call.1} parent=1 // loop_exit
      _
    %3769 = vsyncpa [#allocation4], 1
    %s3770 = scalar_lea.sflag [#allocation4], 1
    %3771 = vsyncpa %s3770, 1
    %3772 = vsyncpa [#allocation5], 1
    %s3773 = scalar_lea.sflag [#allocation5], 1
    %3774 = vsyncpa %s3773, 1
    %3775 = vsyncpa [#allocation6], 1
    %s3776 = scalar_lea.sflag [#allocation6], 1
    %3777 = vsyncpa %s3776, 1

</llo_original>
